<compile_context>
chip_gen: v7x
topology: tpu7x:2x2x1
jax: 0.10.0
libtpu: 0.0.40
codegen_flags: <defaults>
</compile_context>

<pallas_src>
import functools

import jax
import jax.numpy as jnp
from jax import lax
from jax.experimental import pallas as pl
from jax.experimental.pallas import tpu as pltpu

EPS = 1e-5
NUM_CLASSES = 2
FEATURE_SIZE = 8
NUM_TIMESTEPS = 150
KW = 5  # temporal kernel width of every conv in the net

# Lane-padded channel counts (25 -> 128, 50 -> 128, 100 -> 128, 200 -> 256, 2 -> 128)
C1P, C2P, C3P, C4P = 128, 128, 128, 256
CLS_PAD = 128
NEG_BIG = -1e30


# ------------------------------ kernel helpers ------------------------------

def _elu(x):
    xn = jnp.minimum(x, 0.0)  # avoid exp overflow on the positive side
    return jnp.where(x > 0, x, jnp.exp(xn) - 1.0)


def _pool_mats(wp, wout):
    """0/1 selection matrices picking even / odd rows: (wp, wout) each."""
    rows = lax.broadcasted_iota(jnp.int32, (wp, wout), 0)
    cols = lax.broadcasted_iota(jnp.int32, (wp, wout), 1)
    de = (cols == 2 * rows).astype(jnp.float32)
    do = (cols == 2 * rows + 1).astype(jnp.float32)
    return de, do


def _conv_bn_elu_pool(a, w_ref, s_ref, h_ref):
    """a: (Win, CinP) f32 activation (time rows, channel lanes).
    w_ref: (KW, CinP, CoutP) bf16 taps. Returns pooled (Win//2 - 2, CoutP) f32."""
    win = a.shape[0]
    wout = win - KW + 1
    wp = wout // 2                       # MaxPool(1,2) drops a trailing odd column
    cout = w_ref.shape[2]

    # conv as 5 shifted matmuls, f32 accumulation
    acc = jnp.zeros((wout, cout), jnp.float32)
    for t in range(KW):
        acc = acc + jnp.dot(a[t:t + wout, :].astype(jnp.bfloat16), w_ref[t],
                            preferred_element_type=jnp.float32)

    # BatchNorm (folded scale/shift) + ELU in f32
    g = _elu(acc * s_ref[...] + h_ref[...])

    # MaxPool(1,2): select even/odd rows via tiny matmuls, then elementwise max
    de, do = _pool_mats(wp, wout)
    return jnp.maximum(jnp.dot(de, g, preferred_element_type=jnp.float32),
                       jnp.dot(do, g, preferred_element_type=jnp.float32))


def _fused_forward_kernel(x_ref,
                          w1_ref, s1_ref, h1_ref,
                          w2_ref, s2_ref, h2_ref,
                          w3_ref, s3_ref, h3_ref,
                          w4_ref, s4_ref, h4_ref,
                          wc_ref, bc_ref,
                          out_ref):
    # One sample per grid step; whole forward stays in VMEM / vregs.
    a = x_ref[0].astype(jnp.float32)                       # (T=150, F=8)

    a = _conv_bn_elu_pool(a, w1_ref, s1_ref, h1_ref)       # (73, 128)
    a = _conv_bn_elu_pool(a, w2_ref, s2_ref, h2_ref)       # (34, 128)
    a = _conv_bn_elu_pool(a, w3_ref, s3_ref, h3_ref)       # (15, 128)
    a = _conv_bn_elu_pool(a, w4_ref, s4_ref, h4_ref)       # (5, 256)

    # classifier: Conv2d(200, 2, (1,5)) over the 5 remaining timesteps + bias
    logits = bc_ref[...]                                   # (1, CLS_PAD) f32
    for t in range(KW):
        logits = logits + jnp.dot(a[t:t + 1, :].astype(jnp.bfloat16), wc_ref[t],
                                  preferred_element_type=jnp.float32)

    # mask padded class lanes, then log_softmax
    lane = lax.broadcasted_iota(jnp.int32, logits.shape, 1)
    logits = jnp.where(lane < NUM_CLASSES, logits, NEG_BIG)
    m = jnp.max(logits, axis=-1, keepdims=True)
    z = logits - m
    lse = jnp.log(jnp.sum(jnp.exp(z), axis=-1, keepdims=True))
    out_ref[0] = z - lse


# ------------------------- weight folding / padding -------------------------

def bn_fold(gamma, beta, conv_bias=None, running_mean=0.0, running_var=1.0):
    """Eval-mode BatchNorm2d folded to per-channel scale/shift (conv bias folded in)."""
    scale = gamma / jnp.sqrt(running_var + EPS)
    bias = 0.0 if conv_bias is None else conv_bias
    shift = beta + scale * (bias - running_mean)
    return scale, shift


def _pad_taps(w_oct, cin_pad, cout_pad):
    """w_oct: (Cout, Cin, KW) -> bf16 taps of shape (KW, cin_pad, cout_pad)."""
    cout, cin, _ = w_oct.shape
    taps = jnp.transpose(w_oct, (2, 1, 0))                 # (KW, Cin, Cout)
    taps = jnp.pad(taps, ((0, 0), (0, cin_pad - cin), (0, cout_pad - cout)))
    return taps.astype(jnp.bfloat16)


def _pad_vec(v, cpad, fill):
    n = v.shape[0]
    return jnp.pad(v, (0, cpad - n), constant_values=fill).reshape(1, cpad).astype(jnp.float32)


def prepare_weights(params):
    """Fold block1's two convs, fold BN, pad channels to lane multiples, cast to bf16.
    Run ONCE per checkpoint, outside the per-inference jit."""
    # block1: Conv2d(1,25,(1,5),bias=True) o Conv2d(25,25,(F,1),bias=False)
    w1 = params["conv1_w"][:, 0, 0, :]                     # (25, 5)
    w1b = params["conv1b_w"][:, :, :, 0]                   # (25, 25, F)
    w_eff = jnp.einsum("och,ct->oht", w1b, w1)             # (25, F, 5)
    b_eff = jnp.einsum("och,c->o", w1b, params["conv1_b"])  # (25,)
    s1, h1 = bn_fold(params["bn1_g"], params["bn1_b"], b_eff)

    prep = {
        "w1": _pad_taps(w_eff, FEATURE_SIZE, C1P),
        "s1": _pad_vec(s1, C1P, 1.0),
        "h1": _pad_vec(h1, C1P, 0.0),
    }
    for idx, (wkey, gk, bk, cinp, coutp) in enumerate(
            (("conv2_w", "bn2_g", "bn2_b", C1P, C2P),
             ("conv3_w", "bn3_g", "bn3_b", C2P, C3P),
             ("conv4_w", "bn4_g", "bn4_b", C3P, C4P)), start=2):
        w = params[wkey][:, :, 0, :]                       # (Cout, Cin, KW)
        s, h = bn_fold(params[gk], params[bk])             # Dropout == identity (eval)
        prep[f"w{idx}"] = _pad_taps(w, cinp, coutp)
        prep[f"s{idx}"] = _pad_vec(s, coutp, 1.0)
        prep[f"h{idx}"] = _pad_vec(h, coutp, 0.0)

    wc = params["clf_w"][:, :, 0, :]                       # (2, 200, KW)
    prep["wc"] = _pad_taps(wc, C4P, CLS_PAD)
    prep["bc"] = _pad_vec(params["clf_b"], CLS_PAD, 0.0)
    return prep


# -------------------------------- forward -----------------------------------

def _const_spec(shape):
    nd = len(shape)
    return pl.BlockSpec(shape, lambda i, _nd=nd: (0,) * _nd)


def deep_conv_net_forward(prep, x):
    """x: (B, num_timesteps, feature_size) — same layout as the PyTorch module input."""
    b = x.shape[0]
    weight_args = (
        prep["w1"], prep["s1"], prep["h1"],
        prep["w2"], prep["s2"], prep["h2"],
        prep["w3"], prep["s3"], prep["h3"],
        prep["w4"], prep["s4"], prep["h4"],
        prep["wc"], prep["bc"],
    )
    in_specs = [pl.BlockSpec((1, NUM_TIMESTEPS, FEATURE_SIZE), lambda i: (i, 0, 0))]
    in_specs += [_const_spec(w.shape) for w in weight_args]

    out = pl.pallas_call(
        _fused_forward_kernel,
        out_shape=jax.ShapeDtypeStruct((b, 1, CLS_PAD), jnp.float32),
        grid=(b,),
        in_specs=in_specs,
        out_specs=pl.BlockSpec((1, 1, CLS_PAD), lambda i: (i, 0, 0)),
        compiler_params=pltpu.CompilerParams(
            dimension_semantics=("parallel",)),   # shards batch across TCs on v7x
    )(x, *weight_args)
    return out[:, 0, :NUM_CLASSES]                # strip class-lane padding


# --------------------------------- params -----------------------------------

def init_params(key):
    ks = jax.random.split(key, 16)

    def nrm(k, shape, s=0.1):
        return jax.random.normal(k, shape, dtype=jnp.float32) * s

    return {
        "conv1_w": nrm(ks[0], (25, 1, 1, KW)),
        "conv1_b": nrm(ks[1], (25,)),
        "conv1b_w": nrm(ks[2], (25, 25, FEATURE_SIZE, 1)),
        "bn1_g": 1.0 + nrm(ks[3], (25,), 0.05),
        "bn1_b": nrm(ks[4], (25,), 0.05),
        "conv2_w": nrm(ks[5], (50, 25, 1, KW)),
        "bn2_g": 1.0 + nrm(ks[6], (50,), 0.05),
        "bn2_b": nrm(ks[7], (50,), 0.05),
        "conv3_w": nrm(ks[8], (100, 50, 1, KW)),
        "bn3_g": 1.0 + nrm(ks[9], (100,), 0.05),
        "bn3_b": nrm(ks[10], (100,), 0.05),
        "conv4_w": nrm(ks[11], (200, 100, 1, KW)),
        "bn4_g": 1.0 + nrm(ks[12], (200,), 0.05),
        "bn4_b": nrm(ks[13], (200,), 0.05),
        "clf_w": nrm(ks[14], (NUM_CLASSES, 200, 1, KW)),
        "clf_b": nrm(ks[15], (NUM_CLASSES,)),
    }


if __name__ == "__main__":
    key = jax.random.PRNGKey(0)
    pkey, xkey = jax.random.split(key)
    params = init_params(pkey)
    prep = prepare_weights(params)          # once per checkpoint, outside jit

    B = 2
    x = jax.random.normal(xkey, (B, NUM_TIMESTEPS, FEATURE_SIZE), dtype=jnp.float32)

    fwd = jax.jit(functools.partial(deep_conv_net_forward, prep))
    out = jax.block_until_ready(fwd(x))

    assert out.shape == (B, NUM_CLASSES), out.shape
    assert bool(jnp.all(jnp.isfinite(out)))
    # log_softmax rows should sum to ~1 in prob space
    assert bool(jnp.allclose(jnp.sum(jnp.exp(out), axis=1), 1.0, atol=1e-3))
    print("KERNEL_OK")
</pallas_src>

<mosaic_0001>
module attributes {stable_mosaic.version = 11 : i64} {
  func.func @_fused_forward_kernel(%arg0: i32, %arg1: memref<1x150x8xf32, #tpu.memory_space<vmem>>, %arg2: memref<5x8x128xbf16, #tpu.memory_space<vmem>>, %arg3: memref<1x128xf32, #tpu.memory_space<vmem>>, %arg4: memref<1x128xf32, #tpu.memory_space<vmem>>, %arg5: memref<5x128x128xbf16, #tpu.memory_space<vmem>>, %arg6: memref<1x128xf32, #tpu.memory_space<vmem>>, %arg7: memref<1x128xf32, #tpu.memory_space<vmem>>, %arg8: memref<5x128x128xbf16, #tpu.memory_space<vmem>>, %arg9: memref<1x128xf32, #tpu.memory_space<vmem>>, %arg10: memref<1x128xf32, #tpu.memory_space<vmem>>, %arg11: memref<5x128x256xbf16, #tpu.memory_space<vmem>>, %arg12: memref<1x256xf32, #tpu.memory_space<vmem>>, %arg13: memref<1x256xf32, #tpu.memory_space<vmem>>, %arg14: memref<5x256x128xbf16, #tpu.memory_space<vmem>>, %arg15: memref<1x128xf32, #tpu.memory_space<vmem>>, %arg16: memref<1x1x128xf32, #tpu.memory_space<vmem>>) attributes {dimension_semantics = [#tpu.dimension_semantics<parallel>], iteration_bounds = array<i64: 2>, scalar_prefetch = 0 : i64, scratch_operands = 0 : i64, tpu.core_type = #tpu.core_type<tc>, window_params = [{transform_indices = @transform_0, window_bounds = array<i64: 1, 150, 8>}, {pipeline_mode = #tpu.pipeline_mode<synchronous>, transform_indices = @transform_1, window_bounds = array<i64: 5, 8, 128>}, {pipeline_mode = #tpu.pipeline_mode<synchronous>, transform_indices = @transform_2, window_bounds = array<i64: 1, 128>}, {pipeline_mode = #tpu.pipeline_mode<synchronous>, transform_indices = @transform_3, window_bounds = array<i64: 1, 128>}, {pipeline_mode = #tpu.pipeline_mode<synchronous>, transform_indices = @transform_4, window_bounds = array<i64: 5, 128, 128>}, {pipeline_mode = #tpu.pipeline_mode<synchronous>, transform_indices = @transform_5, window_bounds = array<i64: 1, 128>}, {pipeline_mode = #tpu.pipeline_mode<synchronous>, transform_indices = @transform_6, window_bounds = array<i64: 1, 128>}, {pipeline_mode = #tpu.pipeline_mode<synchronous>, transform_indices = @transform_7, window_bounds = array<i64: 5, 128, 128>}, {pipeline_mode = #tpu.pipeline_mode<synchronous>, transform_indices = @transform_8, window_bounds = array<i64: 1, 128>}, {pipeline_mode = #tpu.pipeline_mode<synchronous>, transform_indices = @transform_9, window_bounds = array<i64: 1, 128>}, {pipeline_mode = #tpu.pipeline_mode<synchronous>, transform_indices = @transform_10, window_bounds = array<i64: 5, 128, 256>}, {pipeline_mode = #tpu.pipeline_mode<synchronous>, transform_indices = @transform_11, window_bounds = array<i64: 1, 256>}, {pipeline_mode = #tpu.pipeline_mode<synchronous>, transform_indices = @transform_12, window_bounds = array<i64: 1, 256>}, {pipeline_mode = #tpu.pipeline_mode<synchronous>, transform_indices = @transform_13, window_bounds = array<i64: 5, 256, 128>}, {pipeline_mode = #tpu.pipeline_mode<synchronous>, transform_indices = @transform_14, window_bounds = array<i64: 1, 128>}, {transform_indices = @transform_15, window_bounds = array<i64: 1, 1, 128>}]} {
    %c0 = arith.constant 0 : index
    %c0_0 = arith.constant 0 : index
    %c0_1 = arith.constant 0 : index
    %0 = vector.load %arg1[%c0, %c0_0, %c0_1] : memref<1x150x8xf32, #tpu.memory_space<vmem>>, vector<1x150x8xf32>
    %1 = vector.shape_cast %0 : vector<1x150x8xf32> to vector<150x8xf32>
    %cst = arith.constant 0.000000e+00 : f32
    %2 = vector.broadcast %cst : f32 to vector<146x128xf32>
    %3 = vector.extract_strided_slice %1 {offsets = [0, 0], sizes = [146, 8], strides = [1, 1]} : vector<150x8xf32> to vector<146x8xf32>
    %4 = arith.truncf %3 : vector<146x8xf32> to vector<146x8xbf16>
    %c0_2 = arith.constant 0 : index
    %c0_3 = arith.constant 0 : index
    %c0_4 = arith.constant 0 : index
    %5 = vector.load %arg2[%c0_2, %c0_3, %c0_4] : memref<5x8x128xbf16, #tpu.memory_space<vmem>>, vector<1x8x128xbf16>
    %6 = vector.shape_cast %5 : vector<1x8x128xbf16> to vector<8x128xbf16>
    %cst_5 = arith.constant dense<0.000000e+00> : vector<146x128xf32>
    %7 = tpu.matmul %4, %6, %cst_5 {dimension_numbers = #tpu.dot_dimension_numbers<[1], [0], [0], [1], [0, 0, 1, 1], [], []>} : vector<146x8xbf16>, vector<8x128xbf16>, vector<146x128xf32> -> vector<146x128xf32>
    %8 = arith.addf %2, %7 : vector<146x128xf32>
    %9 = vector.extract_strided_slice %1 {offsets = [1, 0], sizes = [146, 8], strides = [1, 1]} : vector<150x8xf32> to vector<146x8xf32>
    %10 = arith.truncf %9 : vector<146x8xf32> to vector<146x8xbf16>
    %c1 = arith.constant 1 : index
    %c0_6 = arith.constant 0 : index
    %c0_7 = arith.constant 0 : index
    %11 = vector.load %arg2[%c1, %c0_6, %c0_7] : memref<5x8x128xbf16, #tpu.memory_space<vmem>>, vector<1x8x128xbf16>
    %12 = vector.shape_cast %11 : vector<1x8x128xbf16> to vector<8x128xbf16>
    %cst_8 = arith.constant dense<0.000000e+00> : vector<146x128xf32>
    %13 = tpu.matmul %10, %12, %cst_8 {dimension_numbers = #tpu.dot_dimension_numbers<[1], [0], [0], [1], [0, 0, 1, 1], [], []>} : vector<146x8xbf16>, vector<8x128xbf16>, vector<146x128xf32> -> vector<146x128xf32>
    %14 = arith.addf %8, %13 : vector<146x128xf32>
    %15 = vector.extract_strided_slice %1 {offsets = [2, 0], sizes = [146, 8], strides = [1, 1]} : vector<150x8xf32> to vector<146x8xf32>
    %16 = arith.truncf %15 : vector<146x8xf32> to vector<146x8xbf16>
    %c2 = arith.constant 2 : index
    %c0_9 = arith.constant 0 : index
    %c0_10 = arith.constant 0 : index
    %17 = vector.load %arg2[%c2, %c0_9, %c0_10] : memref<5x8x128xbf16, #tpu.memory_space<vmem>>, vector<1x8x128xbf16>
    %18 = vector.shape_cast %17 : vector<1x8x128xbf16> to vector<8x128xbf16>
    %cst_11 = arith.constant dense<0.000000e+00> : vector<146x128xf32>
    %19 = tpu.matmul %16, %18, %cst_11 {dimension_numbers = #tpu.dot_dimension_numbers<[1], [0], [0], [1], [0, 0, 1, 1], [], []>} : vector<146x8xbf16>, vector<8x128xbf16>, vector<146x128xf32> -> vector<146x128xf32>
    %20 = arith.addf %14, %19 : vector<146x128xf32>
    %21 = vector.extract_strided_slice %1 {offsets = [3, 0], sizes = [146, 8], strides = [1, 1]} : vector<150x8xf32> to vector<146x8xf32>
    %22 = arith.truncf %21 : vector<146x8xf32> to vector<146x8xbf16>
    %c3 = arith.constant 3 : index
    %c0_12 = arith.constant 0 : index
    %c0_13 = arith.constant 0 : index
    %23 = vector.load %arg2[%c3, %c0_12, %c0_13] : memref<5x8x128xbf16, #tpu.memory_space<vmem>>, vector<1x8x128xbf16>
    %24 = vector.shape_cast %23 : vector<1x8x128xbf16> to vector<8x128xbf16>
    %cst_14 = arith.constant dense<0.000000e+00> : vector<146x128xf32>
    %25 = tpu.matmul %22, %24, %cst_14 {dimension_numbers = #tpu.dot_dimension_numbers<[1], [0], [0], [1], [0, 0, 1, 1], [], []>} : vector<146x8xbf16>, vector<8x128xbf16>, vector<146x128xf32> -> vector<146x128xf32>
    %26 = arith.addf %20, %25 : vector<146x128xf32>
    %27 = vector.extract_strided_slice %1 {offsets = [4, 0], sizes = [146, 8], strides = [1, 1]} : vector<150x8xf32> to vector<146x8xf32>
    %28 = arith.truncf %27 : vector<146x8xf32> to vector<146x8xbf16>
    %c4 = arith.constant 4 : index
    %c0_15 = arith.constant 0 : index
    %c0_16 = arith.constant 0 : index
    %29 = vector.load %arg2[%c4, %c0_15, %c0_16] : memref<5x8x128xbf16, #tpu.memory_space<vmem>>, vector<1x8x128xbf16>
    %30 = vector.shape_cast %29 : vector<1x8x128xbf16> to vector<8x128xbf16>
    %cst_17 = arith.constant dense<0.000000e+00> : vector<146x128xf32>
    %31 = tpu.matmul %28, %30, %cst_17 {dimension_numbers = #tpu.dot_dimension_numbers<[1], [0], [0], [1], [0, 0, 1, 1], [], []>} : vector<146x8xbf16>, vector<8x128xbf16>, vector<146x128xf32> -> vector<146x128xf32>
    %32 = arith.addf %26, %31 : vector<146x128xf32>
    %c0_18 = arith.constant 0 : index
    %c0_19 = arith.constant 0 : index
    %33 = vector.load %arg3[%c0_18, %c0_19] : memref<1x128xf32, #tpu.memory_space<vmem>>, vector<1x128xf32>
    %34 = vector.broadcast %33 : vector<1x128xf32> to vector<146x128xf32>
    %35 = arith.mulf %32, %34 : vector<146x128xf32>
    %c0_20 = arith.constant 0 : index
    %c0_21 = arith.constant 0 : index
    %36 = vector.load %arg4[%c0_20, %c0_21] : memref<1x128xf32, #tpu.memory_space<vmem>>, vector<1x128xf32>
    %37 = vector.broadcast %36 : vector<1x128xf32> to vector<146x128xf32>
    %38 = arith.addf %35, %37 : vector<146x128xf32>
    %cst_22 = arith.constant 0.000000e+00 : f32
    %39 = vector.broadcast %cst_22 : f32 to vector<146x128xf32>
    %40 = arith.minimumf %38, %39 : vector<146x128xf32>
    %cst_23 = arith.constant 0.000000e+00 : f32
    %41 = vector.broadcast %cst_23 : f32 to vector<146x128xf32>
    %42 = arith.cmpf ogt, %38, %41 : vector<146x128xf32>
    %43 = math.exp %40 : vector<146x128xf32>
    %cst_24 = arith.constant 1.000000e+00 : f32
    %44 = vector.broadcast %cst_24 : f32 to vector<146x128xf32>
    %45 = arith.subf %43, %44 : vector<146x128xf32>
    %46 = arith.select %42, %38, %45 : vector<146x128xi1>, vector<146x128xf32>
    %47 = tpu.iota {dimensions = array<i32: 0>} : vector<73x146xi32>
    %48 = tpu.iota {dimensions = array<i32: 1>} : vector<73x146xi32>
    %c2_i32 = arith.constant 2 : i32
    %49 = vector.broadcast %c2_i32 : i32 to vector<73x146xi32>
    %50 = arith.muli %49, %47 : vector<73x146xi32>
    %51 = arith.cmpi eq, %48, %50 : vector<73x146xi32>
    %52 = arith.extui %51 : vector<73x146xi1> to vector<73x146xi32>
    %53 = arith.sitofp %52 : vector<73x146xi32> to vector<73x146xf32>
    %c2_i32_25 = arith.constant 2 : i32
    %54 = vector.broadcast %c2_i32_25 : i32 to vector<73x146xi32>
    %55 = arith.muli %54, %47 : vector<73x146xi32>
    %c1_i32 = arith.constant 1 : i32
    %56 = vector.broadcast %c1_i32 : i32 to vector<73x146xi32>
    %57 = arith.addi %55, %56 : vector<73x146xi32>
    %58 = arith.cmpi eq, %48, %57 : vector<73x146xi32>
    %59 = arith.extui %58 : vector<73x146xi1> to vector<73x146xi32>
    %60 = arith.sitofp %59 : vector<73x146xi32> to vector<73x146xf32>
    %cst_26 = arith.constant dense<0.000000e+00> : vector<73x128xf32>
    %61 = tpu.matmul %53, %46, %cst_26 {dimension_numbers = #tpu.dot_dimension_numbers<[1], [0], [0], [1], [0, 0, 1, 1], [], []>} : vector<73x146xf32>, vector<146x128xf32>, vector<73x128xf32> -> vector<73x128xf32>
    %cst_27 = arith.constant dense<0.000000e+00> : vector<73x128xf32>
    %62 = tpu.matmul %60, %46, %cst_27 {dimension_numbers = #tpu.dot_dimension_numbers<[1], [0], [0], [1], [0, 0, 1, 1], [], []>} : vector<73x146xf32>, vector<146x128xf32>, vector<73x128xf32> -> vector<73x128xf32>
    %63 = arith.maximumf %61, %62 : vector<73x128xf32>
    %cst_28 = arith.constant 0.000000e+00 : f32
    %64 = vector.broadcast %cst_28 : f32 to vector<69x128xf32>
    %65 = vector.extract_strided_slice %63 {offsets = [0, 0], sizes = [69, 128], strides = [1, 1]} : vector<73x128xf32> to vector<69x128xf32>
    %66 = arith.truncf %65 : vector<69x128xf32> to vector<69x128xbf16>
    %c0_29 = arith.constant 0 : index
    %c0_30 = arith.constant 0 : index
    %c0_31 = arith.constant 0 : index
    %67 = vector.load %arg5[%c0_29, %c0_30, %c0_31] : memref<5x128x128xbf16, #tpu.memory_space<vmem>>, vector<1x128x128xbf16>
    %68 = vector.shape_cast %67 : vector<1x128x128xbf16> to vector<128x128xbf16>
    %cst_32 = arith.constant dense<0.000000e+00> : vector<69x128xf32>
    %69 = tpu.matmul %66, %68, %cst_32 {dimension_numbers = #tpu.dot_dimension_numbers<[1], [0], [0], [1], [0, 0, 1, 1], [], []>} : vector<69x128xbf16>, vector<128x128xbf16>, vector<69x128xf32> -> vector<69x128xf32>
    %70 = arith.addf %64, %69 : vector<69x128xf32>
    %71 = vector.extract_strided_slice %63 {offsets = [1, 0], sizes = [69, 128], strides = [1, 1]} : vector<73x128xf32> to vector<69x128xf32>
    %72 = arith.truncf %71 : vector<69x128xf32> to vector<69x128xbf16>
    %c1_33 = arith.constant 1 : index
    %c0_34 = arith.constant 0 : index
    %c0_35 = arith.constant 0 : index
    %73 = vector.load %arg5[%c1_33, %c0_34, %c0_35] : memref<5x128x128xbf16, #tpu.memory_space<vmem>>, vector<1x128x128xbf16>
    %74 = vector.shape_cast %73 : vector<1x128x128xbf16> to vector<128x128xbf16>
    %cst_36 = arith.constant dense<0.000000e+00> : vector<69x128xf32>
    %75 = tpu.matmul %72, %74, %cst_36 {dimension_numbers = #tpu.dot_dimension_numbers<[1], [0], [0], [1], [0, 0, 1, 1], [], []>} : vector<69x128xbf16>, vector<128x128xbf16>, vector<69x128xf32> -> vector<69x128xf32>
    %76 = arith.addf %70, %75 : vector<69x128xf32>
    %77 = vector.extract_strided_slice %63 {offsets = [2, 0], sizes = [69, 128], strides = [1, 1]} : vector<73x128xf32> to vector<69x128xf32>
    %78 = arith.truncf %77 : vector<69x128xf32> to vector<69x128xbf16>
    %c2_37 = arith.constant 2 : index
    %c0_38 = arith.constant 0 : index
    %c0_39 = arith.constant 0 : index
    %79 = vector.load %arg5[%c2_37, %c0_38, %c0_39] : memref<5x128x128xbf16, #tpu.memory_space<vmem>>, vector<1x128x128xbf16>
    %80 = vector.shape_cast %79 : vector<1x128x128xbf16> to vector<128x128xbf16>
    %cst_40 = arith.constant dense<0.000000e+00> : vector<69x128xf32>
    %81 = tpu.matmul %78, %80, %cst_40 {dimension_numbers = #tpu.dot_dimension_numbers<[1], [0], [0], [1], [0, 0, 1, 1], [], []>} : vector<69x128xbf16>, vector<128x128xbf16>, vector<69x128xf32> -> vector<69x128xf32>
    %82 = arith.addf %76, %81 : vector<69x128xf32>
    %83 = vector.extract_strided_slice %63 {offsets = [3, 0], sizes = [69, 128], strides = [1, 1]} : vector<73x128xf32> to vector<69x128xf32>
    %84 = arith.truncf %83 : vector<69x128xf32> to vector<69x128xbf16>
    %c3_41 = arith.constant 3 : index
    %c0_42 = arith.constant 0 : index
    %c0_43 = arith.constant 0 : index
    %85 = vector.load %arg5[%c3_41, %c0_42, %c0_43] : memref<5x128x128xbf16, #tpu.memory_space<vmem>>, vector<1x128x128xbf16>
    %86 = vector.shape_cast %85 : vector<1x128x128xbf16> to vector<128x128xbf16>
    %cst_44 = arith.constant dense<0.000000e+00> : vector<69x128xf32>
    %87 = tpu.matmul %84, %86, %cst_44 {dimension_numbers = #tpu.dot_dimension_numbers<[1], [0], [0], [1], [0, 0, 1, 1], [], []>} : vector<69x128xbf16>, vector<128x128xbf16>, vector<69x128xf32> -> vector<69x128xf32>
    %88 = arith.addf %82, %87 : vector<69x128xf32>
    %89 = vector.extract_strided_slice %63 {offsets = [4, 0], sizes = [69, 128], strides = [1, 1]} : vector<73x128xf32> to vector<69x128xf32>
    %90 = arith.truncf %89 : vector<69x128xf32> to vector<69x128xbf16>
    %c4_45 = arith.constant 4 : index
    %c0_46 = arith.constant 0 : index
    %c0_47 = arith.constant 0 : index
    %91 = vector.load %arg5[%c4_45, %c0_46, %c0_47] : memref<5x128x128xbf16, #tpu.memory_space<vmem>>, vector<1x128x128xbf16>
    %92 = vector.shape_cast %91 : vector<1x128x128xbf16> to vector<128x128xbf16>
    %cst_48 = arith.constant dense<0.000000e+00> : vector<69x128xf32>
    %93 = tpu.matmul %90, %92, %cst_48 {dimension_numbers = #tpu.dot_dimension_numbers<[1], [0], [0], [1], [0, 0, 1, 1], [], []>} : vector<69x128xbf16>, vector<128x128xbf16>, vector<69x128xf32> -> vector<69x128xf32>
    %94 = arith.addf %88, %93 : vector<69x128xf32>
    %c0_49 = arith.constant 0 : index
    %c0_50 = arith.constant 0 : index
    %95 = vector.load %arg6[%c0_49, %c0_50] : memref<1x128xf32, #tpu.memory_space<vmem>>, vector<1x128xf32>
    %96 = vector.broadcast %95 : vector<1x128xf32> to vector<69x128xf32>
    %97 = arith.mulf %94, %96 : vector<69x128xf32>
    %c0_51 = arith.constant 0 : index
    %c0_52 = arith.constant 0 : index
    %98 = vector.load %arg7[%c0_51, %c0_52] : memref<1x128xf32, #tpu.memory_space<vmem>>, vector<1x128xf32>
    %99 = vector.broadcast %98 : vector<1x128xf32> to vector<69x128xf32>
    %100 = arith.addf %97, %99 : vector<69x128xf32>
    %cst_53 = arith.constant 0.000000e+00 : f32
    %101 = vector.broadcast %cst_53 : f32 to vector<69x128xf32>
    %102 = arith.minimumf %100, %101 : vector<69x128xf32>
    %cst_54 = arith.constant 0.000000e+00 : f32
    %103 = vector.broadcast %cst_54 : f32 to vector<69x128xf32>
    %104 = arith.cmpf ogt, %100, %103 : vector<69x128xf32>
    %105 = math.exp %102 : vector<69x128xf32>
    %cst_55 = arith.constant 1.000000e+00 : f32
    %106 = vector.broadcast %cst_55 : f32 to vector<69x128xf32>
    %107 = arith.subf %105, %106 : vector<69x128xf32>
    %108 = arith.select %104, %100, %107 : vector<69x128xi1>, vector<69x128xf32>
    %109 = tpu.iota {dimensions = array<i32: 0>} : vector<34x69xi32>
    %110 = tpu.iota {dimensions = array<i32: 1>} : vector<34x69xi32>
    %c2_i32_56 = arith.constant 2 : i32
    %111 = vector.broadcast %c2_i32_56 : i32 to vector<34x69xi32>
    %112 = arith.muli %111, %109 : vector<34x69xi32>
    %113 = arith.cmpi eq, %110, %112 : vector<34x69xi32>
    %114 = arith.extui %113 : vector<34x69xi1> to vector<34x69xi32>
    %115 = arith.sitofp %114 : vector<34x69xi32> to vector<34x69xf32>
    %c2_i32_57 = arith.constant 2 : i32
    %116 = vector.broadcast %c2_i32_57 : i32 to vector<34x69xi32>
    %117 = arith.muli %116, %109 : vector<34x69xi32>
    %c1_i32_58 = arith.constant 1 : i32
    %118 = vector.broadcast %c1_i32_58 : i32 to vector<34x69xi32>
    %119 = arith.addi %117, %118 : vector<34x69xi32>
    %120 = arith.cmpi eq, %110, %119 : vector<34x69xi32>
    %121 = arith.extui %120 : vector<34x69xi1> to vector<34x69xi32>
    %122 = arith.sitofp %121 : vector<34x69xi32> to vector<34x69xf32>
    %cst_59 = arith.constant dense<0.000000e+00> : vector<34x128xf32>
    %123 = tpu.matmul %115, %108, %cst_59 {dimension_numbers = #tpu.dot_dimension_numbers<[1], [0], [0], [1], [0, 0, 1, 1], [], []>} : vector<34x69xf32>, vector<69x128xf32>, vector<34x128xf32> -> vector<34x128xf32>
    %cst_60 = arith.constant dense<0.000000e+00> : vector<34x128xf32>
    %124 = tpu.matmul %122, %108, %cst_60 {dimension_numbers = #tpu.dot_dimension_numbers<[1], [0], [0], [1], [0, 0, 1, 1], [], []>} : vector<34x69xf32>, vector<69x128xf32>, vector<34x128xf32> -> vector<34x128xf32>
    %125 = arith.maximumf %123, %124 : vector<34x128xf32>
    %cst_61 = arith.constant 0.000000e+00 : f32
    %126 = vector.broadcast %cst_61 : f32 to vector<30x128xf32>
    %127 = vector.extract_strided_slice %125 {offsets = [0, 0], sizes = [30, 128], strides = [1, 1]} : vector<34x128xf32> to vector<30x128xf32>
    %128 = arith.truncf %127 : vector<30x128xf32> to vector<30x128xbf16>
    %c0_62 = arith.constant 0 : index
    %c0_63 = arith.constant 0 : index
    %c0_64 = arith.constant 0 : index
    %129 = vector.load %arg8[%c0_62, %c0_63, %c0_64] : memref<5x128x128xbf16, #tpu.memory_space<vmem>>, vector<1x128x128xbf16>
    %130 = vector.shape_cast %129 : vector<1x128x128xbf16> to vector<128x128xbf16>
    %cst_65 = arith.constant dense<0.000000e+00> : vector<30x128xf32>
    %131 = tpu.matmul %128, %130, %cst_65 {dimension_numbers = #tpu.dot_dimension_numbers<[1], [0], [0], [1], [0, 0, 1, 1], [], []>} : vector<30x128xbf16>, vector<128x128xbf16>, vector<30x128xf32> -> vector<30x128xf32>
    %132 = arith.addf %126, %131 : vector<30x128xf32>
    %133 = vector.extract_strided_slice %125 {offsets = [1, 0], sizes = [30, 128], strides = [1, 1]} : vector<34x128xf32> to vector<30x128xf32>
    %134 = arith.truncf %133 : vector<30x128xf32> to vector<30x128xbf16>
    %c1_66 = arith.constant 1 : index
    %c0_67 = arith.constant 0 : index
    %c0_68 = arith.constant 0 : index
    %135 = vector.load %arg8[%c1_66, %c0_67, %c0_68] : memref<5x128x128xbf16, #tpu.memory_space<vmem>>, vector<1x128x128xbf16>
    %136 = vector.shape_cast %135 : vector<1x128x128xbf16> to vector<128x128xbf16>
    %cst_69 = arith.constant dense<0.000000e+00> : vector<30x128xf32>
    %137 = tpu.matmul %134, %136, %cst_69 {dimension_numbers = #tpu.dot_dimension_numbers<[1], [0], [0], [1], [0, 0, 1, 1], [], []>} : vector<30x128xbf16>, vector<128x128xbf16>, vector<30x128xf32> -> vector<30x128xf32>
    %138 = arith.addf %132, %137 : vector<30x128xf32>
    %139 = vector.extract_strided_slice %125 {offsets = [2, 0], sizes = [30, 128], strides = [1, 1]} : vector<34x128xf32> to vector<30x128xf32>
    %140 = arith.truncf %139 : vector<30x128xf32> to vector<30x128xbf16>
    %c2_70 = arith.constant 2 : index
    %c0_71 = arith.constant 0 : index
    %c0_72 = arith.constant 0 : index
    %141 = vector.load %arg8[%c2_70, %c0_71, %c0_72] : memref<5x128x128xbf16, #tpu.memory_space<vmem>>, vector<1x128x128xbf16>
    %142 = vector.shape_cast %141 : vector<1x128x128xbf16> to vector<128x128xbf16>
    %cst_73 = arith.constant dense<0.000000e+00> : vector<30x128xf32>
    %143 = tpu.matmul %140, %142, %cst_73 {dimension_numbers = #tpu.dot_dimension_numbers<[1], [0], [0], [1], [0, 0, 1, 1], [], []>} : vector<30x128xbf16>, vector<128x128xbf16>, vector<30x128xf32> -> vector<30x128xf32>
    %144 = arith.addf %138, %143 : vector<30x128xf32>
    %145 = vector.extract_strided_slice %125 {offsets = [3, 0], sizes = [30, 128], strides = [1, 1]} : vector<34x128xf32> to vector<30x128xf32>
    %146 = arith.truncf %145 : vector<30x128xf32> to vector<30x128xbf16>
    %c3_74 = arith.constant 3 : index
    %c0_75 = arith.constant 0 : index
    %c0_76 = arith.constant 0 : index
    %147 = vector.load %arg8[%c3_74, %c0_75, %c0_76] : memref<5x128x128xbf16, #tpu.memory_space<vmem>>, vector<1x128x128xbf16>
    %148 = vector.shape_cast %147 : vector<1x128x128xbf16> to vector<128x128xbf16>
    %cst_77 = arith.constant dense<0.000000e+00> : vector<30x128xf32>
    %149 = tpu.matmul %146, %148, %cst_77 {dimension_numbers = #tpu.dot_dimension_numbers<[1], [0], [0], [1], [0, 0, 1, 1], [], []>} : vector<30x128xbf16>, vector<128x128xbf16>, vector<30x128xf32> -> vector<30x128xf32>
    %150 = arith.addf %144, %149 : vector<30x128xf32>
    %151 = vector.extract_strided_slice %125 {offsets = [4, 0], sizes = [30, 128], strides = [1, 1]} : vector<34x128xf32> to vector<30x128xf32>
    %152 = arith.truncf %151 : vector<30x128xf32> to vector<30x128xbf16>
    %c4_78 = arith.constant 4 : index
    %c0_79 = arith.constant 0 : index
    %c0_80 = arith.constant 0 : index
    %153 = vector.load %arg8[%c4_78, %c0_79, %c0_80] : memref<5x128x128xbf16, #tpu.memory_space<vmem>>, vector<1x128x128xbf16>
    %154 = vector.shape_cast %153 : vector<1x128x128xbf16> to vector<128x128xbf16>
    %cst_81 = arith.constant dense<0.000000e+00> : vector<30x128xf32>
    %155 = tpu.matmul %152, %154, %cst_81 {dimension_numbers = #tpu.dot_dimension_numbers<[1], [0], [0], [1], [0, 0, 1, 1], [], []>} : vector<30x128xbf16>, vector<128x128xbf16>, vector<30x128xf32> -> vector<30x128xf32>
    %156 = arith.addf %150, %155 : vector<30x128xf32>
    %c0_82 = arith.constant 0 : index
    %c0_83 = arith.constant 0 : index
    %157 = vector.load %arg9[%c0_82, %c0_83] : memref<1x128xf32, #tpu.memory_space<vmem>>, vector<1x128xf32>
    %158 = vector.broadcast %157 : vector<1x128xf32> to vector<30x128xf32>
    %159 = arith.mulf %156, %158 : vector<30x128xf32>
    %c0_84 = arith.constant 0 : index
    %c0_85 = arith.constant 0 : index
    %160 = vector.load %arg10[%c0_84, %c0_85] : memref<1x128xf32, #tpu.memory_space<vmem>>, vector<1x128xf32>
    %161 = vector.broadcast %160 : vector<1x128xf32> to vector<30x128xf32>
    %162 = arith.addf %159, %161 : vector<30x128xf32>
    %cst_86 = arith.constant 0.000000e+00 : f32
    %163 = vector.broadcast %cst_86 : f32 to vector<30x128xf32>
    %164 = arith.minimumf %162, %163 : vector<30x128xf32>
    %cst_87 = arith.constant 0.000000e+00 : f32
    %165 = vector.broadcast %cst_87 : f32 to vector<30x128xf32>
    %166 = arith.cmpf ogt, %162, %165 : vector<30x128xf32>
    %167 = math.exp %164 : vector<30x128xf32>
    %cst_88 = arith.constant 1.000000e+00 : f32
    %168 = vector.broadcast %cst_88 : f32 to vector<30x128xf32>
    %169 = arith.subf %167, %168 : vector<30x128xf32>
    %170 = arith.select %166, %162, %169 : vector<30x128xi1>, vector<30x128xf32>
    %171 = tpu.iota {dimensions = array<i32: 0>} : vector<15x30xi32>
    %172 = tpu.iota {dimensions = array<i32: 1>} : vector<15x30xi32>
    %c2_i32_89 = arith.constant 2 : i32
    %173 = vector.broadcast %c2_i32_89 : i32 to vector<15x30xi32>
    %174 = arith.muli %173, %171 : vector<15x30xi32>
    %175 = arith.cmpi eq, %172, %174 : vector<15x30xi32>
    %176 = arith.extui %175 : vector<15x30xi1> to vector<15x30xi32>
    %177 = arith.sitofp %176 : vector<15x30xi32> to vector<15x30xf32>
    %c2_i32_90 = arith.constant 2 : i32
    %178 = vector.broadcast %c2_i32_90 : i32 to vector<15x30xi32>
    %179 = arith.muli %178, %171 : vector<15x30xi32>
    %c1_i32_91 = arith.constant 1 : i32
    %180 = vector.broadcast %c1_i32_91 : i32 to vector<15x30xi32>
    %181 = arith.addi %179, %180 : vector<15x30xi32>
    %182 = arith.cmpi eq, %172, %181 : vector<15x30xi32>
    %183 = arith.extui %182 : vector<15x30xi1> to vector<15x30xi32>
    %184 = arith.sitofp %183 : vector<15x30xi32> to vector<15x30xf32>
    %cst_92 = arith.constant dense<0.000000e+00> : vector<15x128xf32>
    %185 = tpu.matmul %177, %170, %cst_92 {dimension_numbers = #tpu.dot_dimension_numbers<[1], [0], [0], [1], [0, 0, 1, 1], [], []>} : vector<15x30xf32>, vector<30x128xf32>, vector<15x128xf32> -> vector<15x128xf32>
    %cst_93 = arith.constant dense<0.000000e+00> : vector<15x128xf32>
    %186 = tpu.matmul %184, %170, %cst_93 {dimension_numbers = #tpu.dot_dimension_numbers<[1], [0], [0], [1], [0, 0, 1, 1], [], []>} : vector<15x30xf32>, vector<30x128xf32>, vector<15x128xf32> -> vector<15x128xf32>
    %187 = arith.maximumf %185, %186 : vector<15x128xf32>
    %cst_94 = arith.constant 0.000000e+00 : f32
    %188 = vector.broadcast %cst_94 : f32 to vector<11x256xf32>
    %189 = vector.extract_strided_slice %187 {offsets = [0, 0], sizes = [11, 128], strides = [1, 1]} : vector<15x128xf32> to vector<11x128xf32>
    %190 = arith.truncf %189 : vector<11x128xf32> to vector<11x128xbf16>
    %c0_95 = arith.constant 0 : index
    %c0_96 = arith.constant 0 : index
    %c0_97 = arith.constant 0 : index
    %191 = vector.load %arg11[%c0_95, %c0_96, %c0_97] : memref<5x128x256xbf16, #tpu.memory_space<vmem>>, vector<1x128x256xbf16>
    %192 = vector.shape_cast %191 : vector<1x128x256xbf16> to vector<128x256xbf16>
    %cst_98 = arith.constant dense<0.000000e+00> : vector<11x256xf32>
    %193 = tpu.matmul %190, %192, %cst_98 {dimension_numbers = #tpu.dot_dimension_numbers<[1], [0], [0], [1], [0, 0, 1, 1], [], []>} : vector<11x128xbf16>, vector<128x256xbf16>, vector<11x256xf32> -> vector<11x256xf32>
    %194 = arith.addf %188, %193 : vector<11x256xf32>
    %195 = vector.extract_strided_slice %187 {offsets = [1, 0], sizes = [11, 128], strides = [1, 1]} : vector<15x128xf32> to vector<11x128xf32>
    %196 = arith.truncf %195 : vector<11x128xf32> to vector<11x128xbf16>
    %c1_99 = arith.constant 1 : index
    %c0_100 = arith.constant 0 : index
    %c0_101 = arith.constant 0 : index
    %197 = vector.load %arg11[%c1_99, %c0_100, %c0_101] : memref<5x128x256xbf16, #tpu.memory_space<vmem>>, vector<1x128x256xbf16>
    %198 = vector.shape_cast %197 : vector<1x128x256xbf16> to vector<128x256xbf16>
    %cst_102 = arith.constant dense<0.000000e+00> : vector<11x256xf32>
    %199 = tpu.matmul %196, %198, %cst_102 {dimension_numbers = #tpu.dot_dimension_numbers<[1], [0], [0], [1], [0, 0, 1, 1], [], []>} : vector<11x128xbf16>, vector<128x256xbf16>, vector<11x256xf32> -> vector<11x256xf32>
    %200 = arith.addf %194, %199 : vector<11x256xf32>
    %201 = vector.extract_strided_slice %187 {offsets = [2, 0], sizes = [11, 128], strides = [1, 1]} : vector<15x128xf32> to vector<11x128xf32>
    %202 = arith.truncf %201 : vector<11x128xf32> to vector<11x128xbf16>
    %c2_103 = arith.constant 2 : index
    %c0_104 = arith.constant 0 : index
    %c0_105 = arith.constant 0 : index
    %203 = vector.load %arg11[%c2_103, %c0_104, %c0_105] : memref<5x128x256xbf16, #tpu.memory_space<vmem>>, vector<1x128x256xbf16>
    %204 = vector.shape_cast %203 : vector<1x128x256xbf16> to vector<128x256xbf16>
    %cst_106 = arith.constant dense<0.000000e+00> : vector<11x256xf32>
    %205 = tpu.matmul %202, %204, %cst_106 {dimension_numbers = #tpu.dot_dimension_numbers<[1], [0], [0], [1], [0, 0, 1, 1], [], []>} : vector<11x128xbf16>, vector<128x256xbf16>, vector<11x256xf32> -> vector<11x256xf32>
    %206 = arith.addf %200, %205 : vector<11x256xf32>
    %207 = vector.extract_strided_slice %187 {offsets = [3, 0], sizes = [11, 128], strides = [1, 1]} : vector<15x128xf32> to vector<11x128xf32>
    %208 = arith.truncf %207 : vector<11x128xf32> to vector<11x128xbf16>
    %c3_107 = arith.constant 3 : index
    %c0_108 = arith.constant 0 : index
    %c0_109 = arith.constant 0 : index
    %209 = vector.load %arg11[%c3_107, %c0_108, %c0_109] : memref<5x128x256xbf16, #tpu.memory_space<vmem>>, vector<1x128x256xbf16>
    %210 = vector.shape_cast %209 : vector<1x128x256xbf16> to vector<128x256xbf16>
    %cst_110 = arith.constant dense<0.000000e+00> : vector<11x256xf32>
    %211 = tpu.matmul %208, %210, %cst_110 {dimension_numbers = #tpu.dot_dimension_numbers<[1], [0], [0], [1], [0, 0, 1, 1], [], []>} : vector<11x128xbf16>, vector<128x256xbf16>, vector<11x256xf32> -> vector<11x256xf32>
    %212 = arith.addf %206, %211 : vector<11x256xf32>
    %213 = vector.extract_strided_slice %187 {offsets = [4, 0], sizes = [11, 128], strides = [1, 1]} : vector<15x128xf32> to vector<11x128xf32>
    %214 = arith.truncf %213 : vector<11x128xf32> to vector<11x128xbf16>
    %c4_111 = arith.constant 4 : index
    %c0_112 = arith.constant 0 : index
    %c0_113 = arith.constant 0 : index
    %215 = vector.load %arg11[%c4_111, %c0_112, %c0_113] : memref<5x128x256xbf16, #tpu.memory_space<vmem>>, vector<1x128x256xbf16>
    %216 = vector.shape_cast %215 : vector<1x128x256xbf16> to vector<128x256xbf16>
    %cst_114 = arith.constant dense<0.000000e+00> : vector<11x256xf32>
    %217 = tpu.matmul %214, %216, %cst_114 {dimension_numbers = #tpu.dot_dimension_numbers<[1], [0], [0], [1], [0, 0, 1, 1], [], []>} : vector<11x128xbf16>, vector<128x256xbf16>, vector<11x256xf32> -> vector<11x256xf32>
    %218 = arith.addf %212, %217 : vector<11x256xf32>
    %c0_115 = arith.constant 0 : index
    %c0_116 = arith.constant 0 : index
    %219 = vector.load %arg12[%c0_115, %c0_116] : memref<1x256xf32, #tpu.memory_space<vmem>>, vector<1x256xf32>
    %220 = vector.broadcast %219 : vector<1x256xf32> to vector<11x256xf32>
    %221 = arith.mulf %218, %220 : vector<11x256xf32>
    %c0_117 = arith.constant 0 : index
    %c0_118 = arith.constant 0 : index
    %222 = vector.load %arg13[%c0_117, %c0_118] : memref<1x256xf32, #tpu.memory_space<vmem>>, vector<1x256xf32>
    %223 = vector.broadcast %222 : vector<1x256xf32> to vector<11x256xf32>
    %224 = arith.addf %221, %223 : vector<11x256xf32>
    %cst_119 = arith.constant 0.000000e+00 : f32
    %225 = vector.broadcast %cst_119 : f32 to vector<11x256xf32>
    %226 = arith.minimumf %224, %225 : vector<11x256xf32>
    %cst_120 = arith.constant 0.000000e+00 : f32
    %227 = vector.broadcast %cst_120 : f32 to vector<11x256xf32>
    %228 = arith.cmpf ogt, %224, %227 : vector<11x256xf32>
    %229 = math.exp %226 : vector<11x256xf32>
    %cst_121 = arith.constant 1.000000e+00 : f32
    %230 = vector.broadcast %cst_121 : f32 to vector<11x256xf32>
    %231 = arith.subf %229, %230 : vector<11x256xf32>
    %232 = arith.select %228, %224, %231 : vector<11x256xi1>, vector<11x256xf32>
    %233 = tpu.iota {dimensions = array<i32: 0>} : vector<5x11xi32>
    %234 = tpu.iota {dimensions = array<i32: 1>} : vector<5x11xi32>
    %c2_i32_122 = arith.constant 2 : i32
    %235 = vector.broadcast %c2_i32_122 : i32 to vector<5x11xi32>
    %236 = arith.muli %235, %233 : vector<5x11xi32>
    %237 = arith.cmpi eq, %234, %236 : vector<5x11xi32>
    %238 = arith.extui %237 : vector<5x11xi1> to vector<5x11xi32>
    %239 = arith.sitofp %238 : vector<5x11xi32> to vector<5x11xf32>
    %c2_i32_123 = arith.constant 2 : i32
    %240 = vector.broadcast %c2_i32_123 : i32 to vector<5x11xi32>
    %241 = arith.muli %240, %233 : vector<5x11xi32>
    %c1_i32_124 = arith.constant 1 : i32
    %242 = vector.broadcast %c1_i32_124 : i32 to vector<5x11xi32>
    %243 = arith.addi %241, %242 : vector<5x11xi32>
    %244 = arith.cmpi eq, %234, %243 : vector<5x11xi32>
    %245 = arith.extui %244 : vector<5x11xi1> to vector<5x11xi32>
    %246 = arith.sitofp %245 : vector<5x11xi32> to vector<5x11xf32>
    %cst_125 = arith.constant dense<0.000000e+00> : vector<5x256xf32>
    %247 = tpu.matmul %239, %232, %cst_125 {dimension_numbers = #tpu.dot_dimension_numbers<[1], [0], [0], [1], [0, 0, 1, 1], [], []>} : vector<5x11xf32>, vector<11x256xf32>, vector<5x256xf32> -> vector<5x256xf32>
    %cst_126 = arith.constant dense<0.000000e+00> : vector<5x256xf32>
    %248 = tpu.matmul %246, %232, %cst_126 {dimension_numbers = #tpu.dot_dimension_numbers<[1], [0], [0], [1], [0, 0, 1, 1], [], []>} : vector<5x11xf32>, vector<11x256xf32>, vector<5x256xf32> -> vector<5x256xf32>
    %249 = arith.maximumf %247, %248 : vector<5x256xf32>
    %c0_127 = arith.constant 0 : index
    %c0_128 = arith.constant 0 : index
    %250 = vector.load %arg15[%c0_127, %c0_128] : memref<1x128xf32, #tpu.memory_space<vmem>>, vector<1x128xf32>
    %251 = vector.extract_strided_slice %249 {offsets = [0, 0], sizes = [1, 256], strides = [1, 1]} : vector<5x256xf32> to vector<1x256xf32>
    %252 = arith.truncf %251 : vector<1x256xf32> to vector<1x256xbf16>
    %c0_129 = arith.constant 0 : index
    %c0_130 = arith.constant 0 : index
    %c0_131 = arith.constant 0 : index
    %253 = vector.load %arg14[%c0_129, %c0_130, %c0_131] : memref<5x256x128xbf16, #tpu.memory_space<vmem>>, vector<1x256x128xbf16>
    %254 = vector.shape_cast %253 : vector<1x256x128xbf16> to vector<256x128xbf16>
    %cst_132 = arith.constant dense<0.000000e+00> : vector<1x128xf32>
    %255 = tpu.matmul %252, %254, %cst_132 {dimension_numbers = #tpu.dot_dimension_numbers<[1], [0], [0], [1], [0, 0, 1, 1], [], []>} : vector<1x256xbf16>, vector<256x128xbf16>, vector<1x128xf32> -> vector<1x128xf32>
    %256 = arith.addf %250, %255 : vector<1x128xf32>
    %257 = vector.extract_strided_slice %249 {offsets = [1, 0], sizes = [1, 256], strides = [1, 1]} : vector<5x256xf32> to vector<1x256xf32>
    %258 = arith.truncf %257 : vector<1x256xf32> to vector<1x256xbf16>
    %c1_133 = arith.constant 1 : index
    %c0_134 = arith.constant 0 : index
    %c0_135 = arith.constant 0 : index
    %259 = vector.load %arg14[%c1_133, %c0_134, %c0_135] : memref<5x256x128xbf16, #tpu.memory_space<vmem>>, vector<1x256x128xbf16>
    %260 = vector.shape_cast %259 : vector<1x256x128xbf16> to vector<256x128xbf16>
    %cst_136 = arith.constant dense<0.000000e+00> : vector<1x128xf32>
    %261 = tpu.matmul %258, %260, %cst_136 {dimension_numbers = #tpu.dot_dimension_numbers<[1], [0], [0], [1], [0, 0, 1, 1], [], []>} : vector<1x256xbf16>, vector<256x128xbf16>, vector<1x128xf32> -> vector<1x128xf32>
    %262 = arith.addf %256, %261 : vector<1x128xf32>
    %263 = vector.extract_strided_slice %249 {offsets = [2, 0], sizes = [1, 256], strides = [1, 1]} : vector<5x256xf32> to vector<1x256xf32>
    %264 = arith.truncf %263 : vector<1x256xf32> to vector<1x256xbf16>
    %c2_137 = arith.constant 2 : index
    %c0_138 = arith.constant 0 : index
    %c0_139 = arith.constant 0 : index
    %265 = vector.load %arg14[%c2_137, %c0_138, %c0_139] : memref<5x256x128xbf16, #tpu.memory_space<vmem>>, vector<1x256x128xbf16>
    %266 = vector.shape_cast %265 : vector<1x256x128xbf16> to vector<256x128xbf16>
    %cst_140 = arith.constant dense<0.000000e+00> : vector<1x128xf32>
    %267 = tpu.matmul %264, %266, %cst_140 {dimension_numbers = #tpu.dot_dimension_numbers<[1], [0], [0], [1], [0, 0, 1, 1], [], []>} : vector<1x256xbf16>, vector<256x128xbf16>, vector<1x128xf32> -> vector<1x128xf32>
    %268 = arith.addf %262, %267 : vector<1x128xf32>
    %269 = vector.extract_strided_slice %249 {offsets = [3, 0], sizes = [1, 256], strides = [1, 1]} : vector<5x256xf32> to vector<1x256xf32>
    %270 = arith.truncf %269 : vector<1x256xf32> to vector<1x256xbf16>
    %c3_141 = arith.constant 3 : index
    %c0_142 = arith.constant 0 : index
    %c0_143 = arith.constant 0 : index
    %271 = vector.load %arg14[%c3_141, %c0_142, %c0_143] : memref<5x256x128xbf16, #tpu.memory_space<vmem>>, vector<1x256x128xbf16>
    %272 = vector.shape_cast %271 : vector<1x256x128xbf16> to vector<256x128xbf16>
    %cst_144 = arith.constant dense<0.000000e+00> : vector<1x128xf32>
    %273 = tpu.matmul %270, %272, %cst_144 {dimension_numbers = #tpu.dot_dimension_numbers<[1], [0], [0], [1], [0, 0, 1, 1], [], []>} : vector<1x256xbf16>, vector<256x128xbf16>, vector<1x128xf32> -> vector<1x128xf32>
    %274 = arith.addf %268, %273 : vector<1x128xf32>
    %275 = vector.extract_strided_slice %249 {offsets = [4, 0], sizes = [1, 256], strides = [1, 1]} : vector<5x256xf32> to vector<1x256xf32>
    %276 = arith.truncf %275 : vector<1x256xf32> to vector<1x256xbf16>
    %c4_145 = arith.constant 4 : index
    %c0_146 = arith.constant 0 : index
    %c0_147 = arith.constant 0 : index
    %277 = vector.load %arg14[%c4_145, %c0_146, %c0_147] : memref<5x256x128xbf16, #tpu.memory_space<vmem>>, vector<1x256x128xbf16>
    %278 = vector.shape_cast %277 : vector<1x256x128xbf16> to vector<256x128xbf16>
    %cst_148 = arith.constant dense<0.000000e+00> : vector<1x128xf32>
    %279 = tpu.matmul %276, %278, %cst_148 {dimension_numbers = #tpu.dot_dimension_numbers<[1], [0], [0], [1], [0, 0, 1, 1], [], []>} : vector<1x256xbf16>, vector<256x128xbf16>, vector<1x128xf32> -> vector<1x128xf32>
    %280 = arith.addf %274, %279 : vector<1x128xf32>
    %281 = tpu.iota {dimensions = array<i32: 1>} : vector<1x128xi32>
    %c2_i32_149 = arith.constant 2 : i32
    %282 = vector.broadcast %c2_i32_149 : i32 to vector<1x128xi32>
    %283 = arith.cmpi slt, %281, %282 : vector<1x128xi32>
    %cst_150 = arith.constant -1.000000e+30 : f32
    %284 = vector.broadcast %cst_150 : f32 to vector<1x128xf32>
    %285 = arith.select %283, %280, %284 : vector<1x128xi1>, vector<1x128xf32>
    %cst_151 = arith.constant dense<0xFF800000> : vector<1xf32>
    %286 = vector.multi_reduction <maximumf>, %285, %cst_151 [1] : vector<1x128xf32> to vector<1xf32>
    %287 = vector.shape_cast %286 : vector<1xf32> to vector<1x1xf32>
    %288 = vector.broadcast %287 : vector<1x1xf32> to vector<1x128xf32>
    %289 = arith.subf %285, %288 : vector<1x128xf32>
    %290 = math.exp %289 : vector<1x128xf32>
    %cst_152 = arith.constant dense<0.000000e+00> : vector<1xf32>
    %291 = vector.multi_reduction <add>, %290, %cst_152 [1] : vector<1x128xf32> to vector<1xf32>
    %292 = vector.shape_cast %291 : vector<1xf32> to vector<1x1xf32>
    %293 = math.log %292 : vector<1x1xf32>
    %294 = vector.broadcast %293 : vector<1x1xf32> to vector<1x128xf32>
    %295 = arith.subf %289, %294 : vector<1x128xf32>
    %c0_153 = arith.constant 0 : index
    %c0_154 = arith.constant 0 : index
    %c0_155 = arith.constant 0 : index
    %296 = vector.load %arg16[%c0_153, %c0_154, %c0_155] : memref<1x1x128xf32, #tpu.memory_space<vmem>>, vector<1x1x128xf32>
    %297 = vector.shape_cast %296 : vector<1x1x128xf32> to vector<1x128xf32>
    %298 = vector.shape_cast %295 : vector<1x128xf32> to vector<1x1x128xf32>
    tpu.vector_store %arg16[%c0_153, %c0_154, %c0_155], %298 {strides = array<i32>} : memref<1x1x128xf32, #tpu.memory_space<vmem>>, vector<1x1x128xf32>,
    return
  }
  func.func @transform_0(%arg0: i32) -> (i32, i32, i32) {
    %c0_i32 = arith.constant 0 : i32
    %c0_i32_0 = arith.constant 0 : i32
    %c0_i32_1 = arith.constant 0 : i32
    return %arg0, %c0_i32, %c0_i32_0 : i32, i32, i32
  }
  func.func @transform_1(%arg0: i32) -> (i32, i32, i32) {
    %c0_i32 = arith.constant 0 : i32
    %c0_i32_0 = arith.constant 0 : i32
    %c0_i32_1 = arith.constant 0 : i32
    %c0_i32_2 = arith.constant 0 : i32
    return %c0_i32, %c0_i32_0, %c0_i32_1 : i32, i32, i32
  }
  func.func @transform_2(%arg0: i32) -> (i32, i32) {
    %c0_i32 = arith.constant 0 : i32
    %c0_i32_0 = arith.constant 0 : i32
    %c0_i32_1 = arith.constant 0 : i32
    return %c0_i32, %c0_i32_0 : i32, i32
  }
  func.func @transform_3(%arg0: i32) -> (i32, i32) {
    %c0_i32 = arith.constant 0 : i32
    %c0_i32_0 = arith.constant 0 : i32
    %c0_i32_1 = arith.constant 0 : i32
    return %c0_i32, %c0_i32_0 : i32, i32
  }
  func.func @transform_4(%arg0: i32) -> (i32, i32, i32) {
    %c0_i32 = arith.constant 0 : i32
    %c0_i32_0 = arith.constant 0 : i32
    %c0_i32_1 = arith.constant 0 : i32
    %c0_i32_2 = arith.constant 0 : i32
    return %c0_i32, %c0_i32_0, %c0_i32_1 : i32, i32, i32
  }
  func.func @transform_5(%arg0: i32) -> (i32, i32) {
    %c0_i32 = arith.constant 0 : i32
    %c0_i32_0 = arith.constant 0 : i32
    %c0_i32_1 = arith.constant 0 : i32
    return %c0_i32, %c0_i32_0 : i32, i32
  }
  func.func @transform_6(%arg0: i32) -> (i32, i32) {
    %c0_i32 = arith.constant 0 : i32
    %c0_i32_0 = arith.constant 0 : i32
    %c0_i32_1 = arith.constant 0 : i32
    return %c0_i32, %c0_i32_0 : i32, i32
  }
  func.func @transform_7(%arg0: i32) -> (i32, i32, i32) {
    %c0_i32 = arith.constant 0 : i32
    %c0_i32_0 = arith.constant 0 : i32
    %c0_i32_1 = arith.constant 0 : i32
    %c0_i32_2 = arith.constant 0 : i32
    return %c0_i32, %c0_i32_0, %c0_i32_1 : i32, i32, i32
  }
  func.func @transform_8(%arg0: i32) -> (i32, i32) {
    %c0_i32 = arith.constant 0 : i32
    %c0_i32_0 = arith.constant 0 : i32
    %c0_i32_1 = arith.constant 0 : i32
    return %c0_i32, %c0_i32_0 : i32, i32
  }
  func.func @transform_9(%arg0: i32) -> (i32, i32) {
    %c0_i32 = arith.constant 0 : i32
    %c0_i32_0 = arith.constant 0 : i32
    %c0_i32_1 = arith.constant 0 : i32
    return %c0_i32, %c0_i32_0 : i32, i32
  }
  func.func @transform_10(%arg0: i32) -> (i32, i32, i32) {
    %c0_i32 = arith.constant 0 : i32
    %c0_i32_0 = arith.constant 0 : i32
    %c0_i32_1 = arith.constant 0 : i32
    %c0_i32_2 = arith.constant 0 : i32
    return %c0_i32, %c0_i32_0, %c0_i32_1 : i32, i32, i32
  }
  func.func @transform_11(%arg0: i32) -> (i32, i32) {
    %c0_i32 = arith.constant 0 : i32
    %c0_i32_0 = arith.constant 0 : i32
    %c0_i32_1 = arith.constant 0 : i32
    return %c0_i32, %c0_i32_0 : i32, i32
  }
  func.func @transform_12(%arg0: i32) -> (i32, i32) {
    %c0_i32 = arith.constant 0 : i32
    %c0_i32_0 = arith.constant 0 : i32
    %c0_i32_1 = arith.constant 0 : i32
    return %c0_i32, %c0_i32_0 : i32, i32
  }
  func.func @transform_13(%arg0: i32) -> (i32, i32, i32) {
    %c0_i32 = arith.constant 0 : i32
    %c0_i32_0 = arith.constant 0 : i32
    %c0_i32_1 = arith.constant 0 : i32
    %c0_i32_2 = arith.constant 0 : i32
    return %c0_i32, %c0_i32_0, %c0_i32_1 : i32, i32, i32
  }
  func.func @transform_14(%arg0: i32) -> (i32, i32) {
    %c0_i32 = arith.constant 0 : i32
    %c0_i32_0 = arith.constant 0 : i32
    %c0_i32_1 = arith.constant 0 : i32
    return %c0_i32, %c0_i32_0 : i32, i32
  }
  func.func @transform_15(%arg0: i32) -> (i32, i32, i32) {
    %c0_i32 = arith.constant 0 : i32
    %c0_i32_0 = arith.constant 0 : i32
    %c0_i32_1 = arith.constant 0 : i32
    return %arg0, %c0_i32, %c0_i32_0 : i32, i32, i32
  }
}

</mosaic_0001>

<llo_original>
// kernel: deep_conv_net_forward.1
$region0: #{deep_conv_net_forward.1}
  #allocation0 [shape = 'u32[]', space=smem, size = 0x4, offset = 0x4, fixed_abs, tag = 'smem constant byte address 0x4 - core index']
  #allocation1 [shape = 'u32[144,128]{1,0:T(1,128)}', space=vmem, size = 0x12000, scoped, tag = 'internal scratch']
  %s0 = inlined_call_operand.vmem [shape: f32[2,150,8], index: 0, kind: input, shape index: {}]
  %s1 = inlined_call_operand.vmem [shape: bf16[5,8,128], index: 1, kind: input, shape index: {}]
  %s2 = inlined_call_operand.vmem [shape: f32[1,128], index: 2, kind: input, shape index: {}]
  %s3 = inlined_call_operand.vmem [shape: f32[1,128], index: 3, kind: input, shape index: {}]
  %s4 = inlined_call_operand.vmem [shape: bf16[5,128,128], index: 4, kind: input, shape index: {}]
  %s5 = inlined_call_operand.vmem [shape: f32[1,128], index: 5, kind: input, shape index: {}]
  %s6 = inlined_call_operand.vmem [shape: f32[1,128], index: 6, kind: input, shape index: {}]
  %s7 = inlined_call_operand.vmem [shape: bf16[5,128,128], index: 7, kind: input, shape index: {}]
  %s8 = inlined_call_operand.vmem [shape: f32[1,128], index: 8, kind: input, shape index: {}]
  %s9 = inlined_call_operand.vmem [shape: f32[1,128], index: 9, kind: input, shape index: {}]
  %s10 = inlined_call_operand.vmem [shape: bf16[5,128,256], index: 10, kind: input, shape index: {}]
  %s11 = inlined_call_operand.vmem [shape: f32[1,256], index: 11, kind: input, shape index: {}]
  %s12 = inlined_call_operand.vmem [shape: f32[1,256], index: 12, kind: input, shape index: {}]
  %s13 = inlined_call_operand.vmem [shape: bf16[5,256,128], index: 13, kind: input, shape index: {}]
  %s14 = inlined_call_operand.vmem [shape: f32[1,128], index: 14, kind: input, shape index: {}]
  %s15 = inlined_call_operand.hbm [shape: f32[2,1,128], index: 15, kind: output, shape index: {}]
  %s16 = sld [smem:[#allocation0]]
  $region93: #{deep_conv_net_forward.1} parent=0
    _
  %s18 = ssub.s32 1, %s16
  %s19 = scalar_select 0, %s18, %s16
  $region1: #{deep_conv_net_forward.1} parent=0
    #allocation2 [shape = 'u8[1024]{0}', space=vmem, size = 0x400, scoped, tag = 'output window, operand 0']
    #allocation3 [shape = 's32[2]{0}', space=sflag, size = 0x8, scoped, tag = 'scoped memory for deep_conv_net_forward.1']
    %20 = vsyncpa [#allocation3], 0
    %s21 = scalar_lea.sflag [#allocation3], 1
    %22 = vsyncpa %s21, 0
    loop: start=0, step=1, limit=4
    $region2: #{deep_conv_net_forward.1} parent=1 // loop_pre_header
      _
    $region3: #{deep_conv_net_forward.1} parent=1 // loop_header
      %s24 = sphi 0, %s28
      %p25 = scmp.ge.s32.totalorder %s24, 4
      %s34 = sphi 0, %s36
      %s37 = sphi 0, %s34
      %s38 = sphi 0, %s37
      %s54 = sphi 0, %s38
      %s58 = sphi 0, %s58
      %s60 = sphi 0, %s58
      %s61 = sphi 0, %s60
      %s75 = sphi 0, %s61
      %s79 = sphi 0, %s79
      %s81 = sphi 0, %s79
      %s82 = sphi 0, %s81
      %s96 = sphi 0, %s82
      %s100 = sphi 0, %s100
      %s102 = sphi 0, %s100
      %s103 = sphi 0, %s102
      %s117 = sphi 0, %s103
      %s121 = sphi 0, %s121
      %s123 = sphi 0, %s121
      %s124 = sphi 0, %s123
      %s138 = sphi 0, %s124
      %s142 = sphi 0, %s142
      %s144 = sphi 0, %s142
      %s145 = sphi 0, %s144
      %s159 = sphi 0, %s145
      %s163 = sphi 0, %s163
      %s165 = sphi 0, %s163
      %s166 = sphi 0, %s165
      %s180 = sphi 0, %s166
      %s184 = sphi 0, %s184
      %s186 = sphi 0, %s184
      %s187 = sphi 0, %s186
      %s201 = sphi 0, %s187
      %s205 = sphi 0, %s205
      %s207 = sphi 0, %s205
      %s208 = sphi 0, %s207
      %s222 = sphi 0, %s208
      %s226 = sphi 0, %s226
      %s228 = sphi 0, %s226
      %s229 = sphi 0, %s228
      %s243 = sphi 0, %s229
      %s247 = sphi 0, %s247
      %s249 = sphi 0, %s247
      %s250 = sphi 0, %s249
      %s264 = sphi 0, %s250
      %s268 = sphi 0, %s268
      %s270 = sphi 0, %s268
      %s271 = sphi 0, %s270
      %s285 = sphi 0, %s271
      %s289 = sphi 0, %s289
      %s291 = sphi 0, %s289
      %s292 = sphi 0, %s291
      %s306 = sphi 0, %s292
      %s310 = sphi 0, %s310
      %s312 = sphi 0, %s310
      %s313 = sphi 0, %s312
      %s327 = sphi 0, %s313
      %s331 = sphi 0, %s331
      %s333 = sphi 0, %s331
      %s334 = sphi 0, %s333
      %s348 = sphi 0, %s334
      %s354 = sphi 0, %s356
      %s357 = sphi 0, %s354
      %s358 = sphi 0, %s357
      %s374 = sphi 0, %s358
    $region4: #{deep_conv_net_forward.1} parent=1 // loop_header_branch
      %27 = sbr.rel (%p25) target = $region8
    $region5: #{deep_conv_net_forward.1} parent=1 // loop_body
      %s29 = ssub.s32 %s24, 1
      %s30 = ssub.s32 %s24, 2
      %s31 = sadd.s32 %s24, 1
      %s32 = ssub.s32 %s24, %s31
      %p33 = scmp.eq.s32.totalorder %s32, 0
      %s35 = sadd.s32 %s34, 1
      %s36 = scalar_select %p33, %s34, %s35
      %p39 = pneg %p33
      %p40 = scmp.eq.s32.totalorder %s24, 1
      %p41 = por %p39, %p40
      %p42 = scmp.ne.s32.totalorder %s34, %s37
      %p43 = scmp.eq.s32.totalorder %s24, 0
      %p44 = por %p42, %p43
      %p45 = scmp.ne.s32.totalorder %s34, %s37
      %p46 = scmp.eq.s32.totalorder %s29, 1
      %p47 = por %p45, %p46
      %p48 = scmp.ne.s32.totalorder %s37, %s38
      %p49 = scmp.eq.s32.totalorder %s29, 0
      %p50 = por %p48, %p49
      %p51 = scmp.ne.s32.totalorder %s37, %s38
      %p52 = scmp.eq.s32.totalorder %s30, 1
      %p53 = por %p51, %p52
      %p55 = scmp.ne.s32.totalorder %s38, %s54
      %p56 = scmp.eq.s32.totalorder %s30, 0
      %p57 = por %p55, %p56
      %s59 = sadd.s32 %s58, 1
      %p62 = scmp.eq.s32.totalorder %s24, 1
      %p63 = scmp.ne.s32.totalorder %s58, %s60
      %p64 = scmp.eq.s32.totalorder %s24, 0
      %p65 = por %p63, %p64
      %p66 = scmp.ne.s32.totalorder %s58, %s60
      %p67 = scmp.eq.s32.totalorder %s29, 1
      %p68 = por %p66, %p67
      %p69 = scmp.ne.s32.totalorder %s60, %s61
      %p70 = scmp.eq.s32.totalorder %s29, 0
      %p71 = por %p69, %p70
      %p72 = scmp.ne.s32.totalorder %s60, %s61
      %p73 = scmp.eq.s32.totalorder %s30, 1
      %p74 = por %p72, %p73
      %p76 = scmp.ne.s32.totalorder %s61, %s75
      %p77 = scmp.eq.s32.totalorder %s30, 0
      %p78 = por %p76, %p77
      %s80 = sadd.s32 %s79, 1
      %p83 = scmp.eq.s32.totalorder %s24, 1
      %p84 = scmp.ne.s32.totalorder %s79, %s81
      %p85 = scmp.eq.s32.totalorder %s24, 0
      %p86 = por %p84, %p85
      %p87 = scmp.ne.s32.totalorder %s79, %s81
      %p88 = scmp.eq.s32.totalorder %s29, 1
      %p89 = por %p87, %p88
      %p90 = scmp.ne.s32.totalorder %s81, %s82
      %p91 = scmp.eq.s32.totalorder %s29, 0
      %p92 = por %p90, %p91
      %p93 = scmp.ne.s32.totalorder %s81, %s82
      %p94 = scmp.eq.s32.totalorder %s30, 1
      %p95 = por %p93, %p94
      %p97 = scmp.ne.s32.totalorder %s82, %s96
      %p98 = scmp.eq.s32.totalorder %s30, 0
      %p99 = por %p97, %p98
      %s101 = sadd.s32 %s100, 1
      %p104 = scmp.eq.s32.totalorder %s24, 1
      %p105 = scmp.ne.s32.totalorder %s100, %s102
      %p106 = scmp.eq.s32.totalorder %s24, 0
      %p107 = por %p105, %p106
      %p108 = scmp.ne.s32.totalorder %s100, %s102
      %p109 = scmp.eq.s32.totalorder %s29, 1
      %p110 = por %p108, %p109
      %p111 = scmp.ne.s32.totalorder %s102, %s103
      %p112 = scmp.eq.s32.totalorder %s29, 0
      %p113 = por %p111, %p112
      %p114 = scmp.ne.s32.totalorder %s102, %s103
      %p115 = scmp.eq.s32.totalorder %s30, 1
      %p116 = por %p114, %p115
      %p118 = scmp.ne.s32.totalorder %s103, %s117
      %p119 = scmp.eq.s32.totalorder %s30, 0
      %p120 = por %p118, %p119
      %s122 = sadd.s32 %s121, 1
      %p125 = scmp.eq.s32.totalorder %s24, 1
      %p126 = scmp.ne.s32.totalorder %s121, %s123
      %p127 = scmp.eq.s32.totalorder %s24, 0
      %p128 = por %p126, %p127
      %p129 = scmp.ne.s32.totalorder %s121, %s123
      %p130 = scmp.eq.s32.totalorder %s29, 1
      %p131 = por %p129, %p130
      %p132 = scmp.ne.s32.totalorder %s123, %s124
      %p133 = scmp.eq.s32.totalorder %s29, 0
      %p134 = por %p132, %p133
      %p135 = scmp.ne.s32.totalorder %s123, %s124
      %p136 = scmp.eq.s32.totalorder %s30, 1
      %p137 = por %p135, %p136
      %p139 = scmp.ne.s32.totalorder %s124, %s138
      %p140 = scmp.eq.s32.totalorder %s30, 0
      %p141 = por %p139, %p140
      %s143 = sadd.s32 %s142, 1
      %p146 = scmp.eq.s32.totalorder %s24, 1
      %p147 = scmp.ne.s32.totalorder %s142, %s144
      %p148 = scmp.eq.s32.totalorder %s24, 0
      %p149 = por %p147, %p148
      %p150 = scmp.ne.s32.totalorder %s142, %s144
      %p151 = scmp.eq.s32.totalorder %s29, 1
      %p152 = por %p150, %p151
      %p153 = scmp.ne.s32.totalorder %s144, %s145
      %p154 = scmp.eq.s32.totalorder %s29, 0
      %p155 = por %p153, %p154
      %p156 = scmp.ne.s32.totalorder %s144, %s145
      %p157 = scmp.eq.s32.totalorder %s30, 1
      %p158 = por %p156, %p157
      %p160 = scmp.ne.s32.totalorder %s145, %s159
      %p161 = scmp.eq.s32.totalorder %s30, 0
      %p162 = por %p160, %p161
      %s164 = sadd.s32 %s163, 1
      %p167 = scmp.eq.s32.totalorder %s24, 1
      %p168 = scmp.ne.s32.totalorder %s163, %s165
      %p169 = scmp.eq.s32.totalorder %s24, 0
      %p170 = por %p168, %p169
      %p171 = scmp.ne.s32.totalorder %s163, %s165
      %p172 = scmp.eq.s32.totalorder %s29, 1
      %p173 = por %p171, %p172
      %p174 = scmp.ne.s32.totalorder %s165, %s166
      %p175 = scmp.eq.s32.totalorder %s29, 0
      %p176 = por %p174, %p175
      %p177 = scmp.ne.s32.totalorder %s165, %s166
      %p178 = scmp.eq.s32.totalorder %s30, 1
      %p179 = por %p177, %p178
      %p181 = scmp.ne.s32.totalorder %s166, %s180
      %p182 = scmp.eq.s32.totalorder %s30, 0
      %p183 = por %p181, %p182
      %s185 = sadd.s32 %s184, 1
      %p188 = scmp.eq.s32.totalorder %s24, 1
      %p189 = scmp.ne.s32.totalorder %s184, %s186
      %p190 = scmp.eq.s32.totalorder %s24, 0
      %p191 = por %p189, %p190
      %p192 = scmp.ne.s32.totalorder %s184, %s186
      %p193 = scmp.eq.s32.totalorder %s29, 1
      %p194 = por %p192, %p193
      %p195 = scmp.ne.s32.totalorder %s186, %s187
      %p196 = scmp.eq.s32.totalorder %s29, 0
      %p197 = por %p195, %p196
      %p198 = scmp.ne.s32.totalorder %s186, %s187
      %p199 = scmp.eq.s32.totalorder %s30, 1
      %p200 = por %p198, %p199
      %p202 = scmp.ne.s32.totalorder %s187, %s201
      %p203 = scmp.eq.s32.totalorder %s30, 0
      %p204 = por %p202, %p203
      %s206 = sadd.s32 %s205, 1
      %p209 = scmp.eq.s32.totalorder %s24, 1
      %p210 = scmp.ne.s32.totalorder %s205, %s207
      %p211 = scmp.eq.s32.totalorder %s24, 0
      %p212 = por %p210, %p211
      %p213 = scmp.ne.s32.totalorder %s205, %s207
      %p214 = scmp.eq.s32.totalorder %s29, 1
      %p215 = por %p213, %p214
      %p216 = scmp.ne.s32.totalorder %s207, %s208
      %p217 = scmp.eq.s32.totalorder %s29, 0
      %p218 = por %p216, %p217
      %p219 = scmp.ne.s32.totalorder %s207, %s208
      %p220 = scmp.eq.s32.totalorder %s30, 1
      %p221 = por %p219, %p220
      %p223 = scmp.ne.s32.totalorder %s208, %s222
      %p224 = scmp.eq.s32.totalorder %s30, 0
      %p225 = por %p223, %p224
      %s227 = sadd.s32 %s226, 1
      %p230 = scmp.eq.s32.totalorder %s24, 1
      %p231 = scmp.ne.s32.totalorder %s226, %s228
      %p232 = scmp.eq.s32.totalorder %s24, 0
      %p233 = por %p231, %p232
      %p234 = scmp.ne.s32.totalorder %s226, %s228
      %p235 = scmp.eq.s32.totalorder %s29, 1
      %p236 = por %p234, %p235
      %p237 = scmp.ne.s32.totalorder %s228, %s229
      %p238 = scmp.eq.s32.totalorder %s29, 0
      %p239 = por %p237, %p238
      %p240 = scmp.ne.s32.totalorder %s228, %s229
      %p241 = scmp.eq.s32.totalorder %s30, 1
      %p242 = por %p240, %p241
      %p244 = scmp.ne.s32.totalorder %s229, %s243
      %p245 = scmp.eq.s32.totalorder %s30, 0
      %p246 = por %p244, %p245
      %s248 = sadd.s32 %s247, 1
      %p251 = scmp.eq.s32.totalorder %s24, 1
      %p252 = scmp.ne.s32.totalorder %s247, %s249
      %p253 = scmp.eq.s32.totalorder %s24, 0
      %p254 = por %p252, %p253
      %p255 = scmp.ne.s32.totalorder %s247, %s249
      %p256 = scmp.eq.s32.totalorder %s29, 1
      %p257 = por %p255, %p256
      %p258 = scmp.ne.s32.totalorder %s249, %s250
      %p259 = scmp.eq.s32.totalorder %s29, 0
      %p260 = por %p258, %p259
      %p261 = scmp.ne.s32.totalorder %s249, %s250
      %p262 = scmp.eq.s32.totalorder %s30, 1
      %p263 = por %p261, %p262
      %p265 = scmp.ne.s32.totalorder %s250, %s264
      %p266 = scmp.eq.s32.totalorder %s30, 0
      %p267 = por %p265, %p266
      %s269 = sadd.s32 %s268, 1
      %p272 = scmp.eq.s32.totalorder %s24, 1
      %p273 = scmp.ne.s32.totalorder %s268, %s270
      %p274 = scmp.eq.s32.totalorder %s24, 0
      %p275 = por %p273, %p274
      %p276 = scmp.ne.s32.totalorder %s268, %s270
      %p277 = scmp.eq.s32.totalorder %s29, 1
      %p278 = por %p276, %p277
      %p279 = scmp.ne.s32.totalorder %s270, %s271
      %p280 = scmp.eq.s32.totalorder %s29, 0
      %p281 = por %p279, %p280
      %p282 = scmp.ne.s32.totalorder %s270, %s271
      %p283 = scmp.eq.s32.totalorder %s30, 1
      %p284 = por %p282, %p283
      %p286 = scmp.ne.s32.totalorder %s271, %s285
      %p287 = scmp.eq.s32.totalorder %s30, 0
      %p288 = por %p286, %p287
      %s290 = sadd.s32 %s289, 1
      %p293 = scmp.eq.s32.totalorder %s24, 1
      %p294 = scmp.ne.s32.totalorder %s289, %s291
      %p295 = scmp.eq.s32.totalorder %s24, 0
      %p296 = por %p294, %p295
      %p297 = scmp.ne.s32.totalorder %s289, %s291
      %p298 = scmp.eq.s32.totalorder %s29, 1
      %p299 = por %p297, %p298
      %p300 = scmp.ne.s32.totalorder %s291, %s292
      %p301 = scmp.eq.s32.totalorder %s29, 0
      %p302 = por %p300, %p301
      %p303 = scmp.ne.s32.totalorder %s291, %s292
      %p304 = scmp.eq.s32.totalorder %s30, 1
      %p305 = por %p303, %p304
      %p307 = scmp.ne.s32.totalorder %s292, %s306
      %p308 = scmp.eq.s32.totalorder %s30, 0
      %p309 = por %p307, %p308
      %s311 = sadd.s32 %s310, 1
      %p314 = scmp.eq.s32.totalorder %s24, 1
      %p315 = scmp.ne.s32.totalorder %s310, %s312
      %p316 = scmp.eq.s32.totalorder %s24, 0
      %p317 = por %p315, %p316
      %p318 = scmp.ne.s32.totalorder %s310, %s312
      %p319 = scmp.eq.s32.totalorder %s29, 1
      %p320 = por %p318, %p319
      %p321 = scmp.ne.s32.totalorder %s312, %s313
      %p322 = scmp.eq.s32.totalorder %s29, 0
      %p323 = por %p321, %p322
      %p324 = scmp.ne.s32.totalorder %s312, %s313
      %p325 = scmp.eq.s32.totalorder %s30, 1
      %p326 = por %p324, %p325
      %p328 = scmp.ne.s32.totalorder %s313, %s327
      %p329 = scmp.eq.s32.totalorder %s30, 0
      %p330 = por %p328, %p329
      %s332 = sadd.s32 %s331, 1
      %p335 = scmp.eq.s32.totalorder %s24, 1
      %p336 = scmp.ne.s32.totalorder %s331, %s333
      %p337 = scmp.eq.s32.totalorder %s24, 0
      %p338 = por %p336, %p337
      %p339 = scmp.ne.s32.totalorder %s331, %s333
      %p340 = scmp.eq.s32.totalorder %s29, 1
      %p341 = por %p339, %p340
      %p342 = scmp.ne.s32.totalorder %s333, %s334
      %p343 = scmp.eq.s32.totalorder %s29, 0
      %p344 = por %p342, %p343
      %p345 = scmp.ne.s32.totalorder %s333, %s334
      %p346 = scmp.eq.s32.totalorder %s30, 1
      %p347 = por %p345, %p346
      %p349 = scmp.ne.s32.totalorder %s334, %s348
      %p350 = scmp.eq.s32.totalorder %s30, 0
      %p351 = por %p349, %p350
      %s352 = ssub.s32 %s24, %s31
      %p353 = scmp.eq.s32.totalorder %s352, 0
      %s355 = sadd.s32 %s354, 1
      %s356 = scalar_select %p353, %s354, %s355
      %p359 = pneg %p353
      %p360 = scmp.eq.s32.totalorder %s24, 1
      %p361 = por %p359, %p360
      %p362 = scmp.ne.s32.totalorder %s354, %s357
      %p363 = scmp.eq.s32.totalorder %s24, 0
      %p364 = por %p362, %p363
      %p365 = scmp.ne.s32.totalorder %s354, %s357
      %p366 = scmp.eq.s32.totalorder %s29, 1
      %p367 = por %p365, %p366
      %p368 = scmp.ne.s32.totalorder %s357, %s358
      %p369 = scmp.eq.s32.totalorder %s29, 0
      %p370 = por %p368, %p369
      %p371 = scmp.ne.s32.totalorder %s357, %s358
      %p372 = scmp.eq.s32.totalorder %s30, 1
      %p373 = por %p371, %p372
      %p375 = scmp.ne.s32.totalorder %s358, %s374
      %p376 = scmp.eq.s32.totalorder %s30, 0
      %p377 = por %p375, %p376
      %p378 = scmp.le.s32.totalorder 1, %s24
      %p379 = scmp.lt.s32.totalorder %s24, 3
      %p380 = pnand %p378, %p379
      %p381 = pneg %p380
      // Predicated region
      $region9: #{deep_conv_net_forward.1} parent=5 // pred_check
        _
      $region10: #{deep_conv_net_forward.1} parent=5 // pred_check_branch
        %383 = sbr.rel (%p380) target = $region12
      $region11: #{deep_conv_net_forward.1} parent=5 // pred_region
        %s384 = ssub.s32 %s24, 1
        // Predicated region
        $region13: #{deep_conv_net_forward.1} parent=11 // pred_check
          %p385 = pneg %p71
        $region14: #{deep_conv_net_forward.1} parent=11 // pred_check_branch
          %387 = sbr.rel (%p385) target = $region16
        $region15: #{deep_conv_net_forward.1} parent=11 // pred_region
          _
        $region16: #{deep_conv_net_forward.1} parent=11 // pred_fallthru
          _
        // Predicated region
        $region17: #{deep_conv_net_forward.1} parent=11 // pred_check
          %p388 = pneg %p92
        $region18: #{deep_conv_net_forward.1} parent=11 // pred_check_branch
          %390 = sbr.rel (%p388) target = $region20
        $region19: #{deep_conv_net_forward.1} parent=11 // pred_region
          _
        $region20: #{deep_conv_net_forward.1} parent=11 // pred_fallthru
          _
        // Predicated region
        $region21: #{deep_conv_net_forward.1} parent=11 // pred_check
          %p391 = pneg %p113
        $region22: #{deep_conv_net_forward.1} parent=11 // pred_check_branch
          %393 = sbr.rel (%p391) target = $region24
        $region23: #{deep_conv_net_forward.1} parent=11 // pred_region
          _
        $region24: #{deep_conv_net_forward.1} parent=11 // pred_fallthru
          _
        // Predicated region
        $region25: #{deep_conv_net_forward.1} parent=11 // pred_check
          %p394 = pneg %p134
        $region26: #{deep_conv_net_forward.1} parent=11 // pred_check_branch
          %396 = sbr.rel (%p394) target = $region28
        $region27: #{deep_conv_net_forward.1} parent=11 // pred_region
          _
        $region28: #{deep_conv_net_forward.1} parent=11 // pred_fallthru
          _
        // Predicated region
        $region29: #{deep_conv_net_forward.1} parent=11 // pred_check
          %p397 = pneg %p155
        $region30: #{deep_conv_net_forward.1} parent=11 // pred_check_branch
          %399 = sbr.rel (%p397) target = $region32
        $region31: #{deep_conv_net_forward.1} parent=11 // pred_region
          _
        $region32: #{deep_conv_net_forward.1} parent=11 // pred_fallthru
          _
        // Predicated region
        $region33: #{deep_conv_net_forward.1} parent=11 // pred_check
          %p400 = pneg %p176
        $region34: #{deep_conv_net_forward.1} parent=11 // pred_check_branch
          %402 = sbr.rel (%p400) target = $region36
        $region35: #{deep_conv_net_forward.1} parent=11 // pred_region
          _
        $region36: #{deep_conv_net_forward.1} parent=11 // pred_fallthru
          _
        // Predicated region
        $region37: #{deep_conv_net_forward.1} parent=11 // pred_check
          %p403 = pneg %p197
        $region38: #{deep_conv_net_forward.1} parent=11 // pred_check_branch
          %405 = sbr.rel (%p403) target = $region40
        $region39: #{deep_conv_net_forward.1} parent=11 // pred_region
          _
        $region40: #{deep_conv_net_forward.1} parent=11 // pred_fallthru
          _
        // Predicated region
        $region41: #{deep_conv_net_forward.1} parent=11 // pred_check
          %p406 = pneg %p218
        $region42: #{deep_conv_net_forward.1} parent=11 // pred_check_branch
          %408 = sbr.rel (%p406) target = $region44
        $region43: #{deep_conv_net_forward.1} parent=11 // pred_region
          _
        $region44: #{deep_conv_net_forward.1} parent=11 // pred_fallthru
          _
        // Predicated region
        $region45: #{deep_conv_net_forward.1} parent=11 // pred_check
          %p409 = pneg %p239
        $region46: #{deep_conv_net_forward.1} parent=11 // pred_check_branch
          %411 = sbr.rel (%p409) target = $region48
        $region47: #{deep_conv_net_forward.1} parent=11 // pred_region
          _
        $region48: #{deep_conv_net_forward.1} parent=11 // pred_fallthru
          _
        // Predicated region
        $region49: #{deep_conv_net_forward.1} parent=11 // pred_check
          %p412 = pneg %p260
        $region50: #{deep_conv_net_forward.1} parent=11 // pred_check_branch
          %414 = sbr.rel (%p412) target = $region52
        $region51: #{deep_conv_net_forward.1} parent=11 // pred_region
          _
        $region52: #{deep_conv_net_forward.1} parent=11 // pred_fallthru
          _
        // Predicated region
        $region53: #{deep_conv_net_forward.1} parent=11 // pred_check
          %p415 = pneg %p281
        $region54: #{deep_conv_net_forward.1} parent=11 // pred_check_branch
          %417 = sbr.rel (%p415) target = $region56
        $region55: #{deep_conv_net_forward.1} parent=11 // pred_region
          _
        $region56: #{deep_conv_net_forward.1} parent=11 // pred_fallthru
          _
        // Predicated region
        $region57: #{deep_conv_net_forward.1} parent=11 // pred_check
          %p418 = pneg %p302
        $region58: #{deep_conv_net_forward.1} parent=11 // pred_check_branch
          %420 = sbr.rel (%p418) target = $region60
        $region59: #{deep_conv_net_forward.1} parent=11 // pred_region
          _
        $region60: #{deep_conv_net_forward.1} parent=11 // pred_fallthru
          _
        // Predicated region
        $region61: #{deep_conv_net_forward.1} parent=11 // pred_check
          %p421 = pneg %p323
        $region62: #{deep_conv_net_forward.1} parent=11 // pred_check_branch
          %423 = sbr.rel (%p421) target = $region64
        $region63: #{deep_conv_net_forward.1} parent=11 // pred_region
          _
        $region64: #{deep_conv_net_forward.1} parent=11 // pred_fallthru
          _
        // Predicated region
        $region65: #{deep_conv_net_forward.1} parent=11 // pred_check
          %p424 = pneg %p344
        $region66: #{deep_conv_net_forward.1} parent=11 // pred_check_branch
          %426 = sbr.rel (%p424) target = $region68
        $region67: #{deep_conv_net_forward.1} parent=11 // pred_region
          _
        $region68: #{deep_conv_net_forward.1} parent=11 // pred_fallthru
          _
      $region12: #{deep_conv_net_forward.1} parent=5 // pred_fallthru
        _
      %p427 = scmp.lt.s32.totalorder %s24, 2
      // Predicated region
      $region69: #{deep_conv_net_forward.1} parent=5 // pred_check
        %p428 = pneg %p427
      $region70: #{deep_conv_net_forward.1} parent=5 // pred_check_branch
        %430 = sbr.rel (%p428) target = $region72
      $region71: #{deep_conv_net_forward.1} parent=5 // pred_region
        // Predicated region
        $region73: #{deep_conv_net_forward.1} parent=71 // pred_check
          %p431 = pneg %p44
        $region74: #{deep_conv_net_forward.1} parent=71 // pred_check_branch
          %433 = sbr.rel (%p431) target = $region76
        $region75: #{deep_conv_net_forward.1} parent=71 // pred_region
          %p434 = scmp.lt.s32.totalorder %s24, 1
          %s435 = scalar_select %p434, %s24, 1
          %s436 = smul.addr %s435, 19
          %s437 = smul.addr %s436, 8
          %s438 = scalar_lea.vmem %s0, %s437
        $region76: #{deep_conv_net_forward.1} parent=71 // pred_fallthru
          _
      $region72: #{deep_conv_net_forward.1} parent=5 // pred_fallthru
        _
      %p439 = scmp.le.s32.totalorder 1, %s24
      %p440 = scmp.lt.s32.totalorder %s24, 3
      %p441 = pnand %p439, %p440
      %p442 = pneg %p441
      // Predicated region
      $region77: #{deep_conv_net_forward.1} parent=5 // pred_check
        _
      $region78: #{deep_conv_net_forward.1} parent=5 // pred_check_branch
        %444 = sbr.rel (%p441) target = $region80
      $region79: #{deep_conv_net_forward.1} parent=5 // pred_region
        %s445 = ssub.s32 %s24, 1
        %p446 = scmp.lt.s32.totalorder %s29, 1
        %s447 = scalar_select %p446, %s29, 1
        %s448 = smul.addr %s447, 19
        %s449 = smul.addr %s448, 8
        %s450 = scalar_lea.vmem %s0, %s449
        %p451 = pneg %p50
        %p452 = pneg %p47
        %p453 = pneg %p71
        %p454 = pneg %p68
        %p455 = pneg %p92
        %p456 = pneg %p89
        %p457 = pneg %p113
        %p458 = pneg %p110
        %p459 = pneg %p134
        %p460 = pneg %p131
        %p461 = pneg %p155
        %p462 = pneg %p152
        %p463 = pneg %p176
        %p464 = pneg %p173
        %p465 = pneg %p197
        %p466 = pneg %p194
        %p467 = pneg %p218
        %p468 = pneg %p215
        %p469 = pneg %p239
        %p470 = pneg %p236
        %p471 = pneg %p260
        %p472 = pneg %p257
        %p473 = pneg %p281
        %p474 = pneg %p278
        %p475 = pneg %p302
        %p476 = pneg %p299
        %p477 = pneg %p323
        %p478 = pneg %p320
        %p479 = pneg %p344
        %p480 = pneg %p341
        %p481 = pneg %p370
        %p482 = pneg %p367
        %s483 = sand.u32 %s357, 1
        %s484 = scalar_lea.sflag [#allocation3], %s483
        %s485 = sand.u32 %s357, 1
        %s486 = scalar_lea.vmem [#allocation2], %s485
        %p487 = scmp.lt.s32.totalorder %s29, 1
        %s488 = scalar_select %p487, %s29, 1
        %s489 = smul.addr %s488, 19
        %s490 = smul.addr %s489, 8
        %s491 = scalar_lea.vmem %s0, %s490
        %v493 = vld [vmem:[%s491] sm:$0xff]
        %v494 = vld [vmem:[%s491 + $0x8] sm:$0xff]
        %v495 = vld [vmem:[%s491 + $0x10] sm:$0xff]
        %v496 = vld [vmem:[%s491 + $0x18] sm:$0xff]
        %v497 = vld [vmem:[%s491 + $0x20] sm:$0xff]
        %v498 = vld [vmem:[%s491 + $0x28] sm:$0xff]
        %v499 = vld [vmem:[%s491 + $0x30] sm:$0xff]
        %v500 = vld [vmem:[%s491 + $0x38] sm:$0xff]
        %v501 = vld [vmem:[%s491 + $0x40] sm:$0xff]
        %v502 = vld [vmem:[%s491 + $0x48] sm:$0xff]
        %v503 = vld [vmem:[%s491 + $0x50] sm:$0xff]
        %v504 = vld [vmem:[%s491 + $0x58] sm:$0xff]
        %v505 = vld [vmem:[%s491 + $0x60] sm:$0xff]
        %v506 = vld [vmem:[%s491 + $0x68] sm:$0xff]
        %v507 = vld [vmem:[%s491 + $0x70] sm:$0xff]
        %v508 = vld [vmem:[%s491 + $0x78] sm:$0xff]
        %v509 = vld [vmem:[%s491 + $0x80] sm:$0xff]
        %v510 = vld [vmem:[%s491 + $0x88] sm:$0xff]
        %v511 = vld [vmem:[%s491 + $0x90] sm:$0x3f]
        %v512 = vpack.c.bf16 %v494, %v493
        %v513 = vpack.c.bf16 %v496, %v495
        %v514 = vpack.c.bf16 %v498, %v497
        %v515 = vpack.c.bf16 %v500, %v499
        %v516 = vpack.c.bf16 %v502, %v501
        %v517 = vpack.c.bf16 %v504, %v503
        %v518 = vpack.c.bf16 %v506, %v505
        %v519 = vpack.c.bf16 %v508, %v507
        %v520 = vpack.c.bf16 %v510, %v509
        %v521 = vpack.c.bf16 %v511, %v511
        %v522 = vld [vmem:[%s1] sm:$0xf]
        %s523 = scalar_lea.vmem %s1, 4
        %v524 = vld [vmem:[%s523] sm:$0xf]
        %vm525 = vsmask.f32 7424
        %v527 = vshrl.u32 %v512, 16
        %v529 = vshll.u32 %v512, 16
        %v531 = vrot.slane %v529, 1
        %v532 = vor.u32 %v527, %v531
        %v534 = vshll.u32 %v513, 16
        %v536 = vrot.slane %v534, 1
        %v537 = vsel %vm525, %v532, %v536
        %v538 = vshrl.u32 %v513, 16
        %v540 = vor.u32 %v538, %v536
        %v542 = vshll.u32 %v514, 16
        %v544 = vrot.slane %v542, 1
        %v545 = vsel %vm525, %v540, %v544
        %v546 = vshrl.u32 %v514, 16
        %v548 = vor.u32 %v546, %v544
        %v550 = vshll.u32 %v515, 16
        %v552 = vrot.slane %v550, 1
        %v553 = vsel %vm525, %v548, %v552
        %v554 = vshrl.u32 %v515, 16
        %v556 = vor.u32 %v554, %v552
        %v558 = vshll.u32 %v516, 16
        %v560 = vrot.slane %v558, 1
        %v561 = vsel %vm525, %v556, %v560
        %v562 = vshrl.u32 %v516, 16
        %v564 = vor.u32 %v562, %v560
        %v566 = vshll.u32 %v517, 16
        %v568 = vrot.slane %v566, 1
        %v569 = vsel %vm525, %v564, %v568
        %v570 = vshrl.u32 %v517, 16
        %v572 = vor.u32 %v570, %v568
        %v574 = vshll.u32 %v518, 16
        %v576 = vrot.slane %v574, 1
        %v577 = vsel %vm525, %v572, %v576
        %v578 = vshrl.u32 %v518, 16
        %v580 = vor.u32 %v578, %v576
        %v582 = vshll.u32 %v519, 16
        %v584 = vrot.slane %v582, 1
        %v585 = vsel %vm525, %v580, %v584
        %v586 = vshrl.u32 %v519, 16
        %v588 = vor.u32 %v586, %v584
        %v590 = vshll.u32 %v520, 16
        %v592 = vrot.slane %v590, 1
        %v593 = vsel %vm525, %v588, %v592
        %v594 = vshrl.u32 %v520, 16
        %v596 = vor.u32 %v594, %v592
        %v598 = vshll.u32 %v521, 16
        %v600 = vrot.slane %v598, 1
        %v601 = vsel %vm525, %v596, %v600
        %v602 = vshrl.u32 %v521, 16
        %v604 = vor.u32 %v602, %v600
        %vm605 = vcmask 64512
        %v607 = vsel %vm605, %v537, 0
        %v610 = vsel %vm605, %v545, 0
        %v613 = vsel %vm605, %v553, 0
        %v616 = vsel %vm605, %v561, 0
        %v619 = vsel %vm605, %v569, 0
        %v622 = vsel %vm605, %v577, 0
        %v625 = vsel %vm605, %v585, 0
        %v628 = vsel %vm605, %v593, 0
        %v631 = vsel %vm605, %v601, 0
        %v634 = vsel %vm605, %v604, 0
        %vm636 = vcmask 1043456
        %v638 = vsel %vm636, %v524, 0
        %640 = vmatprep.subr.bf16.mxu0 0
        %641 = vmatpush1.bf16.msra.mxu0 %v638
        %642 = vmatprep.subr.bf16.mxu0 0
        %643 = vmatpush1.bf16.msra.mxu0 0
        %644 = vmatprep.subr.bf16.mxu0 0
        %645 = vmatpush1.bf16.msra.mxu0 0
        %646 = vmatprep.subr.bf16.mxu0 0
        %647 = vmatpush1.bf16.msra.mxu0 0
        %648 = vmatprep.subr.bf16.mxu0 0
        %649 = vmatpush1.bf16.msra.mxu0 0
        %650 = vmatprep.subr.bf16.mxu0 0
        %651 = vmatpush1.bf16.msra.mxu0 0
        %652 = vmatprep.subr.bf16.mxu0 0
        %653 = vmatpush1.bf16.msra.mxu0 0
        %654 = vmatprep.subr.bf16.mxu0 0
        %655 = vmatpush1.bf16.msra.mxu0 0
        %656 = vmatprep.subr.bf16.mxu0 0
        %657 = vmatpush1.bf16.msra.mxu0 0
        %658 = vmatprep.subr.bf16.mxu0 0
        %659 = vmatpush1.bf16.msra.mxu0 0
        %660 = vmatprep.subr.bf16.mxu0 0
        %661 = vmatpush1.bf16.msra.mxu0 0
        %662 = vmatprep.subr.bf16.mxu0 0
        %663 = vmatpush1.bf16.msra.mxu0 0
        %664 = vmatprep.subr.bf16.mxu0 0
        %665 = vmatpush1.bf16.msra.mxu0 0
        %666 = vmatprep.subr.bf16.mxu0 0
        %667 = vmatpush1.bf16.msra.mxu0 0
        %668 = vmatprep.subr.bf16.mxu0 0
        %669 = vmatpush1.bf16.msra.mxu0 0
        %670 = vmatprep.subr.bf16.mxu0 0
        %671 = vmatpush1.bf16.msra.mxu0 0
        %672 = vmatprep.mubr.bf16.mxu0 0
        %673 = vmatmul.mubr.bf16.gmra.mrb[0].mxu0 %v607
        %v674 = vpop.f32.mrb[0].mxu0
        %v675 = vadd.f32 0.0, %v674
        %v676 = vpop.f32.mrb[0].mxu0
        %v677 = vpop.f32.mrb[0].mxu0
        %v678 = vadd.f32 0.0, %v677
        %v679 = vpop.f32.mrb[0].mxu0
        %680 = vmatprep.mubr.bf16.mxu0 0
        %681 = vmatmul.mubr.bf16.gmra.mrb[0].mxu0 %v610
        %v682 = vpop.f32.mrb[0].mxu0
        %v683 = vadd.f32 0.0, %v682
        %v684 = vpop.f32.mrb[0].mxu0
        %v685 = vpop.f32.mrb[0].mxu0
        %v686 = vadd.f32 0.0, %v685
        %v687 = vpop.f32.mrb[0].mxu0
        %688 = vmatprep.mubr.bf16.mxu0 0
        %689 = vmatmul.mubr.bf16.gmra.mrb[0].mxu0 %v613
        %v690 = vpop.f32.mrb[0].mxu0
        %v691 = vadd.f32 0.0, %v690
        %v692 = vpop.f32.mrb[0].mxu0
        %v693 = vpop.f32.mrb[0].mxu0
        %v694 = vadd.f32 0.0, %v693
        %v695 = vpop.f32.mrb[0].mxu0
        %696 = vmatprep.mubr.bf16.mxu0 0
        %697 = vmatmul.mubr.bf16.gmra.mrb[0].mxu0 %v616
        %v698 = vpop.f32.mrb[0].mxu0
        %v699 = vadd.f32 0.0, %v698
        %v700 = vpop.f32.mrb[0].mxu0
        %v701 = vpop.f32.mrb[0].mxu0
        %v702 = vadd.f32 0.0, %v701
        %v703 = vpop.f32.mrb[0].mxu0
        %704 = vmatprep.mubr.bf16.mxu0 0
        %705 = vmatmul.mubr.bf16.gmra.mrb[0].mxu0 %v619
        %v706 = vpop.f32.mrb[0].mxu0
        %v707 = vadd.f32 0.0, %v706
        %v708 = vpop.f32.mrb[0].mxu0
        %v709 = vpop.f32.mrb[0].mxu0
        %v710 = vadd.f32 0.0, %v709
        %v711 = vpop.f32.mrb[0].mxu0
        %712 = vmatprep.mubr.bf16.mxu0 0
        %713 = vmatmul.mubr.bf16.gmra.mrb[0].mxu0 %v622
        %v714 = vpop.f32.mrb[0].mxu0
        %v715 = vadd.f32 0.0, %v714
        %v716 = vpop.f32.mrb[0].mxu0
        %v717 = vpop.f32.mrb[0].mxu0
        %v718 = vadd.f32 0.0, %v717
        %v719 = vpop.f32.mrb[0].mxu0
        %720 = vmatprep.mubr.bf16.mxu0 0
        %721 = vmatmul.mubr.bf16.gmra.mrb[0].mxu0 %v625
        %v722 = vpop.f32.mrb[0].mxu0
        %v723 = vadd.f32 0.0, %v722
        %v724 = vpop.f32.mrb[0].mxu0
        %v725 = vpop.f32.mrb[0].mxu0
        %v726 = vadd.f32 0.0, %v725
        %v727 = vpop.f32.mrb[0].mxu0
        %728 = vmatprep.mubr.bf16.mxu0 0
        %729 = vmatmul.mubr.bf16.gmra.mrb[0].mxu0 %v628
        %v730 = vpop.f32.mrb[0].mxu0
        %v731 = vadd.f32 0.0, %v730
        %v732 = vpop.f32.mrb[0].mxu0
        %v733 = vpop.f32.mrb[0].mxu0
        %v734 = vadd.f32 0.0, %v733
        %v735 = vpop.f32.mrb[0].mxu0
        %736 = vmatprep.mubr.bf16.mxu0 0
        %737 = vmatmul.mubr.bf16.gmra.mrb[0].mxu0 %v631
        %v738 = vpop.f32.mrb[0].mxu0
        %v739 = vadd.f32 0.0, %v738
        %v740 = vpop.f32.mrb[0].mxu0
        %v741 = vpop.f32.mrb[0].mxu0
        %v742 = vadd.f32 0.0, %v741
        %v743 = vpop.f32.mrb[0].mxu0
        %744 = vmatprep.mubr.bf16.mxu0 0
        %745 = vmatmul.mubr.bf16.gmra.mrb[0].mxu0 %v634
        %v746 = vpop.f32.mrb[0].mxu0
        %v747 = vadd.f32 0.0, %v746
        %v748 = vpop.f32.mrb[0].mxu0
        %v749 = vpop.f32.mrb[0].mxu0
        %v750 = vpop.f32.mrb[0].mxu0
        %751 = vdwg.mxu0
        %v752 = vsel %vm605, %v512, 0
        %v754 = vsel %vm605, %v513, 0
        %v756 = vsel %vm605, %v514, 0
        %v758 = vsel %vm605, %v515, 0
        %v760 = vsel %vm605, %v516, 0
        %v762 = vsel %vm605, %v517, 0
        %v764 = vsel %vm605, %v518, 0
        %v766 = vsel %vm605, %v519, 0
        %v768 = vsel %vm605, %v520, 0
        %v770 = vsel %vm605, %v521, 0
        %v773 = vsel %vm636, %v522, 0
        %775 = vmatprep.subr.bf16.mxu0 0
        %776 = vmatpush1.bf16.msra.mxu0 %v773
        %777 = vmatprep.subr.bf16.mxu0 0
        %778 = vmatpush1.bf16.msra.mxu0 0
        %779 = vmatprep.subr.bf16.mxu0 0
        %780 = vmatpush1.bf16.msra.mxu0 0
        %781 = vmatprep.subr.bf16.mxu0 0
        %782 = vmatpush1.bf16.msra.mxu0 0
        %783 = vmatprep.subr.bf16.mxu0 0
        %784 = vmatpush1.bf16.msra.mxu0 0
        %785 = vmatprep.subr.bf16.mxu0 0
        %786 = vmatpush1.bf16.msra.mxu0 0
        %787 = vmatprep.subr.bf16.mxu0 0
        %788 = vmatpush1.bf16.msra.mxu0 0
        %789 = vmatprep.subr.bf16.mxu0 0
        %790 = vmatpush1.bf16.msra.mxu0 0
        %791 = vmatprep.subr.bf16.mxu0 0
        %792 = vmatpush1.bf16.msra.mxu0 0
        %793 = vmatprep.subr.bf16.mxu0 0
        %794 = vmatpush1.bf16.msra.mxu0 0
        %795 = vmatprep.subr.bf16.mxu0 0
        %796 = vmatpush1.bf16.msra.mxu0 0
        %797 = vmatprep.subr.bf16.mxu0 0
        %798 = vmatpush1.bf16.msra.mxu0 0
        %799 = vmatprep.subr.bf16.mxu0 0
        %800 = vmatpush1.bf16.msra.mxu0 0
        %801 = vmatprep.subr.bf16.mxu0 0
        %802 = vmatpush1.bf16.msra.mxu0 0
        %803 = vmatprep.subr.bf16.mxu0 0
        %804 = vmatpush1.bf16.msra.mxu0 0
        %805 = vmatprep.subr.bf16.mxu0 0
        %806 = vmatpush1.bf16.msra.mxu0 0
        %807 = vmatprep.mubr.bf16.mxu0 0
        %808 = vmatmul.mubr.bf16.gmra.mrb[0].mxu0 %v752
        %v809 = vpop.f32.mrb[0].mxu0
        %v810 = vadd.f32 %v675, %v809
        %v811 = vpop.f32.mrb[0].mxu0
        %v812 = vpop.f32.mrb[0].mxu0
        %v813 = vadd.f32 %v678, %v812
        %v814 = vpop.f32.mrb[0].mxu0
        %815 = vmatprep.mubr.bf16.mxu0 0
        %816 = vmatmul.mubr.bf16.gmra.mrb[0].mxu0 %v754
        %v817 = vpop.f32.mrb[0].mxu0
        %v818 = vadd.f32 %v683, %v817
        %v819 = vpop.f32.mrb[0].mxu0
        %v820 = vpop.f32.mrb[0].mxu0
        %v821 = vadd.f32 %v686, %v820
        %v822 = vpop.f32.mrb[0].mxu0
        %823 = vmatprep.mubr.bf16.mxu0 0
        %824 = vmatmul.mubr.bf16.gmra.mrb[0].mxu0 %v756
        %v825 = vpop.f32.mrb[0].mxu0
        %v826 = vadd.f32 %v691, %v825
        %v827 = vpop.f32.mrb[0].mxu0
        %v828 = vpop.f32.mrb[0].mxu0
        %v829 = vadd.f32 %v694, %v828
        %v830 = vpop.f32.mrb[0].mxu0
        %831 = vmatprep.mubr.bf16.mxu0 0
        %832 = vmatmul.mubr.bf16.gmra.mrb[0].mxu0 %v758
        %v833 = vpop.f32.mrb[0].mxu0
        %v834 = vadd.f32 %v699, %v833
        %v835 = vpop.f32.mrb[0].mxu0
        %v836 = vpop.f32.mrb[0].mxu0
        %v837 = vadd.f32 %v702, %v836
        %v838 = vpop.f32.mrb[0].mxu0
        %839 = vmatprep.mubr.bf16.mxu0 0
        %840 = vmatmul.mubr.bf16.gmra.mrb[0].mxu0 %v760
        %v841 = vpop.f32.mrb[0].mxu0
        %v842 = vadd.f32 %v707, %v841
        %v843 = vpop.f32.mrb[0].mxu0
        %v844 = vpop.f32.mrb[0].mxu0
        %v845 = vadd.f32 %v710, %v844
        %v846 = vpop.f32.mrb[0].mxu0
        %847 = vmatprep.mubr.bf16.mxu0 0
        %848 = vmatmul.mubr.bf16.gmra.mrb[0].mxu0 %v762
        %v849 = vpop.f32.mrb[0].mxu0
        %v850 = vadd.f32 %v715, %v849
        %v851 = vpop.f32.mrb[0].mxu0
        %v852 = vpop.f32.mrb[0].mxu0
        %v853 = vadd.f32 %v718, %v852
        %v854 = vpop.f32.mrb[0].mxu0
        %855 = vmatprep.mubr.bf16.mxu0 0
        %856 = vmatmul.mubr.bf16.gmra.mrb[0].mxu0 %v764
        %v857 = vpop.f32.mrb[0].mxu0
        %v858 = vadd.f32 %v723, %v857
        %v859 = vpop.f32.mrb[0].mxu0
        %v860 = vpop.f32.mrb[0].mxu0
        %v861 = vadd.f32 %v726, %v860
        %v862 = vpop.f32.mrb[0].mxu0
        %863 = vmatprep.mubr.bf16.mxu0 0
        %864 = vmatmul.mubr.bf16.gmra.mrb[0].mxu0 %v766
        %v865 = vpop.f32.mrb[0].mxu0
        %v866 = vadd.f32 %v731, %v865
        %v867 = vpop.f32.mrb[0].mxu0
        %v868 = vpop.f32.mrb[0].mxu0
        %v869 = vadd.f32 %v734, %v868
        %v870 = vpop.f32.mrb[0].mxu0
        %871 = vmatprep.mubr.bf16.mxu0 0
        %872 = vmatmul.mubr.bf16.gmra.mrb[0].mxu0 %v768
        %v873 = vpop.f32.mrb[0].mxu0
        %v874 = vadd.f32 %v739, %v873
        %v875 = vpop.f32.mrb[0].mxu0
        %v876 = vpop.f32.mrb[0].mxu0
        %v877 = vadd.f32 %v742, %v876
        %v878 = vpop.f32.mrb[0].mxu0
        %879 = vmatprep.mubr.bf16.mxu0 0
        %880 = vmatmul.mubr.bf16.gmra.mrb[0].mxu0 %v770
        %v881 = vpop.f32.mrb[0].mxu0
        %v882 = vadd.f32 %v747, %v881
        %v883 = vpop.f32.mrb[0].mxu0
        %v884 = vpop.f32.mrb[0].mxu0
        %v885 = vpop.f32.mrb[0].mxu0
        %886 = vdwg.mxu0
        %s887 = scalar_lea.vmem %s1, 8
        %v888 = vld [vmem:[%s887] sm:$0xf]
        %vm899 = vcmask 1046528
        %v900 = vrot.slane %v512, 1
        %v901 = vrot.slane %v513, 1
        %v902 = vsel %vm899, %v900, %v901
        %v903 = vrot.slane %v514, 1
        %v904 = vsel %vm899, %v901, %v903
        %v905 = vrot.slane %v515, 1
        %v906 = vsel %vm899, %v903, %v905
        %v907 = vrot.slane %v516, 1
        %v908 = vsel %vm899, %v905, %v907
        %v909 = vrot.slane %v517, 1
        %v910 = vsel %vm899, %v907, %v909
        %v911 = vrot.slane %v518, 1
        %v912 = vsel %vm899, %v909, %v911
        %v913 = vrot.slane %v519, 1
        %v914 = vsel %vm899, %v911, %v913
        %v915 = vrot.slane %v520, 1
        %v916 = vsel %vm899, %v913, %v915
        %v917 = vrot.slane %v521, 1
        %v918 = vsel %vm899, %v915, %v917
        %v920 = vsel %vm605, %v902, 0
        %v923 = vsel %vm605, %v904, 0
        %v926 = vsel %vm605, %v906, 0
        %v929 = vsel %vm605, %v908, 0
        %v932 = vsel %vm605, %v910, 0
        %v935 = vsel %vm605, %v912, 0
        %v938 = vsel %vm605, %v914, 0
        %v941 = vsel %vm605, %v916, 0
        %v944 = vsel %vm605, %v918, 0
        %v947 = vsel %vm605, %v917, 0
        %v950 = vsel %vm636, %v888, 0
        %952 = vmatprep.subr.bf16.mxu0 0
        %953 = vmatpush1.bf16.msra.mxu0 %v950
        %954 = vmatprep.subr.bf16.mxu0 0
        %955 = vmatpush1.bf16.msra.mxu0 0
        %956 = vmatprep.subr.bf16.mxu0 0
        %957 = vmatpush1.bf16.msra.mxu0 0
        %958 = vmatprep.subr.bf16.mxu0 0
        %959 = vmatpush1.bf16.msra.mxu0 0
        %960 = vmatprep.subr.bf16.mxu0 0
        %961 = vmatpush1.bf16.msra.mxu0 0
        %962 = vmatprep.subr.bf16.mxu0 0
        %963 = vmatpush1.bf16.msra.mxu0 0
        %964 = vmatprep.subr.bf16.mxu0 0
        %965 = vmatpush1.bf16.msra.mxu0 0
        %966 = vmatprep.subr.bf16.mxu0 0
        %967 = vmatpush1.bf16.msra.mxu0 0
        %968 = vmatprep.subr.bf16.mxu0 0
        %969 = vmatpush1.bf16.msra.mxu0 0
        %970 = vmatprep.subr.bf16.mxu0 0
        %971 = vmatpush1.bf16.msra.mxu0 0
        %972 = vmatprep.subr.bf16.mxu0 0
        %973 = vmatpush1.bf16.msra.mxu0 0
        %974 = vmatprep.subr.bf16.mxu0 0
        %975 = vmatpush1.bf16.msra.mxu0 0
        %976 = vmatprep.subr.bf16.mxu0 0
        %977 = vmatpush1.bf16.msra.mxu0 0
        %978 = vmatprep.subr.bf16.mxu0 0
        %979 = vmatpush1.bf16.msra.mxu0 0
        %980 = vmatprep.subr.bf16.mxu0 0
        %981 = vmatpush1.bf16.msra.mxu0 0
        %982 = vmatprep.subr.bf16.mxu0 0
        %983 = vmatpush1.bf16.msra.mxu0 0
        %984 = vmatprep.mubr.bf16.mxu0 0
        %985 = vmatmul.mubr.bf16.gmra.mrb[0].mxu0 %v920
        %v986 = vpop.f32.mrb[0].mxu0
        %v987 = vadd.f32 0.0, %v986
        %v988 = vpop.f32.mrb[0].mxu0
        %v989 = vpop.f32.mrb[0].mxu0
        %v990 = vadd.f32 0.0, %v989
        %v991 = vpop.f32.mrb[0].mxu0
        %992 = vmatprep.mubr.bf16.mxu0 0
        %993 = vmatmul.mubr.bf16.gmra.mrb[0].mxu0 %v923
        %v994 = vpop.f32.mrb[0].mxu0
        %v995 = vadd.f32 0.0, %v994
        %v996 = vpop.f32.mrb[0].mxu0
        %v997 = vpop.f32.mrb[0].mxu0
        %v998 = vadd.f32 0.0, %v997
        %v999 = vpop.f32.mrb[0].mxu0
        %1000 = vmatprep.mubr.bf16.mxu0 0
        %1001 = vmatmul.mubr.bf16.gmra.mrb[0].mxu0 %v926
        %v1002 = vpop.f32.mrb[0].mxu0
        %v1003 = vadd.f32 0.0, %v1002
        %v1004 = vpop.f32.mrb[0].mxu0
        %v1005 = vpop.f32.mrb[0].mxu0
        %v1006 = vadd.f32 0.0, %v1005
        %v1007 = vpop.f32.mrb[0].mxu0
        %1008 = vmatprep.mubr.bf16.mxu0 0
        %1009 = vmatmul.mubr.bf16.gmra.mrb[0].mxu0 %v929
        %v1010 = vpop.f32.mrb[0].mxu0
        %v1011 = vadd.f32 0.0, %v1010
        %v1012 = vpop.f32.mrb[0].mxu0
        %v1013 = vpop.f32.mrb[0].mxu0
        %v1014 = vadd.f32 0.0, %v1013
        %v1015 = vpop.f32.mrb[0].mxu0
        %1016 = vmatprep.mubr.bf16.mxu0 0
        %1017 = vmatmul.mubr.bf16.gmra.mrb[0].mxu0 %v932
        %v1018 = vpop.f32.mrb[0].mxu0
        %v1019 = vadd.f32 0.0, %v1018
        %v1020 = vpop.f32.mrb[0].mxu0
        %v1021 = vpop.f32.mrb[0].mxu0
        %v1022 = vadd.f32 0.0, %v1021
        %v1023 = vpop.f32.mrb[0].mxu0
        %1024 = vmatprep.mubr.bf16.mxu0 0
        %1025 = vmatmul.mubr.bf16.gmra.mrb[0].mxu0 %v935
        %v1026 = vpop.f32.mrb[0].mxu0
        %v1027 = vadd.f32 0.0, %v1026
        %v1028 = vpop.f32.mrb[0].mxu0
        %v1029 = vpop.f32.mrb[0].mxu0
        %v1030 = vadd.f32 0.0, %v1029
        %v1031 = vpop.f32.mrb[0].mxu0
        %1032 = vmatprep.mubr.bf16.mxu0 0
        %1033 = vmatmul.mubr.bf16.gmra.mrb[0].mxu0 %v938
        %v1034 = vpop.f32.mrb[0].mxu0
        %v1035 = vadd.f32 0.0, %v1034
        %v1036 = vpop.f32.mrb[0].mxu0
        %v1037 = vpop.f32.mrb[0].mxu0
        %v1038 = vadd.f32 0.0, %v1037
        %v1039 = vpop.f32.mrb[0].mxu0
        %1040 = vmatprep.mubr.bf16.mxu0 0
        %1041 = vmatmul.mubr.bf16.gmra.mrb[0].mxu0 %v941
        %v1042 = vpop.f32.mrb[0].mxu0
        %v1043 = vadd.f32 0.0, %v1042
        %v1044 = vpop.f32.mrb[0].mxu0
        %v1045 = vpop.f32.mrb[0].mxu0
        %v1046 = vadd.f32 0.0, %v1045
        %v1047 = vpop.f32.mrb[0].mxu0
        %1048 = vmatprep.mubr.bf16.mxu0 0
        %1049 = vmatmul.mubr.bf16.gmra.mrb[0].mxu0 %v944
        %v1050 = vpop.f32.mrb[0].mxu0
        %v1051 = vadd.f32 0.0, %v1050
        %v1052 = vpop.f32.mrb[0].mxu0
        %v1053 = vpop.f32.mrb[0].mxu0
        %v1054 = vadd.f32 0.0, %v1053
        %v1055 = vpop.f32.mrb[0].mxu0
        %1056 = vmatprep.mubr.bf16.mxu0 0
        %1057 = vmatmul.mubr.bf16.gmra.mrb[0].mxu0 %v947
        %v1058 = vpop.f32.mrb[0].mxu0
        %v1059 = vadd.f32 0.0, %v1058
        %v1060 = vpop.f32.mrb[0].mxu0
        %v1061 = vpop.f32.mrb[0].mxu0
        %v1062 = vpop.f32.mrb[0].mxu0
        %1063 = vdwg.mxu0
        %v1064 = vadd.f32 %v810, %v987
        %v1065 = vadd.f32 %v813, %v990
        %v1066 = vadd.f32 %v818, %v995
        %v1067 = vadd.f32 %v821, %v998
        %v1068 = vadd.f32 %v826, %v1003
        %v1069 = vadd.f32 %v829, %v1006
        %v1070 = vadd.f32 %v834, %v1011
        %v1071 = vadd.f32 %v837, %v1014
        %v1072 = vadd.f32 %v842, %v1019
        %v1073 = vadd.f32 %v845, %v1022
        %v1074 = vadd.f32 %v850, %v1027
        %v1075 = vadd.f32 %v853, %v1030
        %v1076 = vadd.f32 %v858, %v1035
        %v1077 = vadd.f32 %v861, %v1038
        %v1078 = vadd.f32 %v866, %v1043
        %v1079 = vadd.f32 %v869, %v1046
        %v1080 = vadd.f32 %v874, %v1051
        %v1081 = vadd.f32 %v877, %v1054
        %v1082 = vadd.f32 %v882, %v1059
        %s1083 = scalar_lea.vmem %s1, 12
        %v1084 = vld [vmem:[%s1083] sm:$0xf]
        %vm1085 = vsmask.f32 6400
        %v1086 = vrot.slane %v527, 1
        %v1087 = vrot.slane %v529, 2
        %v1088 = vor.u32 %v1086, %v1087
        %v1089 = vrot.slane %v538, 1
        %v1090 = vrot.slane %v534, 2
        %v1091 = vor.u32 %v1089, %v1090
        %v1092 = vsel %vm1085, %v1088, %v1091
        %v1093 = vrot.slane %v546, 1
        %v1094 = vrot.slane %v542, 2
        %v1095 = vor.u32 %v1093, %v1094
        %v1096 = vsel %vm1085, %v1091, %v1095
        %v1097 = vrot.slane %v554, 1
        %v1098 = vrot.slane %v550, 2
        %v1099 = vor.u32 %v1097, %v1098
        %v1100 = vsel %vm1085, %v1095, %v1099
        %v1101 = vrot.slane %v562, 1
        %v1102 = vrot.slane %v558, 2
        %v1103 = vor.u32 %v1101, %v1102
        %v1104 = vsel %vm1085, %v1099, %v1103
        %v1105 = vrot.slane %v570, 1
        %v1106 = vrot.slane %v566, 2
        %v1107 = vor.u32 %v1105, %v1106
        %v1108 = vsel %vm1085, %v1103, %v1107
        %v1109 = vrot.slane %v578, 1
        %v1110 = vrot.slane %v574, 2
        %v1111 = vor.u32 %v1109, %v1110
        %v1112 = vsel %vm1085, %v1107, %v1111
        %v1113 = vrot.slane %v586, 1
        %v1114 = vrot.slane %v582, 2
        %v1115 = vor.u32 %v1113, %v1114
        %v1116 = vsel %vm1085, %v1111, %v1115
        %v1117 = vrot.slane %v594, 1
        %v1118 = vrot.slane %v590, 2
        %v1119 = vor.u32 %v1117, %v1118
        %v1120 = vsel %vm1085, %v1115, %v1119
        %v1121 = vrot.slane %v602, 1
        %v1122 = vrot.slane %v598, 2
        %v1123 = vor.u32 %v1121, %v1122
        %v1124 = vsel %vm1085, %v1119, %v1123
        %v1126 = vsel %vm605, %v1092, 0
        %v1129 = vsel %vm605, %v1096, 0
        %v1132 = vsel %vm605, %v1100, 0
        %v1135 = vsel %vm605, %v1104, 0
        %v1138 = vsel %vm605, %v1108, 0
        %v1141 = vsel %vm605, %v1112, 0
        %v1144 = vsel %vm605, %v1116, 0
        %v1147 = vsel %vm605, %v1120, 0
        %v1150 = vsel %vm605, %v1124, 0
        %v1153 = vsel %vm605, %v1123, 0
        %v1156 = vsel %vm636, %v1084, 0
        %1158 = vmatprep.subr.bf16.mxu0 0
        %1159 = vmatpush1.bf16.msra.mxu0 %v1156
        %1160 = vmatprep.subr.bf16.mxu0 0
        %1161 = vmatpush1.bf16.msra.mxu0 0
        %1162 = vmatprep.subr.bf16.mxu0 0
        %1163 = vmatpush1.bf16.msra.mxu0 0
        %1164 = vmatprep.subr.bf16.mxu0 0
        %1165 = vmatpush1.bf16.msra.mxu0 0
        %1166 = vmatprep.subr.bf16.mxu0 0
        %1167 = vmatpush1.bf16.msra.mxu0 0
        %1168 = vmatprep.subr.bf16.mxu0 0
        %1169 = vmatpush1.bf16.msra.mxu0 0
        %1170 = vmatprep.subr.bf16.mxu0 0
        %1171 = vmatpush1.bf16.msra.mxu0 0
        %1172 = vmatprep.subr.bf16.mxu0 0
        %1173 = vmatpush1.bf16.msra.mxu0 0
        %1174 = vmatprep.subr.bf16.mxu0 0
        %1175 = vmatpush1.bf16.msra.mxu0 0
        %1176 = vmatprep.subr.bf16.mxu0 0
        %1177 = vmatpush1.bf16.msra.mxu0 0
        %1178 = vmatprep.subr.bf16.mxu0 0
        %1179 = vmatpush1.bf16.msra.mxu0 0
        %1180 = vmatprep.subr.bf16.mxu0 0
        %1181 = vmatpush1.bf16.msra.mxu0 0
        %1182 = vmatprep.subr.bf16.mxu0 0
        %1183 = vmatpush1.bf16.msra.mxu0 0
        %1184 = vmatprep.subr.bf16.mxu0 0
        %1185 = vmatpush1.bf16.msra.mxu0 0
        %1186 = vmatprep.subr.bf16.mxu0 0
        %1187 = vmatpush1.bf16.msra.mxu0 0
        %1188 = vmatprep.subr.bf16.mxu0 0
        %1189 = vmatpush1.bf16.msra.mxu0 0
        %1190 = vmatprep.mubr.bf16.mxu0 0
        %1191 = vmatmul.mubr.bf16.gmra.mrb[0].mxu0 %v1126
        %v1192 = vpop.f32.mrb[0].mxu0
        %v1193 = vadd.f32 0.0, %v1192
        %v1194 = vpop.f32.mrb[0].mxu0
        %v1195 = vpop.f32.mrb[0].mxu0
        %v1196 = vadd.f32 0.0, %v1195
        %v1197 = vpop.f32.mrb[0].mxu0
        %1198 = vmatprep.mubr.bf16.mxu0 0
        %1199 = vmatmul.mubr.bf16.gmra.mrb[0].mxu0 %v1129
        %v1200 = vpop.f32.mrb[0].mxu0
        %v1201 = vadd.f32 0.0, %v1200
        %v1202 = vpop.f32.mrb[0].mxu0
        %v1203 = vpop.f32.mrb[0].mxu0
        %v1204 = vadd.f32 0.0, %v1203
        %v1205 = vpop.f32.mrb[0].mxu0
        %1206 = vmatprep.mubr.bf16.mxu0 0
        %1207 = vmatmul.mubr.bf16.gmra.mrb[0].mxu0 %v1132
        %v1208 = vpop.f32.mrb[0].mxu0
        %v1209 = vadd.f32 0.0, %v1208
        %v1210 = vpop.f32.mrb[0].mxu0
        %v1211 = vpop.f32.mrb[0].mxu0
        %v1212 = vadd.f32 0.0, %v1211
        %v1213 = vpop.f32.mrb[0].mxu0
        %1214 = vmatprep.mubr.bf16.mxu0 0
        %1215 = vmatmul.mubr.bf16.gmra.mrb[0].mxu0 %v1135
        %v1216 = vpop.f32.mrb[0].mxu0
        %v1217 = vadd.f32 0.0, %v1216
        %v1218 = vpop.f32.mrb[0].mxu0
        %v1219 = vpop.f32.mrb[0].mxu0
        %v1220 = vadd.f32 0.0, %v1219
        %v1221 = vpop.f32.mrb[0].mxu0
        %1222 = vmatprep.mubr.bf16.mxu0 0
        %1223 = vmatmul.mubr.bf16.gmra.mrb[0].mxu0 %v1138
        %v1224 = vpop.f32.mrb[0].mxu0
        %v1225 = vadd.f32 0.0, %v1224
        %v1226 = vpop.f32.mrb[0].mxu0
        %v1227 = vpop.f32.mrb[0].mxu0
        %v1228 = vadd.f32 0.0, %v1227
        %v1229 = vpop.f32.mrb[0].mxu0
        %1230 = vmatprep.mubr.bf16.mxu0 0
        %1231 = vmatmul.mubr.bf16.gmra.mrb[0].mxu0 %v1141
        %v1232 = vpop.f32.mrb[0].mxu0
        %v1233 = vadd.f32 0.0, %v1232
        %v1234 = vpop.f32.mrb[0].mxu0
        %v1235 = vpop.f32.mrb[0].mxu0
        %v1236 = vadd.f32 0.0, %v1235
        %v1237 = vpop.f32.mrb[0].mxu0
        %1238 = vmatprep.mubr.bf16.mxu0 0
        %1239 = vmatmul.mubr.bf16.gmra.mrb[0].mxu0 %v1144
        %v1240 = vpop.f32.mrb[0].mxu0
        %v1241 = vadd.f32 0.0, %v1240
        %v1242 = vpop.f32.mrb[0].mxu0
        %v1243 = vpop.f32.mrb[0].mxu0
        %v1244 = vadd.f32 0.0, %v1243
        %v1245 = vpop.f32.mrb[0].mxu0
        %1246 = vmatprep.mubr.bf16.mxu0 0
        %1247 = vmatmul.mubr.bf16.gmra.mrb[0].mxu0 %v1147
        %v1248 = vpop.f32.mrb[0].mxu0
        %v1249 = vadd.f32 0.0, %v1248
        %v1250 = vpop.f32.mrb[0].mxu0
        %v1251 = vpop.f32.mrb[0].mxu0
        %v1252 = vadd.f32 0.0, %v1251
        %v1253 = vpop.f32.mrb[0].mxu0
        %1254 = vmatprep.mubr.bf16.mxu0 0
        %1255 = vmatmul.mubr.bf16.gmra.mrb[0].mxu0 %v1150
        %v1256 = vpop.f32.mrb[0].mxu0
        %v1257 = vadd.f32 0.0, %v1256
        %v1258 = vpop.f32.mrb[0].mxu0
        %v1259 = vpop.f32.mrb[0].mxu0
        %v1260 = vadd.f32 0.0, %v1259
        %v1261 = vpop.f32.mrb[0].mxu0
        %1262 = vmatprep.mubr.bf16.mxu0 0
        %1263 = vmatmul.mubr.bf16.gmra.mrb[0].mxu0 %v1153
        %v1264 = vpop.f32.mrb[0].mxu0
        %v1265 = vadd.f32 0.0, %v1264
        %v1266 = vpop.f32.mrb[0].mxu0
        %v1267 = vpop.f32.mrb[0].mxu0
        %v1268 = vpop.f32.mrb[0].mxu0
        %1269 = vdwg.mxu0
        %v1270 = vadd.f32 %v1064, %v1193
        %v1271 = vadd.f32 %v1065, %v1196
        %v1272 = vadd.f32 %v1066, %v1201
        %v1273 = vadd.f32 %v1067, %v1204
        %v1274 = vadd.f32 %v1068, %v1209
        %v1275 = vadd.f32 %v1069, %v1212
        %v1276 = vadd.f32 %v1070, %v1217
        %v1277 = vadd.f32 %v1071, %v1220
        %v1278 = vadd.f32 %v1072, %v1225
        %v1279 = vadd.f32 %v1073, %v1228
        %v1280 = vadd.f32 %v1074, %v1233
        %v1281 = vadd.f32 %v1075, %v1236
        %v1282 = vadd.f32 %v1076, %v1241
        %v1283 = vadd.f32 %v1077, %v1244
        %v1284 = vadd.f32 %v1078, %v1249
        %v1285 = vadd.f32 %v1079, %v1252
        %v1286 = vadd.f32 %v1080, %v1257
        %v1287 = vadd.f32 %v1081, %v1260
        %v1288 = vadd.f32 %v1082, %v1265
        %s1289 = scalar_lea.vmem %s1, 16
        %v1290 = vld [vmem:[%s1289] sm:$0xf]
        %vm1291 = vcmask 1045504
        %v1292 = vrot.slane %v512, 2
        %v1293 = vrot.slane %v513, 2
        %v1294 = vsel %vm1291, %v1292, %v1293
        %v1295 = vrot.slane %v514, 2
        %v1296 = vsel %vm1291, %v1293, %v1295
        %v1297 = vrot.slane %v515, 2
        %v1298 = vsel %vm1291, %v1295, %v1297
        %v1299 = vrot.slane %v516, 2
        %v1300 = vsel %vm1291, %v1297, %v1299
        %v1301 = vrot.slane %v517, 2
        %v1302 = vsel %vm1291, %v1299, %v1301
        %v1303 = vrot.slane %v518, 2
        %v1304 = vsel %vm1291, %v1301, %v1303
        %v1305 = vrot.slane %v519, 2
        %v1306 = vsel %vm1291, %v1303, %v1305
        %v1307 = vrot.slane %v520, 2
        %v1308 = vsel %vm1291, %v1305, %v1307
        %v1309 = vrot.slane %v521, 2
        %v1310 = vsel %vm1291, %v1307, %v1309
        %v1312 = vsel %vm605, %v1294, 0
        %v1315 = vsel %vm605, %v1296, 0
        %v1318 = vsel %vm605, %v1298, 0
        %v1321 = vsel %vm605, %v1300, 0
        %v1324 = vsel %vm605, %v1302, 0
        %v1327 = vsel %vm605, %v1304, 0
        %v1330 = vsel %vm605, %v1306, 0
        %v1333 = vsel %vm605, %v1308, 0
        %v1336 = vsel %vm605, %v1310, 0
        %v1339 = vsel %vm605, %v1309, 0
        %v1342 = vsel %vm636, %v1290, 0
        %1344 = vmatprep.subr.bf16.mxu0 0
        %1345 = vmatpush1.bf16.msra.mxu0 %v1342
        %1346 = vmatprep.subr.bf16.mxu0 0
        %1347 = vmatpush1.bf16.msra.mxu0 0
        %1348 = vmatprep.subr.bf16.mxu0 0
        %1349 = vmatpush1.bf16.msra.mxu0 0
        %1350 = vmatprep.subr.bf16.mxu0 0
        %1351 = vmatpush1.bf16.msra.mxu0 0
        %1352 = vmatprep.subr.bf16.mxu0 0
        %1353 = vmatpush1.bf16.msra.mxu0 0
        %1354 = vmatprep.subr.bf16.mxu0 0
        %1355 = vmatpush1.bf16.msra.mxu0 0
        %1356 = vmatprep.subr.bf16.mxu0 0
        %1357 = vmatpush1.bf16.msra.mxu0 0
        %1358 = vmatprep.subr.bf16.mxu0 0
        %1359 = vmatpush1.bf16.msra.mxu0 0
        %1360 = vmatprep.subr.bf16.mxu0 0
        %1361 = vmatpush1.bf16.msra.mxu0 0
        %1362 = vmatprep.subr.bf16.mxu0 0
        %1363 = vmatpush1.bf16.msra.mxu0 0
        %1364 = vmatprep.subr.bf16.mxu0 0
        %1365 = vmatpush1.bf16.msra.mxu0 0
        %1366 = vmatprep.subr.bf16.mxu0 0
        %1367 = vmatpush1.bf16.msra.mxu0 0
        %1368 = vmatprep.subr.bf16.mxu0 0
        %1369 = vmatpush1.bf16.msra.mxu0 0
        %1370 = vmatprep.subr.bf16.mxu0 0
        %1371 = vmatpush1.bf16.msra.mxu0 0
        %1372 = vmatprep.subr.bf16.mxu0 0
        %1373 = vmatpush1.bf16.msra.mxu0 0
        %1374 = vmatprep.subr.bf16.mxu0 0
        %1375 = vmatpush1.bf16.msra.mxu0 0
        %1376 = vmatprep.mubr.bf16.mxu0 0
        %1377 = vmatmul.mubr.bf16.gmra.mrb[0].mxu0 %v1312
        %v1378 = vpop.f32.mrb[0].mxu0
        %v1379 = vadd.f32 0.0, %v1378
        %v1380 = vpop.f32.mrb[0].mxu0
        %v1381 = vpop.f32.mrb[0].mxu0
        %v1382 = vadd.f32 0.0, %v1381
        %v1383 = vpop.f32.mrb[0].mxu0
        %1384 = vmatprep.mubr.bf16.mxu0 0
        %1385 = vmatmul.mubr.bf16.gmra.mrb[0].mxu0 %v1315
        %v1386 = vpop.f32.mrb[0].mxu0
        %v1387 = vadd.f32 0.0, %v1386
        %v1388 = vpop.f32.mrb[0].mxu0
        %v1389 = vpop.f32.mrb[0].mxu0
        %v1390 = vadd.f32 0.0, %v1389
        %v1391 = vpop.f32.mrb[0].mxu0
        %1392 = vmatprep.mubr.bf16.mxu0 0
        %1393 = vmatmul.mubr.bf16.gmra.mrb[0].mxu0 %v1318
        %v1394 = vpop.f32.mrb[0].mxu0
        %v1395 = vadd.f32 0.0, %v1394
        %v1396 = vpop.f32.mrb[0].mxu0
        %v1397 = vpop.f32.mrb[0].mxu0
        %v1398 = vadd.f32 0.0, %v1397
        %v1399 = vpop.f32.mrb[0].mxu0
        %1400 = vmatprep.mubr.bf16.mxu0 0
        %1401 = vmatmul.mubr.bf16.gmra.mrb[0].mxu0 %v1321
        %v1402 = vpop.f32.mrb[0].mxu0
        %v1403 = vadd.f32 0.0, %v1402
        %v1404 = vpop.f32.mrb[0].mxu0
        %v1405 = vpop.f32.mrb[0].mxu0
        %v1406 = vadd.f32 0.0, %v1405
        %v1407 = vpop.f32.mrb[0].mxu0
        %1408 = vmatprep.mubr.bf16.mxu0 0
        %1409 = vmatmul.mubr.bf16.gmra.mrb[0].mxu0 %v1324
        %v1410 = vpop.f32.mrb[0].mxu0
        %v1411 = vadd.f32 0.0, %v1410
        %v1412 = vpop.f32.mrb[0].mxu0
        %v1413 = vpop.f32.mrb[0].mxu0
        %v1414 = vadd.f32 0.0, %v1413
        %v1415 = vpop.f32.mrb[0].mxu0
        %1416 = vmatprep.mubr.bf16.mxu0 0
        %1417 = vmatmul.mubr.bf16.gmra.mrb[0].mxu0 %v1327
        %v1418 = vpop.f32.mrb[0].mxu0
        %v1419 = vadd.f32 0.0, %v1418
        %v1420 = vpop.f32.mrb[0].mxu0
        %v1421 = vpop.f32.mrb[0].mxu0
        %v1422 = vadd.f32 0.0, %v1421
        %v1423 = vpop.f32.mrb[0].mxu0
        %1424 = vmatprep.mubr.bf16.mxu0 0
        %1425 = vmatmul.mubr.bf16.gmra.mrb[0].mxu0 %v1330
        %v1426 = vpop.f32.mrb[0].mxu0
        %v1427 = vadd.f32 0.0, %v1426
        %v1428 = vpop.f32.mrb[0].mxu0
        %v1429 = vpop.f32.mrb[0].mxu0
        %v1430 = vadd.f32 0.0, %v1429
        %v1431 = vpop.f32.mrb[0].mxu0
        %1432 = vmatprep.mubr.bf16.mxu0 0
        %1433 = vmatmul.mubr.bf16.gmra.mrb[0].mxu0 %v1333
        %v1434 = vpop.f32.mrb[0].mxu0
        %v1435 = vadd.f32 0.0, %v1434
        %v1436 = vpop.f32.mrb[0].mxu0
        %v1437 = vpop.f32.mrb[0].mxu0
        %v1438 = vadd.f32 0.0, %v1437
        %v1439 = vpop.f32.mrb[0].mxu0
        %1440 = vmatprep.mubr.bf16.mxu0 0
        %1441 = vmatmul.mubr.bf16.gmra.mrb[0].mxu0 %v1336
        %v1442 = vpop.f32.mrb[0].mxu0
        %v1443 = vadd.f32 0.0, %v1442
        %v1444 = vpop.f32.mrb[0].mxu0
        %v1445 = vpop.f32.mrb[0].mxu0
        %v1446 = vadd.f32 0.0, %v1445
        %v1447 = vpop.f32.mrb[0].mxu0
        %1448 = vmatprep.mubr.bf16.mxu0 0
        %1449 = vmatmul.mubr.bf16.gmra.mrb[0].mxu0 %v1339
        %v1450 = vpop.f32.mrb[0].mxu0
        %v1451 = vadd.f32 0.0, %v1450
        %v1452 = vpop.f32.mrb[0].mxu0
        %v1453 = vpop.f32.mrb[0].mxu0
        %v1454 = vpop.f32.mrb[0].mxu0
        %1455 = vdwg.mxu0
        %v1456 = vadd.f32 %v1270, %v1379
        %v1457 = vadd.f32 %v1271, %v1382
        %v1458 = vadd.f32 %v1272, %v1387
        %v1459 = vadd.f32 %v1273, %v1390
        %v1460 = vadd.f32 %v1274, %v1395
        %v1461 = vadd.f32 %v1275, %v1398
        %v1462 = vadd.f32 %v1276, %v1403
        %v1463 = vadd.f32 %v1277, %v1406
        %v1464 = vadd.f32 %v1278, %v1411
        %v1465 = vadd.f32 %v1279, %v1414
        %v1466 = vadd.f32 %v1280, %v1419
        %v1467 = vadd.f32 %v1281, %v1422
        %v1468 = vadd.f32 %v1282, %v1427
        %v1469 = vadd.f32 %v1283, %v1430
        %v1470 = vadd.f32 %v1284, %v1435
        %v1471 = vadd.f32 %v1285, %v1438
        %v1472 = vadd.f32 %v1286, %v1443
        %v1473 = vadd.f32 %v1287, %v1446
        %v1474 = vadd.f32 %v1288, %v1451
        %v1475 = vld [vmem:[%s2] sm:$0x1]
        %v1477 = vlaneseq
        %v1478 = vshrl.u32 %v1477, 7
        %v1479 = vsub.s32 0, %v1478
        %v1480 = vrot.slane %v1475, %v1479
        %v1482 = vmul.f32 %v1456, %v1480
        %v1483 = vmul.f32 %v1457, %v1480
        %v1484 = vmul.f32 %v1458, %v1480
        %v1485 = vmul.f32 %v1459, %v1480
        %v1486 = vmul.f32 %v1460, %v1480
        %v1487 = vmul.f32 %v1461, %v1480
        %v1488 = vmul.f32 %v1462, %v1480
        %v1489 = vmul.f32 %v1463, %v1480
        %v1490 = vmul.f32 %v1464, %v1480
        %v1491 = vmul.f32 %v1465, %v1480
        %v1492 = vmul.f32 %v1466, %v1480
        %v1493 = vmul.f32 %v1467, %v1480
        %v1494 = vmul.f32 %v1468, %v1480
        %v1495 = vmul.f32 %v1469, %v1480
        %v1496 = vmul.f32 %v1470, %v1480
        %v1497 = vmul.f32 %v1471, %v1480
        %v1498 = vmul.f32 %v1472, %v1480
        %v1499 = vmul.f32 %v1473, %v1480
        %v1500 = vmul.f32 %v1474, %v1480
        %v1501 = vld [vmem:[%s3] sm:$0x1]
        %v1503 = vlaneseq
        %v1504 = vshrl.u32 %v1503, 7
        %v1505 = vsub.s32 0, %v1504
        %v1506 = vrot.slane %v1501, %v1505
        %v1508 = vadd.f32 %v1482, %v1506
        %v1509 = vadd.f32 %v1483, %v1506
        %v1510 = vadd.f32 %v1484, %v1506
        %v1511 = vadd.f32 %v1485, %v1506
        %v1512 = vadd.f32 %v1486, %v1506
        %v1513 = vadd.f32 %v1487, %v1506
        %v1514 = vadd.f32 %v1488, %v1506
        %v1515 = vadd.f32 %v1489, %v1506
        %v1516 = vadd.f32 %v1490, %v1506
        %v1517 = vadd.f32 %v1491, %v1506
        %v1518 = vadd.f32 %v1492, %v1506
        %v1519 = vadd.f32 %v1493, %v1506
        %v1520 = vadd.f32 %v1494, %v1506
        %v1521 = vadd.f32 %v1495, %v1506
        %v1522 = vadd.f32 %v1496, %v1506
        %v1523 = vadd.f32 %v1497, %v1506
        %v1524 = vadd.f32 %v1498, %v1506
        %v1525 = vadd.f32 %v1499, %v1506
        %v1526 = vadd.f32 %v1500, %v1506
        %v1527 = vmin.f32 %v1508, 0.0
        %v1528 = vmin.f32 %v1509, 0.0
        %v1529 = vmin.f32 %v1510, 0.0
        %v1530 = vmin.f32 %v1511, 0.0
        %v1531 = vmin.f32 %v1512, 0.0
        %v1532 = vmin.f32 %v1513, 0.0
        %v1533 = vmin.f32 %v1514, 0.0
        %v1534 = vmin.f32 %v1515, 0.0
        %v1535 = vmin.f32 %v1516, 0.0
        %v1536 = vmin.f32 %v1517, 0.0
        %v1537 = vmin.f32 %v1518, 0.0
        %v1538 = vmin.f32 %v1519, 0.0
        %v1539 = vmin.f32 %v1520, 0.0
        %v1540 = vmin.f32 %v1521, 0.0
        %v1541 = vmin.f32 %v1522, 0.0
        %v1542 = vmin.f32 %v1523, 0.0
        %v1543 = vmin.f32 %v1524, 0.0
        %v1544 = vmin.f32 %v1525, 0.0
        %v1545 = vmin.f32 %v1526, 0.0
        %vm1546 = vcmp.gt.f32.partialorder %v1508, 0.0
        %vm1547 = vcmp.gt.f32.partialorder %v1509, 0.0
        %vm1548 = vcmp.gt.f32.partialorder %v1510, 0.0
        %vm1549 = vcmp.gt.f32.partialorder %v1511, 0.0
        %vm1550 = vcmp.gt.f32.partialorder %v1512, 0.0
        %vm1551 = vcmp.gt.f32.partialorder %v1513, 0.0
        %vm1552 = vcmp.gt.f32.partialorder %v1514, 0.0
        %vm1553 = vcmp.gt.f32.partialorder %v1515, 0.0
        %vm1554 = vcmp.gt.f32.partialorder %v1516, 0.0
        %vm1555 = vcmp.gt.f32.partialorder %v1517, 0.0
        %vm1556 = vcmp.gt.f32.partialorder %v1518, 0.0
        %vm1557 = vcmp.gt.f32.partialorder %v1519, 0.0
        %vm1558 = vcmp.gt.f32.partialorder %v1520, 0.0
        %vm1559 = vcmp.gt.f32.partialorder %v1521, 0.0
        %vm1560 = vcmp.gt.f32.partialorder %v1522, 0.0
        %vm1561 = vcmp.gt.f32.partialorder %v1523, 0.0
        %vm1562 = vcmp.gt.f32.partialorder %v1524, 0.0
        %vm1563 = vcmp.gt.f32.partialorder %v1525, 0.0
        %vm1564 = vcmp.gt.f32.partialorder %v1526, 0.0
        %v1565 = vmul.f32 %v1527, 1.442695
        %v1566 = vpow.pop %v1565
        %v1567 = vmul.f32 %v1528, 1.442695
        %v1568 = vpow.pop %v1567
        %v1569 = vmul.f32 %v1529, 1.442695
        %v1570 = vpow.pop %v1569
        %v1571 = vmul.f32 %v1530, 1.442695
        %v1572 = vpow.pop %v1571
        %v1573 = vmul.f32 %v1531, 1.442695
        %v1574 = vpow.pop %v1573
        %v1575 = vmul.f32 %v1532, 1.442695
        %v1576 = vpow.pop %v1575
        %v1577 = vmul.f32 %v1533, 1.442695
        %v1578 = vpow.pop %v1577
        %v1579 = vmul.f32 %v1534, 1.442695
        %v1580 = vpow.pop %v1579
        %v1581 = vmul.f32 %v1535, 1.442695
        %v1582 = vpow.pop %v1581
        %v1583 = vmul.f32 %v1536, 1.442695
        %v1584 = vpow.pop %v1583
        %v1585 = vmul.f32 %v1537, 1.442695
        %v1586 = vpow.pop %v1585
        %v1587 = vmul.f32 %v1538, 1.442695
        %v1588 = vpow.pop %v1587
        %v1589 = vmul.f32 %v1539, 1.442695
        %v1590 = vpow.pop %v1589
        %v1591 = vmul.f32 %v1540, 1.442695
        %v1592 = vpow.pop %v1591
        %v1593 = vmul.f32 %v1541, 1.442695
        %v1594 = vpow.pop %v1593
        %v1595 = vmul.f32 %v1542, 1.442695
        %v1596 = vpow.pop %v1595
        %v1597 = vmul.f32 %v1543, 1.442695
        %v1598 = vpow.pop %v1597
        %v1599 = vmul.f32 %v1544, 1.442695
        %v1600 = vpow.pop %v1599
        %v1601 = vmul.f32 %v1545, 1.442695
        %v1602 = vpow.pop %v1601
        %v1603 = vsub.f32 %v1566, 1.0
        %v1604 = vsub.f32 %v1568, 1.0
        %v1605 = vsub.f32 %v1570, 1.0
        %v1606 = vsub.f32 %v1572, 1.0
        %v1607 = vsub.f32 %v1574, 1.0
        %v1608 = vsub.f32 %v1576, 1.0
        %v1609 = vsub.f32 %v1578, 1.0
        %v1610 = vsub.f32 %v1580, 1.0
        %v1611 = vsub.f32 %v1582, 1.0
        %v1612 = vsub.f32 %v1584, 1.0
        %v1613 = vsub.f32 %v1586, 1.0
        %v1614 = vsub.f32 %v1588, 1.0
        %v1615 = vsub.f32 %v1590, 1.0
        %v1616 = vsub.f32 %v1592, 1.0
        %v1617 = vsub.f32 %v1594, 1.0
        %v1618 = vsub.f32 %v1596, 1.0
        %v1619 = vsub.f32 %v1598, 1.0
        %v1620 = vsub.f32 %v1600, 1.0
        %v1621 = vsub.f32 %v1602, 1.0
        %v1622 = vsel %vm1546, %v1508, %v1603
        %v1623 = vsel %vm1547, %v1509, %v1604
        %v1624 = vsel %vm1548, %v1510, %v1605
        %v1625 = vsel %vm1549, %v1511, %v1606
        %v1626 = vsel %vm1550, %v1512, %v1607
        %v1627 = vsel %vm1551, %v1513, %v1608
        %v1628 = vsel %vm1552, %v1514, %v1609
        %v1629 = vsel %vm1553, %v1515, %v1610
        %v1630 = vsel %vm1554, %v1516, %v1611
        %v1631 = vsel %vm1555, %v1517, %v1612
        %v1632 = vsel %vm1556, %v1518, %v1613
        %v1633 = vsel %vm1557, %v1519, %v1614
        %v1634 = vsel %vm1558, %v1520, %v1615
        %v1635 = vsel %vm1559, %v1521, %v1616
        %v1636 = vsel %vm1560, %v1522, %v1617
        %v1637 = vsel %vm1561, %v1523, %v1618
        %v1638 = vsel %vm1562, %v1524, %v1619
        %v1639 = vsel %vm1563, %v1525, %v1620
        %v1640 = vsel %vm1564, %v1526, %v1621
        %v1641 = vlaneseq
        %v1642 = vshrl.u32 %v1641, 7
        %v1643 = vadd.s32 %v1642, 8
        %v1644 = vadd.s32 %v1642, 16
        %v1645 = vadd.s32 %v1642, 24
        %v1646 = vadd.s32 %v1642, 32
        %v1647 = vadd.s32 %v1642, 40
        %v1648 = vadd.s32 %v1642, 48
        %v1649 = vadd.s32 %v1642, 56
        %v1650 = vadd.s32 %v1642, 64
        %v1651 = vadd.s32 %v1642, 72
        %v1652 = vlaneseq
        %v1653 = vand.u32 %v1652, 127
        %v1654 = vadd.s32 %v1653, 128
        %v1655 = vmul.u32 %v1642, 2
        %v1656 = vmul.u32 %v1643, 2
        %v1657 = vmul.u32 %v1644, 2
        %v1658 = vmul.u32 %v1645, 2
        %v1659 = vmul.u32 %v1646, 2
        %v1660 = vmul.u32 %v1647, 2
        %v1661 = vmul.u32 %v1648, 2
        %v1662 = vmul.u32 %v1649, 2
        %v1663 = vmul.u32 %v1650, 2
        %v1664 = vmul.u32 %v1651, 2
        %vm1665 = vcmp.eq.s32.totalorder %v1653, %v1655
        %vm1666 = vcmp.eq.s32.totalorder %v1654, %v1655
        %vm1667 = vcmp.eq.s32.totalorder %v1653, %v1656
        %vm1668 = vcmp.eq.s32.totalorder %v1654, %v1656
        %vm1669 = vcmp.eq.s32.totalorder %v1653, %v1657
        %vm1670 = vcmp.eq.s32.totalorder %v1654, %v1657
        %vm1671 = vcmp.eq.s32.totalorder %v1653, %v1658
        %vm1672 = vcmp.eq.s32.totalorder %v1654, %v1658
        %vm1673 = vcmp.eq.s32.totalorder %v1653, %v1659
        %vm1674 = vcmp.eq.s32.totalorder %v1654, %v1659
        %vm1675 = vcmp.eq.s32.totalorder %v1653, %v1660
        %vm1676 = vcmp.eq.s32.totalorder %v1654, %v1660
        %vm1677 = vcmp.eq.s32.totalorder %v1653, %v1661
        %vm1678 = vcmp.eq.s32.totalorder %v1654, %v1661
        %vm1679 = vcmp.eq.s32.totalorder %v1653, %v1662
        %vm1680 = vcmp.eq.s32.totalorder %v1654, %v1662
        %vm1681 = vcmp.eq.s32.totalorder %v1653, %v1663
        %vm1682 = vcmp.eq.s32.totalorder %v1654, %v1663
        %vm1683 = vcmp.eq.s32.totalorder %v1653, %v1664
        %vm1684 = vcmp.eq.s32.totalorder %v1654, %v1664
        %v1685 = vsel %vm1665, 1, 0
        %v1686 = vsel %vm1666, 1, 0
        %v1687 = vsel %vm1667, 1, 0
        %v1688 = vsel %vm1668, 1, 0
        %v1689 = vsel %vm1669, 1, 0
        %v1690 = vsel %vm1670, 1, 0
        %v1691 = vsel %vm1671, 1, 0
        %v1692 = vsel %vm1672, 1, 0
        %v1693 = vsel %vm1673, 1, 0
        %v1694 = vsel %vm1674, 1, 0
        %v1695 = vsel %vm1675, 1, 0
        %v1696 = vsel %vm1676, 1, 0
        %v1697 = vsel %vm1677, 1, 0
        %v1698 = vsel %vm1678, 1, 0
        %v1699 = vsel %vm1679, 1, 0
        %v1700 = vsel %vm1680, 1, 0
        %v1701 = vsel %vm1681, 1, 0
        %v1702 = vsel %vm1682, 1, 0
        %v1703 = vsel %vm1683, 1, 0
        %v1704 = vsel %vm1684, 1, 0
        %v1705 = vcvt.s32.f32 %v1685
        %v1706 = vcvt.s32.f32 %v1686
        %v1707 = vcvt.s32.f32 %v1687
        %v1708 = vcvt.s32.f32 %v1688
        %v1709 = vcvt.s32.f32 %v1689
        %v1710 = vcvt.s32.f32 %v1690
        %v1711 = vcvt.s32.f32 %v1691
        %v1712 = vcvt.s32.f32 %v1692
        %v1713 = vcvt.s32.f32 %v1693
        %v1714 = vcvt.s32.f32 %v1694
        %v1715 = vcvt.s32.f32 %v1695
        %v1716 = vcvt.s32.f32 %v1696
        %v1717 = vcvt.s32.f32 %v1697
        %v1718 = vcvt.s32.f32 %v1698
        %v1719 = vcvt.s32.f32 %v1699
        %v1720 = vcvt.s32.f32 %v1700
        %v1721 = vcvt.s32.f32 %v1701
        %v1722 = vcvt.s32.f32 %v1702
        %v1723 = vcvt.s32.f32 %v1703
        %v1724 = vcvt.s32.f32 %v1704
        %v1725 = vadd.s32 %v1655, 1
        %v1726 = vadd.s32 %v1656, 1
        %v1727 = vadd.s32 %v1657, 1
        %v1728 = vadd.s32 %v1658, 1
        %v1729 = vadd.s32 %v1659, 1
        %v1730 = vadd.s32 %v1660, 1
        %v1731 = vadd.s32 %v1661, 1
        %v1732 = vadd.s32 %v1662, 1
        %v1733 = vadd.s32 %v1663, 1
        %v1734 = vadd.s32 %v1664, 1
        %vm1735 = vcmp.eq.s32.totalorder %v1653, %v1725
        %vm1736 = vcmp.eq.s32.totalorder %v1654, %v1725
        %vm1737 = vcmp.eq.s32.totalorder %v1653, %v1726
        %vm1738 = vcmp.eq.s32.totalorder %v1654, %v1726
        %vm1739 = vcmp.eq.s32.totalorder %v1653, %v1727
        %vm1740 = vcmp.eq.s32.totalorder %v1654, %v1727
        %vm1741 = vcmp.eq.s32.totalorder %v1653, %v1728
        %vm1742 = vcmp.eq.s32.totalorder %v1654, %v1728
        %vm1743 = vcmp.eq.s32.totalorder %v1653, %v1729
        %vm1744 = vcmp.eq.s32.totalorder %v1654, %v1729
        %vm1745 = vcmp.eq.s32.totalorder %v1653, %v1730
        %vm1746 = vcmp.eq.s32.totalorder %v1654, %v1730
        %vm1747 = vcmp.eq.s32.totalorder %v1653, %v1731
        %vm1748 = vcmp.eq.s32.totalorder %v1654, %v1731
        %vm1749 = vcmp.eq.s32.totalorder %v1653, %v1732
        %vm1750 = vcmp.eq.s32.totalorder %v1654, %v1732
        %vm1751 = vcmp.eq.s32.totalorder %v1653, %v1733
        %vm1752 = vcmp.eq.s32.totalorder %v1654, %v1733
        %vm1753 = vcmp.eq.s32.totalorder %v1653, %v1734
        %vm1754 = vcmp.eq.s32.totalorder %v1654, %v1734
        %v1755 = vsel %vm1735, 1, 0
        %v1756 = vsel %vm1736, 1, 0
        %v1757 = vsel %vm1737, 1, 0
        %v1758 = vsel %vm1738, 1, 0
        %v1759 = vsel %vm1739, 1, 0
        %v1760 = vsel %vm1740, 1, 0
        %v1761 = vsel %vm1741, 1, 0
        %v1762 = vsel %vm1742, 1, 0
        %v1763 = vsel %vm1743, 1, 0
        %v1764 = vsel %vm1744, 1, 0
        %v1765 = vsel %vm1745, 1, 0
        %v1766 = vsel %vm1746, 1, 0
        %v1767 = vsel %vm1747, 1, 0
        %v1768 = vsel %vm1748, 1, 0
        %v1769 = vsel %vm1749, 1, 0
        %v1770 = vsel %vm1750, 1, 0
        %v1771 = vsel %vm1751, 1, 0
        %v1772 = vsel %vm1752, 1, 0
        %v1773 = vsel %vm1753, 1, 0
        %v1774 = vsel %vm1754, 1, 0
        %v1775 = vcvt.s32.f32 %v1755
        %v1776 = vcvt.s32.f32 %v1756
        %v1777 = vcvt.s32.f32 %v1757
        %v1778 = vcvt.s32.f32 %v1758
        %v1779 = vcvt.s32.f32 %v1759
        %v1780 = vcvt.s32.f32 %v1760
        %v1781 = vcvt.s32.f32 %v1761
        %v1782 = vcvt.s32.f32 %v1762
        %v1783 = vcvt.s32.f32 %v1763
        %v1784 = vcvt.s32.f32 %v1764
        %v1785 = vcvt.s32.f32 %v1765
        %v1786 = vcvt.s32.f32 %v1766
        %v1787 = vcvt.s32.f32 %v1767
        %v1788 = vcvt.s32.f32 %v1768
        %v1789 = vcvt.s32.f32 %v1769
        %v1790 = vcvt.s32.f32 %v1770
        %v1791 = vcvt.s32.f32 %v1771
        %v1792 = vcvt.s32.f32 %v1772
        %v1793 = vcvt.s32.f32 %v1773
        %v1794 = vcvt.s32.f32 %v1774
        %vm1795 = vcmask 146432
        %v1797 = vsel %vm1795, %v1706, 0
        %v1800 = vsel %vm1795, %v1708, 0
        %v1803 = vsel %vm1795, %v1710, 0
        %v1806 = vsel %vm1795, %v1712, 0
        %v1809 = vsel %vm1795, %v1714, 0
        %v1812 = vsel %vm1795, %v1716, 0
        %v1815 = vsel %vm1795, %v1718, 0
        %v1818 = vsel %vm1795, %v1720, 0
        %v1821 = vsel %vm1795, %v1722, 0
        %v1824 = vsel %vm1795, %v1724, 0
        %vm1826 = vcmask 1041408
        %v1828 = vsel %vm1826, %v1640, 0
        %1830 = vmatprep.subr.mxu0 0.0
        %1831 = vmatpush1.msra.mxu0 %v1622
        %1832 = vmatprep.subr.mxu0 0.0
        %1833 = vmatpush1.msra.mxu0 %v1623
        %1834 = vmatprep.subr.mxu0 0.0
        %1835 = vmatpush1.msra.mxu0 %v1624
        %1836 = vmatprep.subr.mxu0 0.0
        %1837 = vmatpush1.msra.mxu0 %v1625
        %1838 = vmatprep.subr.mxu0 0.0
        %1839 = vmatpush1.msra.mxu0 %v1626
        %1840 = vmatprep.subr.mxu0 0.0
        %1841 = vmatpush1.msra.mxu0 %v1627
        %1842 = vmatprep.subr.mxu0 0.0
        %1843 = vmatpush1.msra.mxu0 %v1628
        %1844 = vmatprep.subr.mxu0 0.0
        %1845 = vmatpush1.msra.mxu0 %v1629
        %1846 = vmatprep.subr.mxu0 0.0
        %1847 = vmatpush1.msra.mxu0 %v1630
        %1848 = vmatprep.subr.mxu0 0.0
        %1849 = vmatpush1.msra.mxu0 %v1631
        %1850 = vmatprep.subr.mxu0 0.0
        %1851 = vmatpush1.msra.mxu0 %v1632
        %1852 = vmatprep.subr.mxu0 0.0
        %1853 = vmatpush1.msra.mxu0 %v1633
        %1854 = vmatprep.subr.mxu0 0.0
        %1855 = vmatpush1.msra.mxu0 %v1634
        %1856 = vmatprep.subr.mxu0 0.0
        %1857 = vmatpush1.msra.mxu0 %v1635
        %1858 = vmatprep.subr.mxu0 0.0
        %1859 = vmatpush1.msra.mxu0 %v1636
        %1860 = vmatprep.subr.mxu0 0.0
        %1861 = vmatpush1.msra.mxu0 %v1637
        %1862 = vmatprep.subr.mxu0 0.0
        %1863 = vmatpush1.msra.mxu0 %v1638
        %1864 = vmatprep.subr.mxu0 0.0
        %1865 = vmatpush1.msra.mxu0 %v1639
        %1866 = vmatprep.subr.mxu0 0.0
        %1867 = vmatpush1.msra.mxu0 %v1828
        %1868 = vmatprep.subr.mxu0 0.0
        %1869 = vmatpush1.msra.mxu0 0.0
        %1870 = vmatprep.subr.mxu0 0.0
        %1871 = vmatpush1.msra.mxu0 0.0
        %1872 = vmatprep.subr.mxu0 0.0
        %1873 = vmatpush1.msra.mxu0 0.0
        %1874 = vmatprep.subr.mxu0 0.0
        %1875 = vmatpush1.msra.mxu0 0.0
        %1876 = vmatprep.subr.mxu0 0.0
        %1877 = vmatpush1.msra.mxu0 0.0
        %1878 = vmatprep.subr.mxu0 0.0
        %1879 = vmatpush1.msra.mxu0 0.0
        %1880 = vmatprep.subr.mxu0 0.0
        %1881 = vmatpush1.msra.mxu0 0.0
        %1882 = vmatprep.subr.mxu0 0.0
        %1883 = vmatpush1.msra.mxu0 0.0
        %1884 = vmatprep.subr.mxu0 0.0
        %1885 = vmatpush1.msra.mxu0 0.0
        %1886 = vmatprep.subr.mxu0 0.0
        %1887 = vmatpush1.msra.mxu0 0.0
        %1888 = vmatprep.subr.mxu0 0.0
        %1889 = vmatpush1.msra.mxu0 0.0
        %1890 = vmatprep.subr.mxu0 0.0
        %1891 = vmatpush1.msra.mxu0 0.0
        %1892 = vmatprep.subr.mxu0 0.0
        %1893 = vmatpush1.msra.mxu0 0.0
        %1894 = vmatprep.mubr.f32.mxu0 %v1797
        %1895 = vmatmul.mubr.f32.gmra.mrb[0].mxu0 %v1705
        %v1896 = vpop.f32.mrb[0].mxu0
        %v1897 = vadd.f32 0.0, %v1896
        %v1898 = vpop.f32.mrb[0].mxu0
        %1899 = vmatprep.mubr.f32.mxu0 %v1800
        %1900 = vmatmul.mubr.f32.gmra.mrb[0].mxu0 %v1707
        %v1901 = vpop.f32.mrb[0].mxu0
        %v1902 = vadd.f32 0.0, %v1901
        %v1903 = vpop.f32.mrb[0].mxu0
        %1904 = vmatprep.mubr.f32.mxu0 %v1803
        %1905 = vmatmul.mubr.f32.gmra.mrb[0].mxu0 %v1709
        %v1906 = vpop.f32.mrb[0].mxu0
        %v1907 = vadd.f32 0.0, %v1906
        %v1908 = vpop.f32.mrb[0].mxu0
        %1909 = vmatprep.mubr.f32.mxu0 %v1806
        %1910 = vmatmul.mubr.f32.gmra.mrb[0].mxu0 %v1711
        %v1911 = vpop.f32.mrb[0].mxu0
        %v1912 = vadd.f32 0.0, %v1911
        %v1913 = vpop.f32.mrb[0].mxu0
        %1914 = vmatprep.mubr.f32.mxu0 %v1809
        %1915 = vmatmul.mubr.f32.gmra.mrb[0].mxu0 %v1713
        %v1916 = vpop.f32.mrb[0].mxu0
        %v1917 = vadd.f32 0.0, %v1916
        %v1918 = vpop.f32.mrb[0].mxu0
        %1919 = vmatprep.mubr.f32.mxu0 %v1812
        %1920 = vmatmul.mubr.f32.gmra.mrb[0].mxu0 %v1715
        %v1921 = vpop.f32.mrb[0].mxu0
        %v1922 = vadd.f32 0.0, %v1921
        %v1923 = vpop.f32.mrb[0].mxu0
        %1924 = vmatprep.mubr.f32.mxu0 %v1815
        %1925 = vmatmul.mubr.f32.gmra.mrb[0].mxu0 %v1717
        %v1926 = vpop.f32.mrb[0].mxu0
        %v1927 = vadd.f32 0.0, %v1926
        %v1928 = vpop.f32.mrb[0].mxu0
        %1929 = vmatprep.mubr.f32.mxu0 %v1818
        %1930 = vmatmul.mubr.f32.gmra.mrb[0].mxu0 %v1719
        %v1931 = vpop.f32.mrb[0].mxu0
        %v1932 = vadd.f32 0.0, %v1931
        %v1933 = vpop.f32.mrb[0].mxu0
        %1934 = vmatprep.mubr.f32.mxu0 %v1821
        %1935 = vmatmul.mubr.f32.gmra.mrb[0].mxu0 %v1721
        %v1936 = vpop.f32.mrb[0].mxu0
        %v1937 = vadd.f32 0.0, %v1936
        %v1938 = vpop.f32.mrb[0].mxu0
        %1939 = vmatprep.mubr.f32.mxu0 %v1824
        %1940 = vmatmul.mubr.f32.gmra.mrb[0].mxu0 %v1723
        %v1941 = vpop.f32.mrb[0].mxu0
        %v1942 = vadd.f32 0.0, %v1941
        %v1943 = vpop.f32.mrb[0].mxu0
        %1944 = vdwg.mxu0
        %v1946 = vsel %vm1795, %v1776, 0
        %v1949 = vsel %vm1795, %v1778, 0
        %v1952 = vsel %vm1795, %v1780, 0
        %v1955 = vsel %vm1795, %v1782, 0
        %v1958 = vsel %vm1795, %v1784, 0
        %v1961 = vsel %vm1795, %v1786, 0
        %v1964 = vsel %vm1795, %v1788, 0
        %v1967 = vsel %vm1795, %v1790, 0
        %v1970 = vsel %vm1795, %v1792, 0
        %v1973 = vsel %vm1795, %v1794, 0
        %1975 = vmatprep.subr.mxu0 0.0
        %1976 = vmatpush1.msra.mxu0 %v1622
        %1977 = vmatprep.subr.mxu0 0.0
        %1978 = vmatpush1.msra.mxu0 %v1623
        %1979 = vmatprep.subr.mxu0 0.0
        %1980 = vmatpush1.msra.mxu0 %v1624
        %1981 = vmatprep.subr.mxu0 0.0
        %1982 = vmatpush1.msra.mxu0 %v1625
        %1983 = vmatprep.subr.mxu0 0.0
        %1984 = vmatpush1.msra.mxu0 %v1626
        %1985 = vmatprep.subr.mxu0 0.0
        %1986 = vmatpush1.msra.mxu0 %v1627
        %1987 = vmatprep.subr.mxu0 0.0
        %1988 = vmatpush1.msra.mxu0 %v1628
        %1989 = vmatprep.subr.mxu0 0.0
        %1990 = vmatpush1.msra.mxu0 %v1629
        %1991 = vmatprep.subr.mxu0 0.0
        %1992 = vmatpush1.msra.mxu0 %v1630
        %1993 = vmatprep.subr.mxu0 0.0
        %1994 = vmatpush1.msra.mxu0 %v1631
        %1995 = vmatprep.subr.mxu0 0.0
        %1996 = vmatpush1.msra.mxu0 %v1632
        %1997 = vmatprep.subr.mxu0 0.0
        %1998 = vmatpush1.msra.mxu0 %v1633
        %1999 = vmatprep.subr.mxu0 0.0
        %2000 = vmatpush1.msra.mxu0 %v1634
        %2001 = vmatprep.subr.mxu0 0.0
        %2002 = vmatpush1.msra.mxu0 %v1635
        %2003 = vmatprep.subr.mxu0 0.0
        %2004 = vmatpush1.msra.mxu0 %v1636
        %2005 = vmatprep.subr.mxu0 0.0
        %2006 = vmatpush1.msra.mxu0 %v1637
        %2007 = vmatprep.subr.mxu0 0.0
        %2008 = vmatpush1.msra.mxu0 %v1638
        %2009 = vmatprep.subr.mxu0 0.0
        %2010 = vmatpush1.msra.mxu0 %v1639
        %2011 = vmatprep.subr.mxu0 0.0
        %2012 = vmatpush1.msra.mxu0 %v1828
        %2013 = vmatprep.subr.mxu0 0.0
        %2014 = vmatpush1.msra.mxu0 0.0
        %2015 = vmatprep.subr.mxu0 0.0
        %2016 = vmatpush1.msra.mxu0 0.0
        %2017 = vmatprep.subr.mxu0 0.0
        %2018 = vmatpush1.msra.mxu0 0.0
        %2019 = vmatprep.subr.mxu0 0.0
        %2020 = vmatpush1.msra.mxu0 0.0
        %2021 = vmatprep.subr.mxu0 0.0
        %2022 = vmatpush1.msra.mxu0 0.0
        %2023 = vmatprep.subr.mxu0 0.0
        %2024 = vmatpush1.msra.mxu0 0.0
        %2025 = vmatprep.subr.mxu0 0.0
        %2026 = vmatpush1.msra.mxu0 0.0
        %2027 = vmatprep.subr.mxu0 0.0
        %2028 = vmatpush1.msra.mxu0 0.0
        %2029 = vmatprep.subr.mxu0 0.0
        %2030 = vmatpush1.msra.mxu0 0.0
        %2031 = vmatprep.subr.mxu0 0.0
        %2032 = vmatpush1.msra.mxu0 0.0
        %2033 = vmatprep.subr.mxu0 0.0
        %2034 = vmatpush1.msra.mxu0 0.0
        %2035 = vmatprep.subr.mxu0 0.0
        %2036 = vmatpush1.msra.mxu0 0.0
        %2037 = vmatprep.subr.mxu0 0.0
        %2038 = vmatpush1.msra.mxu0 0.0
        %2039 = vmatprep.mubr.f32.mxu0 %v1946
        %2040 = vmatmul.mubr.f32.gmra.mrb[0].mxu0 %v1775
        %v2041 = vpop.f32.mrb[0].mxu0
        %v2042 = vadd.f32 0.0, %v2041
        %v2043 = vpop.f32.mrb[0].mxu0
        %2044 = vmatprep.mubr.f32.mxu0 %v1949
        %2045 = vmatmul.mubr.f32.gmra.mrb[0].mxu0 %v1777
        %v2046 = vpop.f32.mrb[0].mxu0
        %v2047 = vadd.f32 0.0, %v2046
        %v2048 = vpop.f32.mrb[0].mxu0
        %2049 = vmatprep.mubr.f32.mxu0 %v1952
        %2050 = vmatmul.mubr.f32.gmra.mrb[0].mxu0 %v1779
        %v2051 = vpop.f32.mrb[0].mxu0
        %v2052 = vadd.f32 0.0, %v2051
        %v2053 = vpop.f32.mrb[0].mxu0
        %2054 = vmatprep.mubr.f32.mxu0 %v1955
        %2055 = vmatmul.mubr.f32.gmra.mrb[0].mxu0 %v1781
        %v2056 = vpop.f32.mrb[0].mxu0
        %v2057 = vadd.f32 0.0, %v2056
        %v2058 = vpop.f32.mrb[0].mxu0
        %2059 = vmatprep.mubr.f32.mxu0 %v1958
        %2060 = vmatmul.mubr.f32.gmra.mrb[0].mxu0 %v1783
        %v2061 = vpop.f32.mrb[0].mxu0
        %v2062 = vadd.f32 0.0, %v2061
        %v2063 = vpop.f32.mrb[0].mxu0
        %2064 = vmatprep.mubr.f32.mxu0 %v1961
        %2065 = vmatmul.mubr.f32.gmra.mrb[0].mxu0 %v1785
        %v2066 = vpop.f32.mrb[0].mxu0
        %v2067 = vadd.f32 0.0, %v2066
        %v2068 = vpop.f32.mrb[0].mxu0
        %2069 = vmatprep.mubr.f32.mxu0 %v1964
        %2070 = vmatmul.mubr.f32.gmra.mrb[0].mxu0 %v1787
        %v2071 = vpop.f32.mrb[0].mxu0
        %v2072 = vadd.f32 0.0, %v2071
        %v2073 = vpop.f32.mrb[0].mxu0
        %2074 = vmatprep.mubr.f32.mxu0 %v1967
        %2075 = vmatmul.mubr.f32.gmra.mrb[0].mxu0 %v1789
        %v2076 = vpop.f32.mrb[0].mxu0
        %v2077 = vadd.f32 0.0, %v2076
        %v2078 = vpop.f32.mrb[0].mxu0
        %2079 = vmatprep.mubr.f32.mxu0 %v1970
        %2080 = vmatmul.mubr.f32.gmra.mrb[0].mxu0 %v1791
        %v2081 = vpop.f32.mrb[0].mxu0
        %v2082 = vadd.f32 0.0, %v2081
        %v2083 = vpop.f32.mrb[0].mxu0
        %2084 = vmatprep.mubr.f32.mxu0 %v1973
        %2085 = vmatmul.mubr.f32.gmra.mrb[0].mxu0 %v1793
        %v2086 = vpop.f32.mrb[0].mxu0
        %v2087 = vadd.f32 0.0, %v2086
        %v2088 = vpop.f32.mrb[0].mxu0
        %2089 = vdwg.mxu0
        %v2090 = vmax.f32 %v1897, %v2042
        %v2091 = vmax.f32 %v1902, %v2047
        %v2092 = vmax.f32 %v1907, %v2052
        %v2093 = vmax.f32 %v1912, %v2057
        %v2094 = vmax.f32 %v1917, %v2062
        %v2095 = vmax.f32 %v1922, %v2067
        %v2096 = vmax.f32 %v1927, %v2072
        %v2097 = vmax.f32 %v1932, %v2077
        %v2098 = vmax.f32 %v1937, %v2082
        %v2099 = vmax.f32 %v1942, %v2087
        %v2100 = vpack.c.bf16 %v2091, %v2090
        %v2101 = vpack.c.bf16 %v2093, %v2092
        %v2102 = vpack.c.bf16 %v2095, %v2094
        %v2103 = vpack.c.bf16 %v2097, %v2096
        %v2104 = vpack.c.bf16 %v2098, %v2098
        %v2105 = vld [vmem:[%s4] sm:$0xf]
        %v2106 = vld [vmem:[%s4 + $0x4] sm:$0xf]
        %v2107 = vld [vmem:[%s4 + $0x8] sm:$0xf]
        %v2108 = vld [vmem:[%s4 + $0xc] sm:$0xf]
        %v2109 = vld [vmem:[%s4 + $0x10] sm:$0xf]
        %v2110 = vld [vmem:[%s4 + $0x14] sm:$0xf]
        %v2111 = vld [vmem:[%s4 + $0x18] sm:$0xf]
        %v2112 = vld [vmem:[%s4 + $0x1c] sm:$0xf]
        %v2113 = vld [vmem:[%s4 + $0x20] sm:$0xf]
        %v2114 = vld [vmem:[%s4 + $0x24] sm:$0xf]
        %v2115 = vld [vmem:[%s4 + $0x28] sm:$0xf]
        %v2116 = vld [vmem:[%s4 + $0x2c] sm:$0xf]
        %v2117 = vld [vmem:[%s4 + $0x30] sm:$0xf]
        %v2118 = vld [vmem:[%s4 + $0x34] sm:$0xf]
        %v2119 = vld [vmem:[%s4 + $0x38] sm:$0xf]
        %v2120 = vld [vmem:[%s4 + $0x3c] sm:$0xf]
        %s2121 = scalar_lea.vmem %s4, 64
        %v2122 = vld [vmem:[%s2121] sm:$0xf]
        %v2123 = vld [vmem:[%s2121 + $0x4] sm:$0xf]
        %v2124 = vld [vmem:[%s2121 + $0x8] sm:$0xf]
        %v2125 = vld [vmem:[%s2121 + $0xc] sm:$0xf]
        %v2126 = vld [vmem:[%s2121 + $0x10] sm:$0xf]
        %v2127 = vld [vmem:[%s2121 + $0x14] sm:$0xf]
        %v2128 = vld [vmem:[%s2121 + $0x18] sm:$0xf]
        %v2129 = vld [vmem:[%s2121 + $0x1c] sm:$0xf]
        %v2130 = vld [vmem:[%s2121 + $0x20] sm:$0xf]
        %v2131 = vld [vmem:[%s2121 + $0x24] sm:$0xf]
        %v2132 = vld [vmem:[%s2121 + $0x28] sm:$0xf]
        %v2133 = vld [vmem:[%s2121 + $0x2c] sm:$0xf]
        %v2134 = vld [vmem:[%s2121 + $0x30] sm:$0xf]
        %v2135 = vld [vmem:[%s2121 + $0x34] sm:$0xf]
        %v2136 = vld [vmem:[%s2121 + $0x38] sm:$0xf]
        %v2137 = vld [vmem:[%s2121 + $0x3c] sm:$0xf]
        %v2139 = vshrl.u32 %v2100, 16
        %v2141 = vshll.u32 %v2100, 16
        %v2143 = vrot.slane %v2141, 1
        %v2144 = vor.u32 %v2139, %v2143
        %v2146 = vshll.u32 %v2101, 16
        %v2148 = vrot.slane %v2146, 1
        %v2149 = vsel %vm525, %v2144, %v2148
        %v2150 = vshrl.u32 %v2101, 16
        %v2152 = vor.u32 %v2150, %v2148
        %v2154 = vshll.u32 %v2102, 16
        %v2156 = vrot.slane %v2154, 1
        %v2157 = vsel %vm525, %v2152, %v2156
        %v2158 = vshrl.u32 %v2102, 16
        %v2160 = vor.u32 %v2158, %v2156
        %v2162 = vshll.u32 %v2103, 16
        %v2164 = vrot.slane %v2162, 1
        %v2165 = vsel %vm525, %v2160, %v2164
        %v2166 = vshrl.u32 %v2103, 16
        %v2168 = vor.u32 %v2166, %v2164
        %v2170 = vshll.u32 %v2104, 16
        %v2172 = vrot.slane %v2170, 1
        %v2173 = vsel %vm525, %v2168, %v2172
        %v2174 = vshrl.u32 %v2104, 16
        %v2176 = vor.u32 %v2174, %v2172
        %v2198 = vunpack.c.l.b16 %v2122
        %v2199 = vunpack.c.l.b16 %v2123
        %v2200 = vunpack.c.l.b16 %v2124
        %v2201 = vunpack.c.l.b16 %v2125
        %v2202 = vunpack.c.l.b16 %v2126
        %v2203 = vunpack.c.l.b16 %v2127
        %v2204 = vunpack.c.l.b16 %v2128
        %v2205 = vunpack.c.l.b16 %v2129
        %v2206 = vunpack.c.l.b16 %v2130
        %v2207 = vunpack.c.l.b16 %v2131
        %v2208 = vunpack.c.l.b16 %v2132
        %v2209 = vunpack.c.l.b16 %v2133
        %v2210 = vunpack.c.l.b16 %v2134
        %v2211 = vunpack.c.l.b16 %v2135
        %v2212 = vunpack.c.l.b16 %v2136
        %v2213 = vunpack.c.l.b16 %v2137
        %v2214 = vpack.c.b16 %v2199, %v2198
        %v2215 = vpack.c.b16 %v2201, %v2200
        %v2216 = vpack.c.b16 %v2203, %v2202
        %v2217 = vpack.c.b16 %v2205, %v2204
        %v2218 = vpack.c.b16 %v2207, %v2206
        %v2219 = vpack.c.b16 %v2209, %v2208
        %v2220 = vpack.c.b16 %v2211, %v2210
        %v2221 = vpack.c.b16 %v2213, %v2212
        %2230 = vmatprep.subr.bf16.mxu0 0
        %2231 = vmatpush1.bf16.msra.mxu0 %v2214
        %2232 = vmatprep.subr.bf16.mxu0 0
        %2233 = vmatpush1.bf16.msra.mxu0 %v2215
        %2234 = vmatprep.subr.bf16.mxu0 0
        %2235 = vmatpush1.bf16.msra.mxu0 %v2216
        %2236 = vmatprep.subr.bf16.mxu0 0
        %2237 = vmatpush1.bf16.msra.mxu0 %v2217
        %2238 = vmatprep.subr.bf16.mxu0 0
        %2239 = vmatpush1.bf16.msra.mxu0 %v2218
        %2240 = vmatprep.subr.bf16.mxu0 0
        %2241 = vmatpush1.bf16.msra.mxu0 %v2219
        %2242 = vmatprep.subr.bf16.mxu0 0
        %2243 = vmatpush1.bf16.msra.mxu0 %v2220
        %2244 = vmatprep.subr.bf16.mxu0 0
        %2245 = vmatpush1.bf16.msra.mxu0 %v2221
        %2246 = vmatprep.subr.bf16.mxu0 0
        %2247 = vmatpush1.bf16.msra.mxu0 0
        %2248 = vmatprep.subr.bf16.mxu0 0
        %2249 = vmatpush1.bf16.msra.mxu0 0
        %2250 = vmatprep.subr.bf16.mxu0 0
        %2251 = vmatpush1.bf16.msra.mxu0 0
        %2252 = vmatprep.subr.bf16.mxu0 0
        %2253 = vmatpush1.bf16.msra.mxu0 0
        %2254 = vmatprep.subr.bf16.mxu0 0
        %2255 = vmatpush1.bf16.msra.mxu0 0
        %2256 = vmatprep.subr.bf16.mxu0 0
        %2257 = vmatpush1.bf16.msra.mxu0 0
        %2258 = vmatprep.subr.bf16.mxu0 0
        %2259 = vmatpush1.bf16.msra.mxu0 0
        %2260 = vmatprep.subr.bf16.mxu0 0
        %2261 = vmatpush1.bf16.msra.mxu0 0
        %2262 = vmatprep.mubr.bf16.mxu0 0
        %2263 = vmatmul.mubr.bf16.gmra.mrb[0].mxu0 %v2149
        %v2264 = vpop.f32.mrb[0].mxu0
        %v2265 = vadd.f32 0.0, %v2264
        %v2266 = vpop.f32.mrb[0].mxu0
        %v2267 = vpop.f32.mrb[0].mxu0
        %v2268 = vadd.f32 0.0, %v2267
        %v2269 = vpop.f32.mrb[0].mxu0
        %2270 = vmatprep.mubr.bf16.mxu0 0
        %2271 = vmatmul.mubr.bf16.gmra.mrb[0].mxu0 %v2157
        %v2272 = vpop.f32.mrb[0].mxu0
        %v2273 = vadd.f32 0.0, %v2272
        %v2274 = vpop.f32.mrb[0].mxu0
        %v2275 = vpop.f32.mrb[0].mxu0
        %v2276 = vadd.f32 0.0, %v2275
        %v2277 = vpop.f32.mrb[0].mxu0
        %2278 = vmatprep.mubr.bf16.mxu0 0
        %2279 = vmatmul.mubr.bf16.gmra.mrb[0].mxu0 %v2165
        %v2280 = vpop.f32.mrb[0].mxu0
        %v2281 = vadd.f32 0.0, %v2280
        %v2282 = vpop.f32.mrb[0].mxu0
        %v2283 = vpop.f32.mrb[0].mxu0
        %v2284 = vadd.f32 0.0, %v2283
        %v2285 = vpop.f32.mrb[0].mxu0
        %2286 = vmatprep.mubr.bf16.mxu0 0
        %2287 = vmatmul.mubr.bf16.gmra.mrb[0].mxu0 %v2173
        %v2288 = vpop.f32.mrb[0].mxu0
        %v2289 = vadd.f32 0.0, %v2288
        %v2290 = vpop.f32.mrb[0].mxu0
        %v2291 = vpop.f32.mrb[0].mxu0
        %v2292 = vadd.f32 0.0, %v2291
        %v2293 = vpop.f32.mrb[0].mxu0
        %2294 = vmatprep.mubr.bf16.mxu0 0
        %2295 = vmatmul.mubr.bf16.gmra.mrb[0].mxu0 %v2176
        %v2296 = vpop.f32.mrb[0].mxu0
        %v2297 = vadd.f32 0.0, %v2296
        %v2298 = vpop.f32.mrb[0].mxu0
        %v2299 = vpop.f32.mrb[0].mxu0
        %v2300 = vpop.f32.mrb[0].mxu0
        %2301 = vdwg.mxu0
        %v2318 = vunpack.c.l.b16 %v2105
        %v2319 = vunpack.c.l.b16 %v2106
        %v2320 = vunpack.c.l.b16 %v2107
        %v2321 = vunpack.c.l.b16 %v2108
        %v2322 = vunpack.c.l.b16 %v2109
        %v2323 = vunpack.c.l.b16 %v2110
        %v2324 = vunpack.c.l.b16 %v2111
        %v2325 = vunpack.c.l.b16 %v2112
        %v2326 = vunpack.c.l.b16 %v2113
        %v2327 = vunpack.c.l.b16 %v2114
        %v2328 = vunpack.c.l.b16 %v2115
        %v2329 = vunpack.c.l.b16 %v2116
        %v2330 = vunpack.c.l.b16 %v2117
        %v2331 = vunpack.c.l.b16 %v2118
        %v2332 = vunpack.c.l.b16 %v2119
        %v2333 = vunpack.c.l.b16 %v2120
        %v2334 = vpack.c.b16 %v2319, %v2318
        %v2335 = vpack.c.b16 %v2321, %v2320
        %v2336 = vpack.c.b16 %v2323, %v2322
        %v2337 = vpack.c.b16 %v2325, %v2324
        %v2338 = vpack.c.b16 %v2327, %v2326
        %v2339 = vpack.c.b16 %v2329, %v2328
        %v2340 = vpack.c.b16 %v2331, %v2330
        %v2341 = vpack.c.b16 %v2333, %v2332
        %2350 = vmatprep.subr.bf16.mxu0 0
        %2351 = vmatpush1.bf16.msra.mxu0 %v2334
        %2352 = vmatprep.subr.bf16.mxu0 0
        %2353 = vmatpush1.bf16.msra.mxu0 %v2335
        %2354 = vmatprep.subr.bf16.mxu0 0
        %2355 = vmatpush1.bf16.msra.mxu0 %v2336
        %2356 = vmatprep.subr.bf16.mxu0 0
        %2357 = vmatpush1.bf16.msra.mxu0 %v2337
        %2358 = vmatprep.subr.bf16.mxu0 0
        %2359 = vmatpush1.bf16.msra.mxu0 %v2338
        %2360 = vmatprep.subr.bf16.mxu0 0
        %2361 = vmatpush1.bf16.msra.mxu0 %v2339
        %2362 = vmatprep.subr.bf16.mxu0 0
        %2363 = vmatpush1.bf16.msra.mxu0 %v2340
        %2364 = vmatprep.subr.bf16.mxu0 0
        %2365 = vmatpush1.bf16.msra.mxu0 %v2341
        %2366 = vmatprep.subr.bf16.mxu0 0
        %2367 = vmatpush1.bf16.msra.mxu0 0
        %2368 = vmatprep.subr.bf16.mxu0 0
        %2369 = vmatpush1.bf16.msra.mxu0 0
        %2370 = vmatprep.subr.bf16.mxu0 0
        %2371 = vmatpush1.bf16.msra.mxu0 0
        %2372 = vmatprep.subr.bf16.mxu0 0
        %2373 = vmatpush1.bf16.msra.mxu0 0
        %2374 = vmatprep.subr.bf16.mxu0 0
        %2375 = vmatpush1.bf16.msra.mxu0 0
        %2376 = vmatprep.subr.bf16.mxu0 0
        %2377 = vmatpush1.bf16.msra.mxu0 0
        %2378 = vmatprep.subr.bf16.mxu0 0
        %2379 = vmatpush1.bf16.msra.mxu0 0
        %2380 = vmatprep.subr.bf16.mxu0 0
        %2381 = vmatpush1.bf16.msra.mxu0 0
        %2382 = vmatprep.mubr.bf16.mxu0 0
        %2383 = vmatmul.mubr.bf16.gmra.mrb[0].mxu0 %v2100
        %v2384 = vpop.f32.mrb[0].mxu0
        %v2385 = vadd.f32 %v2265, %v2384
        %v2386 = vpop.f32.mrb[0].mxu0
        %v2387 = vpop.f32.mrb[0].mxu0
        %v2388 = vadd.f32 %v2268, %v2387
        %v2389 = vpop.f32.mrb[0].mxu0
        %2390 = vmatprep.mubr.bf16.mxu0 0
        %2391 = vmatmul.mubr.bf16.gmra.mrb[0].mxu0 %v2101
        %v2392 = vpop.f32.mrb[0].mxu0
        %v2393 = vadd.f32 %v2273, %v2392
        %v2394 = vpop.f32.mrb[0].mxu0
        %v2395 = vpop.f32.mrb[0].mxu0
        %v2396 = vadd.f32 %v2276, %v2395
        %v2397 = vpop.f32.mrb[0].mxu0
        %2398 = vmatprep.mubr.bf16.mxu0 0
        %2399 = vmatmul.mubr.bf16.gmra.mrb[0].mxu0 %v2102
        %v2400 = vpop.f32.mrb[0].mxu0
        %v2401 = vadd.f32 %v2281, %v2400
        %v2402 = vpop.f32.mrb[0].mxu0
        %v2403 = vpop.f32.mrb[0].mxu0
        %v2404 = vadd.f32 %v2284, %v2403
        %v2405 = vpop.f32.mrb[0].mxu0
        %2406 = vmatprep.mubr.bf16.mxu0 0
        %2407 = vmatmul.mubr.bf16.gmra.mrb[0].mxu0 %v2103
        %v2408 = vpop.f32.mrb[0].mxu0
        %v2409 = vadd.f32 %v2289, %v2408
        %v2410 = vpop.f32.mrb[0].mxu0
        %v2411 = vpop.f32.mrb[0].mxu0
        %v2412 = vadd.f32 %v2292, %v2411
        %v2413 = vpop.f32.mrb[0].mxu0
        %2414 = vmatprep.mubr.bf16.mxu0 0
        %2415 = vmatmul.mubr.bf16.gmra.mrb[0].mxu0 %v2104
        %v2416 = vpop.f32.mrb[0].mxu0
        %v2417 = vadd.f32 %v2297, %v2416
        %v2418 = vpop.f32.mrb[0].mxu0
        %v2419 = vpop.f32.mrb[0].mxu0
        %v2420 = vpop.f32.mrb[0].mxu0
        %2421 = vdwg.mxu0
        %s2422 = scalar_lea.vmem %s4, 128
        %v2423 = vld [vmem:[%s2422] sm:$0xf]
        %v2424 = vld [vmem:[%s2422 + $0x4] sm:$0xf]
        %v2425 = vld [vmem:[%s2422 + $0x8] sm:$0xf]
        %v2426 = vld [vmem:[%s2422 + $0xc] sm:$0xf]
        %v2427 = vld [vmem:[%s2422 + $0x10] sm:$0xf]
        %v2428 = vld [vmem:[%s2422 + $0x14] sm:$0xf]
        %v2429 = vld [vmem:[%s2422 + $0x18] sm:$0xf]
        %v2430 = vld [vmem:[%s2422 + $0x1c] sm:$0xf]
        %v2431 = vld [vmem:[%s2422 + $0x20] sm:$0xf]
        %v2432 = vld [vmem:[%s2422 + $0x24] sm:$0xf]
        %v2433 = vld [vmem:[%s2422 + $0x28] sm:$0xf]
        %v2434 = vld [vmem:[%s2422 + $0x2c] sm:$0xf]
        %v2435 = vld [vmem:[%s2422 + $0x30] sm:$0xf]
        %v2436 = vld [vmem:[%s2422 + $0x34] sm:$0xf]
        %v2437 = vld [vmem:[%s2422 + $0x38] sm:$0xf]
        %v2438 = vld [vmem:[%s2422 + $0x3c] sm:$0xf]
        %v2444 = vrot.slane %v2100, 1
        %v2445 = vrot.slane %v2101, 1
        %v2446 = vsel %vm899, %v2444, %v2445
        %v2447 = vrot.slane %v2102, 1
        %v2448 = vsel %vm899, %v2445, %v2447
        %v2449 = vrot.slane %v2103, 1
        %v2450 = vsel %vm899, %v2447, %v2449
        %v2451 = vrot.slane %v2104, 1
        %v2452 = vsel %vm899, %v2449, %v2451
        %v2474 = vunpack.c.l.b16 %v2423
        %v2475 = vunpack.c.l.b16 %v2424
        %v2476 = vunpack.c.l.b16 %v2425
        %v2477 = vunpack.c.l.b16 %v2426
        %v2478 = vunpack.c.l.b16 %v2427
        %v2479 = vunpack.c.l.b16 %v2428
        %v2480 = vunpack.c.l.b16 %v2429
        %v2481 = vunpack.c.l.b16 %v2430
        %v2482 = vunpack.c.l.b16 %v2431
        %v2483 = vunpack.c.l.b16 %v2432
        %v2484 = vunpack.c.l.b16 %v2433
        %v2485 = vunpack.c.l.b16 %v2434
        %v2486 = vunpack.c.l.b16 %v2435
        %v2487 = vunpack.c.l.b16 %v2436
        %v2488 = vunpack.c.l.b16 %v2437
        %v2489 = vunpack.c.l.b16 %v2438
        %v2490 = vpack.c.b16 %v2475, %v2474
        %v2491 = vpack.c.b16 %v2477, %v2476
        %v2492 = vpack.c.b16 %v2479, %v2478
        %v2493 = vpack.c.b16 %v2481, %v2480
        %v2494 = vpack.c.b16 %v2483, %v2482
        %v2495 = vpack.c.b16 %v2485, %v2484
        %v2496 = vpack.c.b16 %v2487, %v2486
        %v2497 = vpack.c.b16 %v2489, %v2488
        %2506 = vmatprep.subr.bf16.mxu0 0
        %2507 = vmatpush1.bf16.msra.mxu0 %v2490
        %2508 = vmatprep.subr.bf16.mxu0 0
        %2509 = vmatpush1.bf16.msra.mxu0 %v2491
        %2510 = vmatprep.subr.bf16.mxu0 0
        %2511 = vmatpush1.bf16.msra.mxu0 %v2492
        %2512 = vmatprep.subr.bf16.mxu0 0
        %2513 = vmatpush1.bf16.msra.mxu0 %v2493
        %2514 = vmatprep.subr.bf16.mxu0 0
        %2515 = vmatpush1.bf16.msra.mxu0 %v2494
        %2516 = vmatprep.subr.bf16.mxu0 0
        %2517 = vmatpush1.bf16.msra.mxu0 %v2495
        %2518 = vmatprep.subr.bf16.mxu0 0
        %2519 = vmatpush1.bf16.msra.mxu0 %v2496
        %2520 = vmatprep.subr.bf16.mxu0 0
        %2521 = vmatpush1.bf16.msra.mxu0 %v2497
        %2522 = vmatprep.subr.bf16.mxu0 0
        %2523 = vmatpush1.bf16.msra.mxu0 0
        %2524 = vmatprep.subr.bf16.mxu0 0
        %2525 = vmatpush1.bf16.msra.mxu0 0
        %2526 = vmatprep.subr.bf16.mxu0 0
        %2527 = vmatpush1.bf16.msra.mxu0 0
        %2528 = vmatprep.subr.bf16.mxu0 0
        %2529 = vmatpush1.bf16.msra.mxu0 0
        %2530 = vmatprep.subr.bf16.mxu0 0
        %2531 = vmatpush1.bf16.msra.mxu0 0
        %2532 = vmatprep.subr.bf16.mxu0 0
        %2533 = vmatpush1.bf16.msra.mxu0 0
        %2534 = vmatprep.subr.bf16.mxu0 0
        %2535 = vmatpush1.bf16.msra.mxu0 0
        %2536 = vmatprep.subr.bf16.mxu0 0
        %2537 = vmatpush1.bf16.msra.mxu0 0
        %2538 = vmatprep.mubr.bf16.mxu0 0
        %2539 = vmatmul.mubr.bf16.gmra.mrb[0].mxu0 %v2446
        %v2540 = vpop.f32.mrb[0].mxu0
        %v2541 = vadd.f32 0.0, %v2540
        %v2542 = vpop.f32.mrb[0].mxu0
        %v2543 = vpop.f32.mrb[0].mxu0
        %v2544 = vadd.f32 0.0, %v2543
        %v2545 = vpop.f32.mrb[0].mxu0
        %2546 = vmatprep.mubr.bf16.mxu0 0
        %2547 = vmatmul.mubr.bf16.gmra.mrb[0].mxu0 %v2448
        %v2548 = vpop.f32.mrb[0].mxu0
        %v2549 = vadd.f32 0.0, %v2548
        %v2550 = vpop.f32.mrb[0].mxu0
        %v2551 = vpop.f32.mrb[0].mxu0
        %v2552 = vadd.f32 0.0, %v2551
        %v2553 = vpop.f32.mrb[0].mxu0
        %2554 = vmatprep.mubr.bf16.mxu0 0
        %2555 = vmatmul.mubr.bf16.gmra.mrb[0].mxu0 %v2450
        %v2556 = vpop.f32.mrb[0].mxu0
        %v2557 = vadd.f32 0.0, %v2556
        %v2558 = vpop.f32.mrb[0].mxu0
        %v2559 = vpop.f32.mrb[0].mxu0
        %v2560 = vadd.f32 0.0, %v2559
        %v2561 = vpop.f32.mrb[0].mxu0
        %2562 = vmatprep.mubr.bf16.mxu0 0
        %2563 = vmatmul.mubr.bf16.gmra.mrb[0].mxu0 %v2452
        %v2564 = vpop.f32.mrb[0].mxu0
        %v2565 = vadd.f32 0.0, %v2564
        %v2566 = vpop.f32.mrb[0].mxu0
        %v2567 = vpop.f32.mrb[0].mxu0
        %v2568 = vadd.f32 0.0, %v2567
        %v2569 = vpop.f32.mrb[0].mxu0
        %2570 = vmatprep.mubr.bf16.mxu0 0
        %2571 = vmatmul.mubr.bf16.gmra.mrb[0].mxu0 %v2451
        %v2572 = vpop.f32.mrb[0].mxu0
        %v2573 = vadd.f32 0.0, %v2572
        %v2574 = vpop.f32.mrb[0].mxu0
        %v2575 = vpop.f32.mrb[0].mxu0
        %v2576 = vpop.f32.mrb[0].mxu0
        %2577 = vdwg.mxu0
        %v2578 = vadd.f32 %v2385, %v2541
        %v2579 = vadd.f32 %v2388, %v2544
        %v2580 = vadd.f32 %v2393, %v2549
        %v2581 = vadd.f32 %v2396, %v2552
        %v2582 = vadd.f32 %v2401, %v2557
        %v2583 = vadd.f32 %v2404, %v2560
        %v2584 = vadd.f32 %v2409, %v2565
        %v2585 = vadd.f32 %v2412, %v2568
        %v2586 = vadd.f32 %v2417, %v2573
        %s2587 = scalar_lea.vmem %s4, 192
        %v2588 = vld [vmem:[%s2587] sm:$0xf]
        %v2589 = vld [vmem:[%s2587 + $0x4] sm:$0xf]
        %v2590 = vld [vmem:[%s2587 + $0x8] sm:$0xf]
        %v2591 = vld [vmem:[%s2587 + $0xc] sm:$0xf]
        %v2592 = vld [vmem:[%s2587 + $0x10] sm:$0xf]
        %v2593 = vld [vmem:[%s2587 + $0x14] sm:$0xf]
        %v2594 = vld [vmem:[%s2587 + $0x18] sm:$0xf]
        %v2595 = vld [vmem:[%s2587 + $0x1c] sm:$0xf]
        %v2596 = vld [vmem:[%s2587 + $0x20] sm:$0xf]
        %v2597 = vld [vmem:[%s2587 + $0x24] sm:$0xf]
        %v2598 = vld [vmem:[%s2587 + $0x28] sm:$0xf]
        %v2599 = vld [vmem:[%s2587 + $0x2c] sm:$0xf]
        %v2600 = vld [vmem:[%s2587 + $0x30] sm:$0xf]
        %v2601 = vld [vmem:[%s2587 + $0x34] sm:$0xf]
        %v2602 = vld [vmem:[%s2587 + $0x38] sm:$0xf]
        %v2603 = vld [vmem:[%s2587 + $0x3c] sm:$0xf]
        %v2604 = vrot.slane %v2139, 1
        %v2605 = vrot.slane %v2141, 2
        %v2606 = vor.u32 %v2604, %v2605
        %v2607 = vrot.slane %v2150, 1
        %v2608 = vrot.slane %v2146, 2
        %v2609 = vor.u32 %v2607, %v2608
        %v2610 = vsel %vm1085, %v2606, %v2609
        %v2611 = vrot.slane %v2158, 1
        %v2612 = vrot.slane %v2154, 2
        %v2613 = vor.u32 %v2611, %v2612
        %v2614 = vsel %vm1085, %v2609, %v2613
        %v2615 = vrot.slane %v2166, 1
        %v2616 = vrot.slane %v2162, 2
        %v2617 = vor.u32 %v2615, %v2616
        %v2618 = vsel %vm1085, %v2613, %v2617
        %v2619 = vrot.slane %v2174, 1
        %v2620 = vrot.slane %v2170, 2
        %v2621 = vor.u32 %v2619, %v2620
        %v2622 = vsel %vm1085, %v2617, %v2621
        %v2644 = vunpack.c.l.b16 %v2588
        %v2645 = vunpack.c.l.b16 %v2589
        %v2646 = vunpack.c.l.b16 %v2590
        %v2647 = vunpack.c.l.b16 %v2591
        %v2648 = vunpack.c.l.b16 %v2592
        %v2649 = vunpack.c.l.b16 %v2593
        %v2650 = vunpack.c.l.b16 %v2594
        %v2651 = vunpack.c.l.b16 %v2595
        %v2652 = vunpack.c.l.b16 %v2596
        %v2653 = vunpack.c.l.b16 %v2597
        %v2654 = vunpack.c.l.b16 %v2598
        %v2655 = vunpack.c.l.b16 %v2599
        %v2656 = vunpack.c.l.b16 %v2600
        %v2657 = vunpack.c.l.b16 %v2601
        %v2658 = vunpack.c.l.b16 %v2602
        %v2659 = vunpack.c.l.b16 %v2603
        %v2660 = vpack.c.b16 %v2645, %v2644
        %v2661 = vpack.c.b16 %v2647, %v2646
        %v2662 = vpack.c.b16 %v2649, %v2648
        %v2663 = vpack.c.b16 %v2651, %v2650
        %v2664 = vpack.c.b16 %v2653, %v2652
        %v2665 = vpack.c.b16 %v2655, %v2654
        %v2666 = vpack.c.b16 %v2657, %v2656
        %v2667 = vpack.c.b16 %v2659, %v2658
        %2676 = vmatprep.subr.bf16.mxu0 0
        %2677 = vmatpush1.bf16.msra.mxu0 %v2660
        %2678 = vmatprep.subr.bf16.mxu0 0
        %2679 = vmatpush1.bf16.msra.mxu0 %v2661
        %2680 = vmatprep.subr.bf16.mxu0 0
        %2681 = vmatpush1.bf16.msra.mxu0 %v2662
        %2682 = vmatprep.subr.bf16.mxu0 0
        %2683 = vmatpush1.bf16.msra.mxu0 %v2663
        %2684 = vmatprep.subr.bf16.mxu0 0
        %2685 = vmatpush1.bf16.msra.mxu0 %v2664
        %2686 = vmatprep.subr.bf16.mxu0 0
        %2687 = vmatpush1.bf16.msra.mxu0 %v2665
        %2688 = vmatprep.subr.bf16.mxu0 0
        %2689 = vmatpush1.bf16.msra.mxu0 %v2666
        %2690 = vmatprep.subr.bf16.mxu0 0
        %2691 = vmatpush1.bf16.msra.mxu0 %v2667
        %2692 = vmatprep.subr.bf16.mxu0 0
        %2693 = vmatpush1.bf16.msra.mxu0 0
        %2694 = vmatprep.subr.bf16.mxu0 0
        %2695 = vmatpush1.bf16.msra.mxu0 0
        %2696 = vmatprep.subr.bf16.mxu0 0
        %2697 = vmatpush1.bf16.msra.mxu0 0
        %2698 = vmatprep.subr.bf16.mxu0 0
        %2699 = vmatpush1.bf16.msra.mxu0 0
        %2700 = vmatprep.subr.bf16.mxu0 0
        %2701 = vmatpush1.bf16.msra.mxu0 0
        %2702 = vmatprep.subr.bf16.mxu0 0
        %2703 = vmatpush1.bf16.msra.mxu0 0
        %2704 = vmatprep.subr.bf16.mxu0 0
        %2705 = vmatpush1.bf16.msra.mxu0 0
        %2706 = vmatprep.subr.bf16.mxu0 0
        %2707 = vmatpush1.bf16.msra.mxu0 0
        %2708 = vmatprep.mubr.bf16.mxu0 0
        %2709 = vmatmul.mubr.bf16.gmra.mrb[0].mxu0 %v2610
        %v2710 = vpop.f32.mrb[0].mxu0
        %v2711 = vadd.f32 0.0, %v2710
        %v2712 = vpop.f32.mrb[0].mxu0
        %v2713 = vpop.f32.mrb[0].mxu0
        %v2714 = vadd.f32 0.0, %v2713
        %v2715 = vpop.f32.mrb[0].mxu0
        %2716 = vmatprep.mubr.bf16.mxu0 0
        %2717 = vmatmul.mubr.bf16.gmra.mrb[0].mxu0 %v2614
        %v2718 = vpop.f32.mrb[0].mxu0
        %v2719 = vadd.f32 0.0, %v2718
        %v2720 = vpop.f32.mrb[0].mxu0
        %v2721 = vpop.f32.mrb[0].mxu0
        %v2722 = vadd.f32 0.0, %v2721
        %v2723 = vpop.f32.mrb[0].mxu0
        %2724 = vmatprep.mubr.bf16.mxu0 0
        %2725 = vmatmul.mubr.bf16.gmra.mrb[0].mxu0 %v2618
        %v2726 = vpop.f32.mrb[0].mxu0
        %v2727 = vadd.f32 0.0, %v2726
        %v2728 = vpop.f32.mrb[0].mxu0
        %v2729 = vpop.f32.mrb[0].mxu0
        %v2730 = vadd.f32 0.0, %v2729
        %v2731 = vpop.f32.mrb[0].mxu0
        %2732 = vmatprep.mubr.bf16.mxu0 0
        %2733 = vmatmul.mubr.bf16.gmra.mrb[0].mxu0 %v2622
        %v2734 = vpop.f32.mrb[0].mxu0
        %v2735 = vadd.f32 0.0, %v2734
        %v2736 = vpop.f32.mrb[0].mxu0
        %v2737 = vpop.f32.mrb[0].mxu0
        %v2738 = vadd.f32 0.0, %v2737
        %v2739 = vpop.f32.mrb[0].mxu0
        %2740 = vmatprep.mubr.bf16.mxu0 0
        %2741 = vmatmul.mubr.bf16.gmra.mrb[0].mxu0 %v2621
        %v2742 = vpop.f32.mrb[0].mxu0
        %v2743 = vadd.f32 0.0, %v2742
        %v2744 = vpop.f32.mrb[0].mxu0
        %v2745 = vpop.f32.mrb[0].mxu0
        %v2746 = vpop.f32.mrb[0].mxu0
        %2747 = vdwg.mxu0
        %v2748 = vadd.f32 %v2578, %v2711
        %v2749 = vadd.f32 %v2579, %v2714
        %v2750 = vadd.f32 %v2580, %v2719
        %v2751 = vadd.f32 %v2581, %v2722
        %v2752 = vadd.f32 %v2582, %v2727
        %v2753 = vadd.f32 %v2583, %v2730
        %v2754 = vadd.f32 %v2584, %v2735
        %v2755 = vadd.f32 %v2585, %v2738
        %v2756 = vadd.f32 %v2586, %v2743
        %v2757 = vpack.c.bf16 %v2099, %v2098
        %s2758 = scalar_lea.vmem %s4, 256
        %v2759 = vld [vmem:[%s2758] sm:$0xf]
        %v2760 = vld [vmem:[%s2758 + $0x4] sm:$0xf]
        %v2761 = vld [vmem:[%s2758 + $0x8] sm:$0xf]
        %v2762 = vld [vmem:[%s2758 + $0xc] sm:$0xf]
        %v2763 = vld [vmem:[%s2758 + $0x10] sm:$0xf]
        %v2764 = vld [vmem:[%s2758 + $0x14] sm:$0xf]
        %v2765 = vld [vmem:[%s2758 + $0x18] sm:$0xf]
        %v2766 = vld [vmem:[%s2758 + $0x1c] sm:$0xf]
        %v2767 = vld [vmem:[%s2758 + $0x20] sm:$0xf]
        %v2768 = vld [vmem:[%s2758 + $0x24] sm:$0xf]
        %v2769 = vld [vmem:[%s2758 + $0x28] sm:$0xf]
        %v2770 = vld [vmem:[%s2758 + $0x2c] sm:$0xf]
        %v2771 = vld [vmem:[%s2758 + $0x30] sm:$0xf]
        %v2772 = vld [vmem:[%s2758 + $0x34] sm:$0xf]
        %v2773 = vld [vmem:[%s2758 + $0x38] sm:$0xf]
        %v2774 = vld [vmem:[%s2758 + $0x3c] sm:$0xf]
        %v2776 = vrot.slane %v2100, 2
        %v2777 = vrot.slane %v2101, 2
        %v2778 = vsel %vm1291, %v2776, %v2777
        %v2779 = vrot.slane %v2102, 2
        %v2780 = vsel %vm1291, %v2777, %v2779
        %v2781 = vrot.slane %v2103, 2
        %v2782 = vsel %vm1291, %v2779, %v2781
        %v2783 = vrot.slane %v2757, 2
        %v2784 = vsel %vm1291, %v2781, %v2783
        %v2806 = vunpack.c.l.b16 %v2759
        %v2807 = vunpack.c.l.b16 %v2760
        %v2808 = vunpack.c.l.b16 %v2761
        %v2809 = vunpack.c.l.b16 %v2762
        %v2810 = vunpack.c.l.b16 %v2763
        %v2811 = vunpack.c.l.b16 %v2764
        %v2812 = vunpack.c.l.b16 %v2765
        %v2813 = vunpack.c.l.b16 %v2766
        %v2814 = vunpack.c.l.b16 %v2767
        %v2815 = vunpack.c.l.b16 %v2768
        %v2816 = vunpack.c.l.b16 %v2769
        %v2817 = vunpack.c.l.b16 %v2770
        %v2818 = vunpack.c.l.b16 %v2771
        %v2819 = vunpack.c.l.b16 %v2772
        %v2820 = vunpack.c.l.b16 %v2773
        %v2821 = vunpack.c.l.b16 %v2774
        %v2822 = vpack.c.b16 %v2807, %v2806
        %v2823 = vpack.c.b16 %v2809, %v2808
        %v2824 = vpack.c.b16 %v2811, %v2810
        %v2825 = vpack.c.b16 %v2813, %v2812
        %v2826 = vpack.c.b16 %v2815, %v2814
        %v2827 = vpack.c.b16 %v2817, %v2816
        %v2828 = vpack.c.b16 %v2819, %v2818
        %v2829 = vpack.c.b16 %v2821, %v2820
        %2838 = vmatprep.subr.bf16.mxu0 0
        %2839 = vmatpush1.bf16.msra.mxu0 %v2822
        %2840 = vmatprep.subr.bf16.mxu0 0
        %2841 = vmatpush1.bf16.msra.mxu0 %v2823
        %2842 = vmatprep.subr.bf16.mxu0 0
        %2843 = vmatpush1.bf16.msra.mxu0 %v2824
        %2844 = vmatprep.subr.bf16.mxu0 0
        %2845 = vmatpush1.bf16.msra.mxu0 %v2825
        %2846 = vmatprep.subr.bf16.mxu0 0
        %2847 = vmatpush1.bf16.msra.mxu0 %v2826
        %2848 = vmatprep.subr.bf16.mxu0 0
        %2849 = vmatpush1.bf16.msra.mxu0 %v2827
        %2850 = vmatprep.subr.bf16.mxu0 0
        %2851 = vmatpush1.bf16.msra.mxu0 %v2828
        %2852 = vmatprep.subr.bf16.mxu0 0
        %2853 = vmatpush1.bf16.msra.mxu0 %v2829
        %2854 = vmatprep.subr.bf16.mxu0 0
        %2855 = vmatpush1.bf16.msra.mxu0 0
        %2856 = vmatprep.subr.bf16.mxu0 0
        %2857 = vmatpush1.bf16.msra.mxu0 0
        %2858 = vmatprep.subr.bf16.mxu0 0
        %2859 = vmatpush1.bf16.msra.mxu0 0
        %2860 = vmatprep.subr.bf16.mxu0 0
        %2861 = vmatpush1.bf16.msra.mxu0 0
        %2862 = vmatprep.subr.bf16.mxu0 0
        %2863 = vmatpush1.bf16.msra.mxu0 0
        %2864 = vmatprep.subr.bf16.mxu0 0
        %2865 = vmatpush1.bf16.msra.mxu0 0
        %2866 = vmatprep.subr.bf16.mxu0 0
        %2867 = vmatpush1.bf16.msra.mxu0 0
        %2868 = vmatprep.subr.bf16.mxu0 0
        %2869 = vmatpush1.bf16.msra.mxu0 0
        %2870 = vmatprep.mubr.bf16.mxu0 0
        %2871 = vmatmul.mubr.bf16.gmra.mrb[0].mxu0 %v2778
        %v2872 = vpop.f32.mrb[0].mxu0
        %v2873 = vadd.f32 0.0, %v2872
        %v2874 = vpop.f32.mrb[0].mxu0
        %v2875 = vpop.f32.mrb[0].mxu0
        %v2876 = vadd.f32 0.0, %v2875
        %v2877 = vpop.f32.mrb[0].mxu0
        %2878 = vmatprep.mubr.bf16.mxu0 0
        %2879 = vmatmul.mubr.bf16.gmra.mrb[0].mxu0 %v2780
        %v2880 = vpop.f32.mrb[0].mxu0
        %v2881 = vadd.f32 0.0, %v2880
        %v2882 = vpop.f32.mrb[0].mxu0
        %v2883 = vpop.f32.mrb[0].mxu0
        %v2884 = vadd.f32 0.0, %v2883
        %v2885 = vpop.f32.mrb[0].mxu0
        %2886 = vmatprep.mubr.bf16.mxu0 0
        %2887 = vmatmul.mubr.bf16.gmra.mrb[0].mxu0 %v2782
        %v2888 = vpop.f32.mrb[0].mxu0
        %v2889 = vadd.f32 0.0, %v2888
        %v2890 = vpop.f32.mrb[0].mxu0
        %v2891 = vpop.f32.mrb[0].mxu0
        %v2892 = vadd.f32 0.0, %v2891
        %v2893 = vpop.f32.mrb[0].mxu0
        %2894 = vmatprep.mubr.bf16.mxu0 0
        %2895 = vmatmul.mubr.bf16.gmra.mrb[0].mxu0 %v2784
        %v2896 = vpop.f32.mrb[0].mxu0
        %v2897 = vadd.f32 0.0, %v2896
        %v2898 = vpop.f32.mrb[0].mxu0
        %v2899 = vpop.f32.mrb[0].mxu0
        %v2900 = vadd.f32 0.0, %v2899
        %v2901 = vpop.f32.mrb[0].mxu0
        %2902 = vmatprep.mubr.bf16.mxu0 0
        %2903 = vmatmul.mubr.bf16.gmra.mrb[0].mxu0 %v2783
        %v2904 = vpop.f32.mrb[0].mxu0
        %v2905 = vadd.f32 0.0, %v2904
        %v2906 = vpop.f32.mrb[0].mxu0
        %v2907 = vpop.f32.mrb[0].mxu0
        %v2908 = vpop.f32.mrb[0].mxu0
        %2909 = vdwg.mxu0
        %v2910 = vadd.f32 %v2748, %v2873
        %v2911 = vadd.f32 %v2749, %v2876
        %v2912 = vadd.f32 %v2750, %v2881
        %v2913 = vadd.f32 %v2751, %v2884
        %v2914 = vadd.f32 %v2752, %v2889
        %v2915 = vadd.f32 %v2753, %v2892
        %v2916 = vadd.f32 %v2754, %v2897
        %v2917 = vadd.f32 %v2755, %v2900
        %v2918 = vadd.f32 %v2756, %v2905
        %v2919 = vld [vmem:[%s5] sm:$0x1]
        %v2921 = vlaneseq
        %v2922 = vshrl.u32 %v2921, 7
        %v2923 = vsub.s32 0, %v2922
        %v2924 = vrot.slane %v2919, %v2923
        %v2926 = vmul.f32 %v2910, %v2924
        %v2927 = vmul.f32 %v2911, %v2924
        %v2928 = vmul.f32 %v2912, %v2924
        %v2929 = vmul.f32 %v2913, %v2924
        %v2930 = vmul.f32 %v2914, %v2924
        %v2931 = vmul.f32 %v2915, %v2924
        %v2932 = vmul.f32 %v2916, %v2924
        %v2933 = vmul.f32 %v2917, %v2924
        %v2934 = vmul.f32 %v2918, %v2924
        %v2935 = vld [vmem:[%s6] sm:$0x1]
        %v2937 = vlaneseq
        %v2938 = vshrl.u32 %v2937, 7
        %v2939 = vsub.s32 0, %v2938
        %v2940 = vrot.slane %v2935, %v2939
        %v2942 = vadd.f32 %v2926, %v2940
        %v2943 = vadd.f32 %v2927, %v2940
        %v2944 = vadd.f32 %v2928, %v2940
        %v2945 = vadd.f32 %v2929, %v2940
        %v2946 = vadd.f32 %v2930, %v2940
        %v2947 = vadd.f32 %v2931, %v2940
        %v2948 = vadd.f32 %v2932, %v2940
        %v2949 = vadd.f32 %v2933, %v2940
        %v2950 = vadd.f32 %v2934, %v2940
        %v2951 = vmin.f32 %v2942, 0.0
        %v2952 = vmin.f32 %v2943, 0.0
        %v2953 = vmin.f32 %v2944, 0.0
        %v2954 = vmin.f32 %v2945, 0.0
        %v2955 = vmin.f32 %v2946, 0.0
        %v2956 = vmin.f32 %v2947, 0.0
        %v2957 = vmin.f32 %v2948, 0.0
        %v2958 = vmin.f32 %v2949, 0.0
        %v2959 = vmin.f32 %v2950, 0.0
        %vm2960 = vcmp.gt.f32.partialorder %v2942, 0.0
        %vm2961 = vcmp.gt.f32.partialorder %v2943, 0.0
        %vm2962 = vcmp.gt.f32.partialorder %v2944, 0.0
        %vm2963 = vcmp.gt.f32.partialorder %v2945, 0.0
        %vm2964 = vcmp.gt.f32.partialorder %v2946, 0.0
        %vm2965 = vcmp.gt.f32.partialorder %v2947, 0.0
        %vm2966 = vcmp.gt.f32.partialorder %v2948, 0.0
        %vm2967 = vcmp.gt.f32.partialorder %v2949, 0.0
        %vm2968 = vcmp.gt.f32.partialorder %v2950, 0.0
        %v2969 = vmul.f32 %v2951, 1.442695
        %v2970 = vpow.pop %v2969
        %v2971 = vmul.f32 %v2952, 1.442695
        %v2972 = vpow.pop %v2971
        %v2973 = vmul.f32 %v2953, 1.442695
        %v2974 = vpow.pop %v2973
        %v2975 = vmul.f32 %v2954, 1.442695
        %v2976 = vpow.pop %v2975
        %v2977 = vmul.f32 %v2955, 1.442695
        %v2978 = vpow.pop %v2977
        %v2979 = vmul.f32 %v2956, 1.442695
        %v2980 = vpow.pop %v2979
        %v2981 = vmul.f32 %v2957, 1.442695
        %v2982 = vpow.pop %v2981
        %v2983 = vmul.f32 %v2958, 1.442695
        %v2984 = vpow.pop %v2983
        %v2985 = vmul.f32 %v2959, 1.442695
        %v2986 = vpow.pop %v2985
        %v2987 = vsub.f32 %v2970, 1.0
        %v2988 = vsub.f32 %v2972, 1.0
        %v2989 = vsub.f32 %v2974, 1.0
        %v2990 = vsub.f32 %v2976, 1.0
        %v2991 = vsub.f32 %v2978, 1.0
        %v2992 = vsub.f32 %v2980, 1.0
        %v2993 = vsub.f32 %v2982, 1.0
        %v2994 = vsub.f32 %v2984, 1.0
        %v2995 = vsub.f32 %v2986, 1.0
        %v2996 = vsel %vm2960, %v2942, %v2987
        %v2997 = vsel %vm2961, %v2943, %v2988
        %v2998 = vsel %vm2962, %v2944, %v2989
        %v2999 = vsel %vm2963, %v2945, %v2990
        %v3000 = vsel %vm2964, %v2946, %v2991
        %v3001 = vsel %vm2965, %v2947, %v2992
        %v3002 = vsel %vm2966, %v2948, %v2993
        %v3003 = vsel %vm2967, %v2949, %v2994
        %v3004 = vsel %vm2968, %v2950, %v2995
        %vm3005 = vcmask 564224
        %v3007 = vsel %vm3005, %v1705, 0
        %v3010 = vsel %vm3005, %v1707, 0
        %v3013 = vsel %vm3005, %v1709, 0
        %v3016 = vsel %vm3005, %v1711, 0
        %v3019 = vsel %vm3005, %v1713, 0
        %vm3021 = vcmask 1044480
        %v3023 = vsel %vm3021, %v3004, 0
        %3025 = vmatprep.subr.mxu0 0.0
        %3026 = vmatpush1.msra.mxu0 %v2996
        %3027 = vmatprep.subr.mxu0 0.0
        %3028 = vmatpush1.msra.mxu0 %v2997
        %3029 = vmatprep.subr.mxu0 0.0
        %3030 = vmatpush1.msra.mxu0 %v2998
        %3031 = vmatprep.subr.mxu0 0.0
        %3032 = vmatpush1.msra.mxu0 %v2999
        %3033 = vmatprep.subr.mxu0 0.0
        %3034 = vmatpush1.msra.mxu0 %v3000
        %3035 = vmatprep.subr.mxu0 0.0
        %3036 = vmatpush1.msra.mxu0 %v3001
        %3037 = vmatprep.subr.mxu0 0.0
        %3038 = vmatpush1.msra.mxu0 %v3002
        %3039 = vmatprep.subr.mxu0 0.0
        %3040 = vmatpush1.msra.mxu0 %v3003
        %3041 = vmatprep.subr.mxu0 0.0
        %3042 = vmatpush1.msra.mxu0 %v3023
        %3043 = vmatprep.subr.mxu0 0.0
        %3044 = vmatpush1.msra.mxu0 0.0
        %3045 = vmatprep.subr.mxu0 0.0
        %3046 = vmatpush1.msra.mxu0 0.0
        %3047 = vmatprep.subr.mxu0 0.0
        %3048 = vmatpush1.msra.mxu0 0.0
        %3049 = vmatprep.subr.mxu0 0.0
        %3050 = vmatpush1.msra.mxu0 0.0
        %3051 = vmatprep.subr.mxu0 0.0
        %3052 = vmatpush1.msra.mxu0 0.0
        %3053 = vmatprep.subr.mxu0 0.0
        %3054 = vmatpush1.msra.mxu0 0.0
        %3055 = vmatprep.subr.mxu0 0.0
        %3056 = vmatpush1.msra.mxu0 0.0
        %3057 = vmatprep.subr.mxu0 0.0
        %3058 = vmatpush1.msra.mxu0 0.0
        %3059 = vmatprep.subr.mxu0 0.0
        %3060 = vmatpush1.msra.mxu0 0.0
        %3061 = vmatprep.subr.mxu0 0.0
        %3062 = vmatpush1.msra.mxu0 0.0
        %3063 = vmatprep.subr.mxu0 0.0
        %3064 = vmatpush1.msra.mxu0 0.0
        %3065 = vmatprep.subr.mxu0 0.0
        %3066 = vmatpush1.msra.mxu0 0.0
        %3067 = vmatprep.subr.mxu0 0.0
        %3068 = vmatpush1.msra.mxu0 0.0
        %3069 = vmatprep.subr.mxu0 0.0
        %3070 = vmatpush1.msra.mxu0 0.0
        %3071 = vmatprep.subr.mxu0 0.0
        %3072 = vmatpush1.msra.mxu0 0.0
        %3073 = vmatprep.subr.mxu0 0.0
        %3074 = vmatpush1.msra.mxu0 0.0
        %3075 = vmatprep.subr.mxu0 0.0
        %3076 = vmatpush1.msra.mxu0 0.0
        %3077 = vmatprep.subr.mxu0 0.0
        %3078 = vmatpush1.msra.mxu0 0.0
        %3079 = vmatprep.subr.mxu0 0.0
        %3080 = vmatpush1.msra.mxu0 0.0
        %3081 = vmatprep.subr.mxu0 0.0
        %3082 = vmatpush1.msra.mxu0 0.0
        %3083 = vmatprep.subr.mxu0 0.0
        %3084 = vmatpush1.msra.mxu0 0.0
        %3085 = vmatprep.subr.mxu0 0.0
        %3086 = vmatpush1.msra.mxu0 0.0
        %3087 = vmatprep.subr.mxu0 0.0
        %3088 = vmatpush1.msra.mxu0 0.0
        %3089 = vmatprep.mubr.f32.mxu0 0.0
        %3090 = vmatmul.mubr.f32.gmra.mrb[0].mxu0 %v3007
        %v3091 = vpop.f32.mrb[0].mxu0
        %v3092 = vadd.f32 0.0, %v3091
        %v3093 = vpop.f32.mrb[0].mxu0
        %3094 = vmatprep.mubr.f32.mxu0 0.0
        %3095 = vmatmul.mubr.f32.gmra.mrb[0].mxu0 %v3010
        %v3096 = vpop.f32.mrb[0].mxu0
        %v3097 = vadd.f32 0.0, %v3096
        %v3098 = vpop.f32.mrb[0].mxu0
        %3099 = vmatprep.mubr.f32.mxu0 0.0
        %3100 = vmatmul.mubr.f32.gmra.mrb[0].mxu0 %v3013
        %v3101 = vpop.f32.mrb[0].mxu0
        %v3102 = vadd.f32 0.0, %v3101
        %v3103 = vpop.f32.mrb[0].mxu0
        %3104 = vmatprep.mubr.f32.mxu0 0.0
        %3105 = vmatmul.mubr.f32.gmra.mrb[0].mxu0 %v3016
        %v3106 = vpop.f32.mrb[0].mxu0
        %v3107 = vadd.f32 0.0, %v3106
        %v3108 = vpop.f32.mrb[0].mxu0
        %3109 = vmatprep.mubr.f32.mxu0 0.0
        %3110 = vmatmul.mubr.f32.gmra.mrb[0].mxu0 %v3019
        %v3111 = vpop.f32.mrb[0].mxu0
        %v3112 = vadd.f32 0.0, %v3111
        %v3113 = vpop.f32.mrb[0].mxu0
        %3114 = vdwg.mxu0
        %v3116 = vsel %vm3005, %v1775, 0
        %v3119 = vsel %vm3005, %v1777, 0
        %v3122 = vsel %vm3005, %v1779, 0
        %v3125 = vsel %vm3005, %v1781, 0
        %v3128 = vsel %vm3005, %v1783, 0
        %3130 = vmatprep.subr.mxu0 0.0
        %3131 = vmatpush1.msra.mxu0 %v2996
        %3132 = vmatprep.subr.mxu0 0.0
        %3133 = vmatpush1.msra.mxu0 %v2997
        %3134 = vmatprep.subr.mxu0 0.0
        %3135 = vmatpush1.msra.mxu0 %v2998
        %3136 = vmatprep.subr.mxu0 0.0
        %3137 = vmatpush1.msra.mxu0 %v2999
        %3138 = vmatprep.subr.mxu0 0.0
        %3139 = vmatpush1.msra.mxu0 %v3000
        %3140 = vmatprep.subr.mxu0 0.0
        %3141 = vmatpush1.msra.mxu0 %v3001
        %3142 = vmatprep.subr.mxu0 0.0
        %3143 = vmatpush1.msra.mxu0 %v3002
        %3144 = vmatprep.subr.mxu0 0.0
        %3145 = vmatpush1.msra.mxu0 %v3003
        %3146 = vmatprep.subr.mxu0 0.0
        %3147 = vmatpush1.msra.mxu0 %v3023
        %3148 = vmatprep.subr.mxu0 0.0
        %3149 = vmatpush1.msra.mxu0 0.0
        %3150 = vmatprep.subr.mxu0 0.0
        %3151 = vmatpush1.msra.mxu0 0.0
        %3152 = vmatprep.subr.mxu0 0.0
        %3153 = vmatpush1.msra.mxu0 0.0
        %3154 = vmatprep.subr.mxu0 0.0
        %3155 = vmatpush1.msra.mxu0 0.0
        %3156 = vmatprep.subr.mxu0 0.0
        %3157 = vmatpush1.msra.mxu0 0.0
        %3158 = vmatprep.subr.mxu0 0.0
        %3159 = vmatpush1.msra.mxu0 0.0
        %3160 = vmatprep.subr.mxu0 0.0
        %3161 = vmatpush1.msra.mxu0 0.0
        %3162 = vmatprep.subr.mxu0 0.0
        %3163 = vmatpush1.msra.mxu0 0.0
        %3164 = vmatprep.subr.mxu0 0.0
        %3165 = vmatpush1.msra.mxu0 0.0
        %3166 = vmatprep.subr.mxu0 0.0
        %3167 = vmatpush1.msra.mxu0 0.0
        %3168 = vmatprep.subr.mxu0 0.0
        %3169 = vmatpush1.msra.mxu0 0.0
        %3170 = vmatprep.subr.mxu0 0.0
        %3171 = vmatpush1.msra.mxu0 0.0
        %3172 = vmatprep.subr.mxu0 0.0
        %3173 = vmatpush1.msra.mxu0 0.0
        %3174 = vmatprep.subr.mxu0 0.0
        %3175 = vmatpush1.msra.mxu0 0.0
        %3176 = vmatprep.subr.mxu0 0.0
        %3177 = vmatpush1.msra.mxu0 0.0
        %3178 = vmatprep.subr.mxu0 0.0
        %3179 = vmatpush1.msra.mxu0 0.0
        %3180 = vmatprep.subr.mxu0 0.0
        %3181 = vmatpush1.msra.mxu0 0.0
        %3182 = vmatprep.subr.mxu0 0.0
        %3183 = vmatpush1.msra.mxu0 0.0
        %3184 = vmatprep.subr.mxu0 0.0
        %3185 = vmatpush1.msra.mxu0 0.0
        %3186 = vmatprep.subr.mxu0 0.0
        %3187 = vmatpush1.msra.mxu0 0.0
        %3188 = vmatprep.subr.mxu0 0.0
        %3189 = vmatpush1.msra.mxu0 0.0
        %3190 = vmatprep.subr.mxu0 0.0
        %3191 = vmatpush1.msra.mxu0 0.0
        %3192 = vmatprep.subr.mxu0 0.0
        %3193 = vmatpush1.msra.mxu0 0.0
        %3194 = vmatprep.mubr.f32.mxu0 0.0
        %3195 = vmatmul.mubr.f32.gmra.mrb[0].mxu0 %v3116
        %v3196 = vpop.f32.mrb[0].mxu0
        %v3197 = vadd.f32 0.0, %v3196
        %v3198 = vpop.f32.mrb[0].mxu0
        %3199 = vmatprep.mubr.f32.mxu0 0.0
        %3200 = vmatmul.mubr.f32.gmra.mrb[0].mxu0 %v3119
        %v3201 = vpop.f32.mrb[0].mxu0
        %v3202 = vadd.f32 0.0, %v3201
        %v3203 = vpop.f32.mrb[0].mxu0
        %3204 = vmatprep.mubr.f32.mxu0 0.0
        %3205 = vmatmul.mubr.f32.gmra.mrb[0].mxu0 %v3122
        %v3206 = vpop.f32.mrb[0].mxu0
        %v3207 = vadd.f32 0.0, %v3206
        %v3208 = vpop.f32.mrb[0].mxu0
        %3209 = vmatprep.mubr.f32.mxu0 0.0
        %3210 = vmatmul.mubr.f32.gmra.mrb[0].mxu0 %v3125
        %v3211 = vpop.f32.mrb[0].mxu0
        %v3212 = vadd.f32 0.0, %v3211
        %v3213 = vpop.f32.mrb[0].mxu0
        %3214 = vmatprep.mubr.f32.mxu0 0.0
        %3215 = vmatmul.mubr.f32.gmra.mrb[0].mxu0 %v3128
        %v3216 = vpop.f32.mrb[0].mxu0
        %v3217 = vadd.f32 0.0, %v3216
        %v3218 = vpop.f32.mrb[0].mxu0
        %3219 = vdwg.mxu0
        %v3220 = vmax.f32 %v3092, %v3197
        %v3221 = vmax.f32 %v3097, %v3202
        %v3222 = vmax.f32 %v3102, %v3207
        %v3223 = vmax.f32 %v3107, %v3212
        %v3224 = vmax.f32 %v3112, %v3217
        %v3225 = vpack.c.bf16 %v3221, %v3220
        %v3226 = vpack.c.bf16 %v3223, %v3222
        %v3227 = vld [vmem:[%s7] sm:$0xf]
        %v3228 = vld [vmem:[%s7 + $0x4] sm:$0xf]
        %v3229 = vld [vmem:[%s7 + $0x8] sm:$0xf]
        %v3230 = vld [vmem:[%s7 + $0xc] sm:$0xf]
        %v3231 = vld [vmem:[%s7 + $0x10] sm:$0xf]
        %v3232 = vld [vmem:[%s7 + $0x14] sm:$0xf]
        %v3233 = vld [vmem:[%s7 + $0x18] sm:$0xf]
        %v3234 = vld [vmem:[%s7 + $0x1c] sm:$0xf]
        %v3235 = vld [vmem:[%s7 + $0x20] sm:$0xf]
        %v3236 = vld [vmem:[%s7 + $0x24] sm:$0xf]
        %v3237 = vld [vmem:[%s7 + $0x28] sm:$0xf]
        %v3238 = vld [vmem:[%s7 + $0x2c] sm:$0xf]
        %v3239 = vld [vmem:[%s7 + $0x30] sm:$0xf]
        %v3240 = vld [vmem:[%s7 + $0x34] sm:$0xf]
        %v3241 = vld [vmem:[%s7 + $0x38] sm:$0xf]
        %v3242 = vld [vmem:[%s7 + $0x3c] sm:$0xf]
        %s3243 = scalar_lea.vmem %s7, 64
        %v3244 = vld [vmem:[%s3243] sm:$0xf]
        %v3245 = vld [vmem:[%s3243 + $0x4] sm:$0xf]
        %v3246 = vld [vmem:[%s3243 + $0x8] sm:$0xf]
        %v3247 = vld [vmem:[%s3243 + $0xc] sm:$0xf]
        %v3248 = vld [vmem:[%s3243 + $0x10] sm:$0xf]
        %v3249 = vld [vmem:[%s3243 + $0x14] sm:$0xf]
        %v3250 = vld [vmem:[%s3243 + $0x18] sm:$0xf]
        %v3251 = vld [vmem:[%s3243 + $0x1c] sm:$0xf]
        %v3252 = vld [vmem:[%s3243 + $0x20] sm:$0xf]
        %v3253 = vld [vmem:[%s3243 + $0x24] sm:$0xf]
        %v3254 = vld [vmem:[%s3243 + $0x28] sm:$0xf]
        %v3255 = vld [vmem:[%s3243 + $0x2c] sm:$0xf]
        %v3256 = vld [vmem:[%s3243 + $0x30] sm:$0xf]
        %v3257 = vld [vmem:[%s3243 + $0x34] sm:$0xf]
        %v3258 = vld [vmem:[%s3243 + $0x38] sm:$0xf]
        %v3259 = vld [vmem:[%s3243 + $0x3c] sm:$0xf]
        %v3261 = vshrl.u32 %v3225, 16
        %v3263 = vshll.u32 %v3225, 16
        %v3265 = vrot.slane %v3263, 1
        %v3266 = vor.u32 %v3261, %v3265
        %v3268 = vshll.u32 %v3226, 16
        %v3270 = vrot.slane %v3268, 1
        %v3271 = vsel %vm525, %v3266, %v3270
        %v3272 = vshrl.u32 %v3226, 16
        %v3274 = vor.u32 %v3272, %v3270
        %v3293 = vunpack.c.l.b16 %v3244
        %v3294 = vunpack.c.l.b16 %v3245
        %v3295 = vunpack.c.l.b16 %v3246
        %v3296 = vunpack.c.l.b16 %v3247
        %v3297 = vunpack.c.l.b16 %v3248
        %v3298 = vunpack.c.l.b16 %v3249
        %v3299 = vunpack.c.l.b16 %v3250
        %v3300 = vunpack.c.l.b16 %v3251
        %v3301 = vunpack.c.l.b16 %v3252
        %v3302 = vunpack.c.l.b16 %v3253
        %v3303 = vunpack.c.l.b16 %v3254
        %v3304 = vunpack.c.l.b16 %v3255
        %v3305 = vunpack.c.l.b16 %v3256
        %v3306 = vunpack.c.l.b16 %v3257
        %v3307 = vunpack.c.l.b16 %v3258
        %v3308 = vunpack.c.l.b16 %v3259
        %v3309 = vpack.c.b16 %v3294, %v3293
        %v3310 = vpack.c.b16 %v3296, %v3295
        %v3311 = vpack.c.b16 %v3298, %v3297
        %v3312 = vpack.c.b16 %v3300, %v3299
        %v3313 = vpack.c.b16 %v3302, %v3301
        %v3314 = vpack.c.b16 %v3304, %v3303
        %v3315 = vpack.c.b16 %v3306, %v3305
        %v3316 = vpack.c.b16 %v3308, %v3307
        %3325 = vmatprep.subr.bf16.mxu0 0
        %3326 = vmatpush1.bf16.msra.mxu0 %v3309
        %3327 = vmatprep.subr.bf16.mxu0 0
        %3328 = vmatpush1.bf16.msra.mxu0 %v3310
        %3329 = vmatprep.subr.bf16.mxu0 0
        %3330 = vmatpush1.bf16.msra.mxu0 %v3311
        %3331 = vmatprep.subr.bf16.mxu0 0
        %3332 = vmatpush1.bf16.msra.mxu0 %v3312
        %3333 = vmatprep.subr.bf16.mxu0 0
        %3334 = vmatpush1.bf16.msra.mxu0 %v3313
        %3335 = vmatprep.subr.bf16.mxu0 0
        %3336 = vmatpush1.bf16.msra.mxu0 %v3314
        %3337 = vmatprep.subr.bf16.mxu0 0
        %3338 = vmatpush1.bf16.msra.mxu0 %v3315
        %3339 = vmatprep.subr.bf16.mxu0 0
        %3340 = vmatpush1.bf16.msra.mxu0 %v3316
        %3341 = vmatprep.subr.bf16.mxu0 0
        %3342 = vmatpush1.bf16.msra.mxu0 0
        %3343 = vmatprep.subr.bf16.mxu0 0
        %3344 = vmatpush1.bf16.msra.mxu0 0
        %3345 = vmatprep.subr.bf16.mxu0 0
        %3346 = vmatpush1.bf16.msra.mxu0 0
        %3347 = vmatprep.subr.bf16.mxu0 0
        %3348 = vmatpush1.bf16.msra.mxu0 0
        %3349 = vmatprep.subr.bf16.mxu0 0
        %3350 = vmatpush1.bf16.msra.mxu0 0
        %3351 = vmatprep.subr.bf16.mxu0 0
        %3352 = vmatpush1.bf16.msra.mxu0 0
        %3353 = vmatprep.subr.bf16.mxu0 0
        %3354 = vmatpush1.bf16.msra.mxu0 0
        %3355 = vmatprep.subr.bf16.mxu0 0
        %3356 = vmatpush1.bf16.msra.mxu0 0
        %3357 = vmatprep.mubr.bf16.mxu0 0
        %3358 = vmatmul.mubr.bf16.gmra.mrb[0].mxu0 %v3271
        %v3359 = vpop.f32.mrb[0].mxu0
        %v3360 = vadd.f32 0.0, %v3359
        %v3361 = vpop.f32.mrb[0].mxu0
        %v3362 = vpop.f32.mrb[0].mxu0
        %v3363 = vadd.f32 0.0, %v3362
        %v3364 = vpop.f32.mrb[0].mxu0
        %3365 = vmatprep.mubr.bf16.mxu0 0
        %3366 = vmatmul.mubr.bf16.gmra.mrb[0].mxu0 %v3274
        %v3367 = vpop.f32.mrb[0].mxu0
        %v3368 = vadd.f32 0.0, %v3367
        %v3369 = vpop.f32.mrb[0].mxu0
        %v3370 = vpop.f32.mrb[0].mxu0
        %v3371 = vadd.f32 0.0, %v3370
        %v3372 = vpop.f32.mrb[0].mxu0
        %3373 = vdwg.mxu0
        %v3390 = vunpack.c.l.b16 %v3227
        %v3391 = vunpack.c.l.b16 %v3228
        %v3392 = vunpack.c.l.b16 %v3229
        %v3393 = vunpack.c.l.b16 %v3230
        %v3394 = vunpack.c.l.b16 %v3231
        %v3395 = vunpack.c.l.b16 %v3232
        %v3396 = vunpack.c.l.b16 %v3233
        %v3397 = vunpack.c.l.b16 %v3234
        %v3398 = vunpack.c.l.b16 %v3235
        %v3399 = vunpack.c.l.b16 %v3236
        %v3400 = vunpack.c.l.b16 %v3237
        %v3401 = vunpack.c.l.b16 %v3238
        %v3402 = vunpack.c.l.b16 %v3239
        %v3403 = vunpack.c.l.b16 %v3240
        %v3404 = vunpack.c.l.b16 %v3241
        %v3405 = vunpack.c.l.b16 %v3242
        %v3406 = vpack.c.b16 %v3391, %v3390
        %v3407 = vpack.c.b16 %v3393, %v3392
        %v3408 = vpack.c.b16 %v3395, %v3394
        %v3409 = vpack.c.b16 %v3397, %v3396
        %v3410 = vpack.c.b16 %v3399, %v3398
        %v3411 = vpack.c.b16 %v3401, %v3400
        %v3412 = vpack.c.b16 %v3403, %v3402
        %v3413 = vpack.c.b16 %v3405, %v3404
        %3422 = vmatprep.subr.bf16.mxu0 0
        %3423 = vmatpush1.bf16.msra.mxu0 %v3406
        %3424 = vmatprep.subr.bf16.mxu0 0
        %3425 = vmatpush1.bf16.msra.mxu0 %v3407
        %3426 = vmatprep.subr.bf16.mxu0 0
        %3427 = vmatpush1.bf16.msra.mxu0 %v3408
        %3428 = vmatprep.subr.bf16.mxu0 0
        %3429 = vmatpush1.bf16.msra.mxu0 %v3409
        %3430 = vmatprep.subr.bf16.mxu0 0
        %3431 = vmatpush1.bf16.msra.mxu0 %v3410
        %3432 = vmatprep.subr.bf16.mxu0 0
        %3433 = vmatpush1.bf16.msra.mxu0 %v3411
        %3434 = vmatprep.subr.bf16.mxu0 0
        %3435 = vmatpush1.bf16.msra.mxu0 %v3412
        %3436 = vmatprep.subr.bf16.mxu0 0
        %3437 = vmatpush1.bf16.msra.mxu0 %v3413
        %3438 = vmatprep.subr.bf16.mxu0 0
        %3439 = vmatpush1.bf16.msra.mxu0 0
        %3440 = vmatprep.subr.bf16.mxu0 0
        %3441 = vmatpush1.bf16.msra.mxu0 0
        %3442 = vmatprep.subr.bf16.mxu0 0
        %3443 = vmatpush1.bf16.msra.mxu0 0
        %3444 = vmatprep.subr.bf16.mxu0 0
        %3445 = vmatpush1.bf16.msra.mxu0 0
        %3446 = vmatprep.subr.bf16.mxu0 0
        %3447 = vmatpush1.bf16.msra.mxu0 0
        %3448 = vmatprep.subr.bf16.mxu0 0
        %3449 = vmatpush1.bf16.msra.mxu0 0
        %3450 = vmatprep.subr.bf16.mxu0 0
        %3451 = vmatpush1.bf16.msra.mxu0 0
        %3452 = vmatprep.subr.bf16.mxu0 0
        %3453 = vmatpush1.bf16.msra.mxu0 0
        %3454 = vmatprep.mubr.bf16.mxu0 0
        %3455 = vmatmul.mubr.bf16.gmra.mrb[0].mxu0 %v3225
        %v3456 = vpop.f32.mrb[0].mxu0
        %v3457 = vadd.f32 %v3360, %v3456
        %v3458 = vpop.f32.mrb[0].mxu0
        %v3459 = vpop.f32.mrb[0].mxu0
        %v3460 = vadd.f32 %v3363, %v3459
        %v3461 = vpop.f32.mrb[0].mxu0
        %3462 = vmatprep.mubr.bf16.mxu0 0
        %3463 = vmatmul.mubr.bf16.gmra.mrb[0].mxu0 %v3226
        %v3464 = vpop.f32.mrb[0].mxu0
        %v3465 = vadd.f32 %v3368, %v3464
        %v3466 = vpop.f32.mrb[0].mxu0
        %v3467 = vpop.f32.mrb[0].mxu0
        %v3468 = vadd.f32 %v3371, %v3467
        %v3469 = vpop.f32.mrb[0].mxu0
        %3470 = vdwg.mxu0
        %s3471 = scalar_lea.vmem %s7, 128
        %v3472 = vld [vmem:[%s3471] sm:$0xf]
        %v3473 = vld [vmem:[%s3471 + $0x4] sm:$0xf]
        %v3474 = vld [vmem:[%s3471 + $0x8] sm:$0xf]
        %v3475 = vld [vmem:[%s3471 + $0xc] sm:$0xf]
        %v3476 = vld [vmem:[%s3471 + $0x10] sm:$0xf]
        %v3477 = vld [vmem:[%s3471 + $0x14] sm:$0xf]
        %v3478 = vld [vmem:[%s3471 + $0x18] sm:$0xf]
        %v3479 = vld [vmem:[%s3471 + $0x1c] sm:$0xf]
        %v3480 = vld [vmem:[%s3471 + $0x20] sm:$0xf]
        %v3481 = vld [vmem:[%s3471 + $0x24] sm:$0xf]
        %v3482 = vld [vmem:[%s3471 + $0x28] sm:$0xf]
        %v3483 = vld [vmem:[%s3471 + $0x2c] sm:$0xf]
        %v3484 = vld [vmem:[%s3471 + $0x30] sm:$0xf]
        %v3485 = vld [vmem:[%s3471 + $0x34] sm:$0xf]
        %v3486 = vld [vmem:[%s3471 + $0x38] sm:$0xf]
        %v3487 = vld [vmem:[%s3471 + $0x3c] sm:$0xf]
        %v3490 = vrot.slane %v3225, 1
        %v3491 = vrot.slane %v3226, 1
        %v3492 = vsel %vm899, %v3490, %v3491
        %v3511 = vunpack.c.l.b16 %v3472
        %v3512 = vunpack.c.l.b16 %v3473
        %v3513 = vunpack.c.l.b16 %v3474
        %v3514 = vunpack.c.l.b16 %v3475
        %v3515 = vunpack.c.l.b16 %v3476
        %v3516 = vunpack.c.l.b16 %v3477
        %v3517 = vunpack.c.l.b16 %v3478
        %v3518 = vunpack.c.l.b16 %v3479
        %v3519 = vunpack.c.l.b16 %v3480
        %v3520 = vunpack.c.l.b16 %v3481
        %v3521 = vunpack.c.l.b16 %v3482
        %v3522 = vunpack.c.l.b16 %v3483
        %v3523 = vunpack.c.l.b16 %v3484
        %v3524 = vunpack.c.l.b16 %v3485
        %v3525 = vunpack.c.l.b16 %v3486
        %v3526 = vunpack.c.l.b16 %v3487
        %v3527 = vpack.c.b16 %v3512, %v3511
        %v3528 = vpack.c.b16 %v3514, %v3513
        %v3529 = vpack.c.b16 %v3516, %v3515
        %v3530 = vpack.c.b16 %v3518, %v3517
        %v3531 = vpack.c.b16 %v3520, %v3519
        %v3532 = vpack.c.b16 %v3522, %v3521
        %v3533 = vpack.c.b16 %v3524, %v3523
        %v3534 = vpack.c.b16 %v3526, %v3525
        %3543 = vmatprep.subr.bf16.mxu0 0
        %3544 = vmatpush1.bf16.msra.mxu0 %v3527
        %3545 = vmatprep.subr.bf16.mxu0 0
        %3546 = vmatpush1.bf16.msra.mxu0 %v3528
        %3547 = vmatprep.subr.bf16.mxu0 0
        %3548 = vmatpush1.bf16.msra.mxu0 %v3529
        %3549 = vmatprep.subr.bf16.mxu0 0
        %3550 = vmatpush1.bf16.msra.mxu0 %v3530
        %3551 = vmatprep.subr.bf16.mxu0 0
        %3552 = vmatpush1.bf16.msra.mxu0 %v3531
        %3553 = vmatprep.subr.bf16.mxu0 0
        %3554 = vmatpush1.bf16.msra.mxu0 %v3532
        %3555 = vmatprep.subr.bf16.mxu0 0
        %3556 = vmatpush1.bf16.msra.mxu0 %v3533
        %3557 = vmatprep.subr.bf16.mxu0 0
        %3558 = vmatpush1.bf16.msra.mxu0 %v3534
        %3559 = vmatprep.subr.bf16.mxu0 0
        %3560 = vmatpush1.bf16.msra.mxu0 0
        %3561 = vmatprep.subr.bf16.mxu0 0
        %3562 = vmatpush1.bf16.msra.mxu0 0
        %3563 = vmatprep.subr.bf16.mxu0 0
        %3564 = vmatpush1.bf16.msra.mxu0 0
        %3565 = vmatprep.subr.bf16.mxu0 0
        %3566 = vmatpush1.bf16.msra.mxu0 0
        %3567 = vmatprep.subr.bf16.mxu0 0
        %3568 = vmatpush1.bf16.msra.mxu0 0
        %3569 = vmatprep.subr.bf16.mxu0 0
        %3570 = vmatpush1.bf16.msra.mxu0 0
        %3571 = vmatprep.subr.bf16.mxu0 0
        %3572 = vmatpush1.bf16.msra.mxu0 0
        %3573 = vmatprep.subr.bf16.mxu0 0
        %3574 = vmatpush1.bf16.msra.mxu0 0
        %3575 = vmatprep.mubr.bf16.mxu0 0
        %3576 = vmatmul.mubr.bf16.gmra.mrb[0].mxu0 %v3492
        %v3577 = vpop.f32.mrb[0].mxu0
        %v3578 = vadd.f32 0.0, %v3577
        %v3579 = vpop.f32.mrb[0].mxu0
        %v3580 = vpop.f32.mrb[0].mxu0
        %v3581 = vadd.f32 0.0, %v3580
        %v3582 = vpop.f32.mrb[0].mxu0
        %3583 = vmatprep.mubr.bf16.mxu0 0
        %3584 = vmatmul.mubr.bf16.gmra.mrb[0].mxu0 %v3491
        %v3585 = vpop.f32.mrb[0].mxu0
        %v3586 = vadd.f32 0.0, %v3585
        %v3587 = vpop.f32.mrb[0].mxu0
        %v3588 = vpop.f32.mrb[0].mxu0
        %v3589 = vadd.f32 0.0, %v3588
        %v3590 = vpop.f32.mrb[0].mxu0
        %3591 = vdwg.mxu0
        %v3592 = vadd.f32 %v3457, %v3578
        %v3593 = vadd.f32 %v3460, %v3581
        %v3594 = vadd.f32 %v3465, %v3586
        %v3595 = vadd.f32 %v3468, %v3589
        %v3596 = vpack.c.bf16 %v3224, %v3224
        %s3597 = scalar_lea.vmem %s7, 192
        %v3598 = vld [vmem:[%s3597] sm:$0xf]
        %v3599 = vld [vmem:[%s3597 + $0x4] sm:$0xf]
        %v3600 = vld [vmem:[%s3597 + $0x8] sm:$0xf]
        %v3601 = vld [vmem:[%s3597 + $0xc] sm:$0xf]
        %v3602 = vld [vmem:[%s3597 + $0x10] sm:$0xf]
        %v3603 = vld [vmem:[%s3597 + $0x14] sm:$0xf]
        %v3604 = vld [vmem:[%s3597 + $0x18] sm:$0xf]
        %v3605 = vld [vmem:[%s3597 + $0x1c] sm:$0xf]
        %v3606 = vld [vmem:[%s3597 + $0x20] sm:$0xf]
        %v3607 = vld [vmem:[%s3597 + $0x24] sm:$0xf]
        %v3608 = vld [vmem:[%s3597 + $0x28] sm:$0xf]
        %v3609 = vld [vmem:[%s3597 + $0x2c] sm:$0xf]
        %v3610 = vld [vmem:[%s3597 + $0x30] sm:$0xf]
        %v3611 = vld [vmem:[%s3597 + $0x34] sm:$0xf]
        %v3612 = vld [vmem:[%s3597 + $0x38] sm:$0xf]
        %v3613 = vld [vmem:[%s3597 + $0x3c] sm:$0xf]
        %v3614 = vrot.slane %v3261, 1
        %v3615 = vrot.slane %v3263, 2
        %v3616 = vor.u32 %v3614, %v3615
        %v3617 = vrot.slane %v3272, 1
        %v3618 = vrot.slane %v3268, 2
        %v3619 = vor.u32 %v3617, %v3618
        %v3620 = vsel %vm1085, %v3616, %v3619
        %v3622 = vshll.u32 %v3596, 16
        %v3624 = vrot.slane %v3622, 2
        %v3625 = vsel %vm1085, %v3619, %v3624
        %v3644 = vunpack.c.l.b16 %v3598
        %v3645 = vunpack.c.l.b16 %v3599
        %v3646 = vunpack.c.l.b16 %v3600
        %v3647 = vunpack.c.l.b16 %v3601
        %v3648 = vunpack.c.l.b16 %v3602
        %v3649 = vunpack.c.l.b16 %v3603
        %v3650 = vunpack.c.l.b16 %v3604
        %v3651 = vunpack.c.l.b16 %v3605
        %v3652 = vunpack.c.l.b16 %v3606
        %v3653 = vunpack.c.l.b16 %v3607
        %v3654 = vunpack.c.l.b16 %v3608
        %v3655 = vunpack.c.l.b16 %v3609
        %v3656 = vunpack.c.l.b16 %v3610
        %v3657 = vunpack.c.l.b16 %v3611
        %v3658 = vunpack.c.l.b16 %v3612
        %v3659 = vunpack.c.l.b16 %v3613
        %v3660 = vpack.c.b16 %v3645, %v3644
        %v3661 = vpack.c.b16 %v3647, %v3646
        %v3662 = vpack.c.b16 %v3649, %v3648
        %v3663 = vpack.c.b16 %v3651, %v3650
        %v3664 = vpack.c.b16 %v3653, %v3652
        %v3665 = vpack.c.b16 %v3655, %v3654
        %v3666 = vpack.c.b16 %v3657, %v3656
        %v3667 = vpack.c.b16 %v3659, %v3658
        %3676 = vmatprep.subr.bf16.mxu0 0
        %3677 = vmatpush1.bf16.msra.mxu0 %v3660
        %3678 = vmatprep.subr.bf16.mxu0 0
        %3679 = vmatpush1.bf16.msra.mxu0 %v3661
        %3680 = vmatprep.subr.bf16.mxu0 0
        %3681 = vmatpush1.bf16.msra.mxu0 %v3662
        %3682 = vmatprep.subr.bf16.mxu0 0
        %3683 = vmatpush1.bf16.msra.mxu0 %v3663
        %3684 = vmatprep.subr.bf16.mxu0 0
        %3685 = vmatpush1.bf16.msra.mxu0 %v3664
        %3686 = vmatprep.subr.bf16.mxu0 0
        %3687 = vmatpush1.bf16.msra.mxu0 %v3665
        %3688 = vmatprep.subr.bf16.mxu0 0
        %3689 = vmatpush1.bf16.msra.mxu0 %v3666
        %3690 = vmatprep.subr.bf16.mxu0 0
        %3691 = vmatpush1.bf16.msra.mxu0 %v3667
        %3692 = vmatprep.subr.bf16.mxu0 0
        %3693 = vmatpush1.bf16.msra.mxu0 0
        %3694 = vmatprep.subr.bf16.mxu0 0
        %3695 = vmatpush1.bf16.msra.mxu0 0
        %3696 = vmatprep.subr.bf16.mxu0 0
        %3697 = vmatpush1.bf16.msra.mxu0 0
        %3698 = vmatprep.subr.bf16.mxu0 0
        %3699 = vmatpush1.bf16.msra.mxu0 0
        %3700 = vmatprep.subr.bf16.mxu0 0
        %3701 = vmatpush1.bf16.msra.mxu0 0
        %3702 = vmatprep.subr.bf16.mxu0 0
        %3703 = vmatpush1.bf16.msra.mxu0 0
        %3704 = vmatprep.subr.bf16.mxu0 0
        %3705 = vmatpush1.bf16.msra.mxu0 0
        %3706 = vmatprep.subr.bf16.mxu0 0
        %3707 = vmatpush1.bf16.msra.mxu0 0
        %3708 = vmatprep.mubr.bf16.mxu0 0
        %3709 = vmatmul.mubr.bf16.gmra.mrb[0].mxu0 %v3620
        %v3710 = vpop.f32.mrb[0].mxu0
        %v3711 = vadd.f32 0.0, %v3710
        %v3712 = vpop.f32.mrb[0].mxu0
        %v3713 = vpop.f32.mrb[0].mxu0
        %v3714 = vadd.f32 0.0, %v3713
        %v3715 = vpop.f32.mrb[0].mxu0
        %3716 = vmatprep.mubr.bf16.mxu0 0
        %3717 = vmatmul.mubr.bf16.gmra.mrb[0].mxu0 %v3625
        %v3718 = vpop.f32.mrb[0].mxu0
        %v3719 = vadd.f32 0.0, %v3718
        %v3720 = vpop.f32.mrb[0].mxu0
        %v3721 = vpop.f32.mrb[0].mxu0
        %v3722 = vadd.f32 0.0, %v3721
        %v3723 = vpop.f32.mrb[0].mxu0
        %3724 = vdwg.mxu0
        %v3725 = vadd.f32 %v3592, %v3711
        %v3726 = vadd.f32 %v3593, %v3714
        %v3727 = vadd.f32 %v3594, %v3719
        %v3728 = vadd.f32 %v3595, %v3722
        %s3729 = scalar_lea.vmem %s7, 256
        %v3730 = vld [vmem:[%s3729] sm:$0xf]
        %v3731 = vld [vmem:[%s3729 + $0x4] sm:$0xf]
        %v3732 = vld [vmem:[%s3729 + $0x8] sm:$0xf]
        %v3733 = vld [vmem:[%s3729 + $0xc] sm:$0xf]
        %v3734 = vld [vmem:[%s3729 + $0x10] sm:$0xf]
        %v3735 = vld [vmem:[%s3729 + $0x14] sm:$0xf]
        %v3736 = vld [vmem:[%s3729 + $0x18] sm:$0xf]
        %v3737 = vld [vmem:[%s3729 + $0x1c] sm:$0xf]
        %v3738 = vld [vmem:[%s3729 + $0x20] sm:$0xf]
        %v3739 = vld [vmem:[%s3729 + $0x24] sm:$0xf]
        %v3740 = vld [vmem:[%s3729 + $0x28] sm:$0xf]
        %v3741 = vld [vmem:[%s3729 + $0x2c] sm:$0xf]
        %v3742 = vld [vmem:[%s3729 + $0x30] sm:$0xf]
        %v3743 = vld [vmem:[%s3729 + $0x34] sm:$0xf]
        %v3744 = vld [vmem:[%s3729 + $0x38] sm:$0xf]
        %v3745 = vld [vmem:[%s3729 + $0x3c] sm:$0xf]
        %v3747 = vrot.slane %v3225, 2
        %v3748 = vrot.slane %v3226, 2
        %v3749 = vsel %vm1291, %v3747, %v3748
        %v3750 = vrot.slane %v3596, 2
        %v3751 = vsel %vm1291, %v3748, %v3750
        %v3770 = vunpack.c.l.b16 %v3730
        %v3771 = vunpack.c.l.b16 %v3731
        %v3772 = vunpack.c.l.b16 %v3732
        %v3773 = vunpack.c.l.b16 %v3733
        %v3774 = vunpack.c.l.b16 %v3734
        %v3775 = vunpack.c.l.b16 %v3735
        %v3776 = vunpack.c.l.b16 %v3736
        %v3777 = vunpack.c.l.b16 %v3737
        %v3778 = vunpack.c.l.b16 %v3738
        %v3779 = vunpack.c.l.b16 %v3739
        %v3780 = vunpack.c.l.b16 %v3740
        %v3781 = vunpack.c.l.b16 %v3741
        %v3782 = vunpack.c.l.b16 %v3742
        %v3783 = vunpack.c.l.b16 %v3743
        %v3784 = vunpack.c.l.b16 %v3744
        %v3785 = vunpack.c.l.b16 %v3745
        %v3786 = vpack.c.b16 %v3771, %v3770
        %v3787 = vpack.c.b16 %v3773, %v3772
        %v3788 = vpack.c.b16 %v3775, %v3774
        %v3789 = vpack.c.b16 %v3777, %v3776
        %v3790 = vpack.c.b16 %v3779, %v3778
        %v3791 = vpack.c.b16 %v3781, %v3780
        %v3792 = vpack.c.b16 %v3783, %v3782
        %v3793 = vpack.c.b16 %v3785, %v3784
        %3802 = vmatprep.subr.bf16.mxu0 0
        %3803 = vmatpush1.bf16.msra.mxu0 %v3786
        %3804 = vmatprep.subr.bf16.mxu0 0
        %3805 = vmatpush1.bf16.msra.mxu0 %v3787
        %3806 = vmatprep.subr.bf16.mxu0 0
        %3807 = vmatpush1.bf16.msra.mxu0 %v3788
        %3808 = vmatprep.subr.bf16.mxu0 0
        %3809 = vmatpush1.bf16.msra.mxu0 %v3789
        %3810 = vmatprep.subr.bf16.mxu0 0
        %3811 = vmatpush1.bf16.msra.mxu0 %v3790
        %3812 = vmatprep.subr.bf16.mxu0 0
        %3813 = vmatpush1.bf16.msra.mxu0 %v3791
        %3814 = vmatprep.subr.bf16.mxu0 0
        %3815 = vmatpush1.bf16.msra.mxu0 %v3792
        %3816 = vmatprep.subr.bf16.mxu0 0
        %3817 = vmatpush1.bf16.msra.mxu0 %v3793
        %3818 = vmatprep.subr.bf16.mxu0 0
        %3819 = vmatpush1.bf16.msra.mxu0 0
        %3820 = vmatprep.subr.bf16.mxu0 0
        %3821 = vmatpush1.bf16.msra.mxu0 0
        %3822 = vmatprep.subr.bf16.mxu0 0
        %3823 = vmatpush1.bf16.msra.mxu0 0
        %3824 = vmatprep.subr.bf16.mxu0 0
        %3825 = vmatpush1.bf16.msra.mxu0 0
        %3826 = vmatprep.subr.bf16.mxu0 0
        %3827 = vmatpush1.bf16.msra.mxu0 0
        %3828 = vmatprep.subr.bf16.mxu0 0
        %3829 = vmatpush1.bf16.msra.mxu0 0
        %3830 = vmatprep.subr.bf16.mxu0 0
        %3831 = vmatpush1.bf16.msra.mxu0 0
        %3832 = vmatprep.subr.bf16.mxu0 0
        %3833 = vmatpush1.bf16.msra.mxu0 0
        %3834 = vmatprep.mubr.bf16.mxu0 0
        %3835 = vmatmul.mubr.bf16.gmra.mrb[0].mxu0 %v3749
        %v3836 = vpop.f32.mrb[0].mxu0
        %v3837 = vadd.f32 0.0, %v3836
        %v3838 = vpop.f32.mrb[0].mxu0
        %v3839 = vpop.f32.mrb[0].mxu0
        %v3840 = vadd.f32 0.0, %v3839
        %v3841 = vpop.f32.mrb[0].mxu0
        %3842 = vmatprep.mubr.bf16.mxu0 0
        %3843 = vmatmul.mubr.bf16.gmra.mrb[0].mxu0 %v3751
        %v3844 = vpop.f32.mrb[0].mxu0
        %v3845 = vadd.f32 0.0, %v3844
        %v3846 = vpop.f32.mrb[0].mxu0
        %v3847 = vpop.f32.mrb[0].mxu0
        %v3848 = vadd.f32 0.0, %v3847
        %v3849 = vpop.f32.mrb[0].mxu0
        %3850 = vdwg.mxu0
        %v3851 = vadd.f32 %v3725, %v3837
        %v3852 = vadd.f32 %v3726, %v3840
        %v3853 = vadd.f32 %v3727, %v3845
        %v3854 = vadd.f32 %v3728, %v3848
        %v3855 = vld [vmem:[%s8] sm:$0x1]
        %v3857 = vlaneseq
        %v3858 = vshrl.u32 %v3857, 7
        %v3859 = vsub.s32 0, %v3858
        %v3860 = vrot.slane %v3855, %v3859
        %v3862 = vmul.f32 %v3851, %v3860
        %v3863 = vmul.f32 %v3852, %v3860
        %v3864 = vmul.f32 %v3853, %v3860
        %v3865 = vmul.f32 %v3854, %v3860
        %v3866 = vld [vmem:[%s9] sm:$0x1]
        %v3868 = vlaneseq
        %v3869 = vshrl.u32 %v3868, 7
        %v3870 = vsub.s32 0, %v3869
        %v3871 = vrot.slane %v3866, %v3870
        %v3873 = vadd.f32 %v3862, %v3871
        %v3874 = vadd.f32 %v3863, %v3871
        %v3875 = vadd.f32 %v3864, %v3871
        %v3876 = vadd.f32 %v3865, %v3871
        %v3877 = vmin.f32 %v3873, 0.0
        %v3878 = vmin.f32 %v3874, 0.0
        %v3879 = vmin.f32 %v3875, 0.0
        %v3880 = vmin.f32 %v3876, 0.0
        %vm3881 = vcmp.gt.f32.partialorder %v3873, 0.0
        %vm3882 = vcmp.gt.f32.partialorder %v3874, 0.0
        %vm3883 = vcmp.gt.f32.partialorder %v3875, 0.0
        %vm3884 = vcmp.gt.f32.partialorder %v3876, 0.0
        %v3885 = vmul.f32 %v3877, 1.442695
        %v3886 = vpow.pop %v3885
        %v3887 = vmul.f32 %v3878, 1.442695
        %v3888 = vpow.pop %v3887
        %v3889 = vmul.f32 %v3879, 1.442695
        %v3890 = vpow.pop %v3889
        %v3891 = vmul.f32 %v3880, 1.442695
        %v3892 = vpow.pop %v3891
        %v3893 = vsub.f32 %v3886, 1.0
        %v3894 = vsub.f32 %v3888, 1.0
        %v3895 = vsub.f32 %v3890, 1.0
        %v3896 = vsub.f32 %v3892, 1.0
        %v3897 = vsel %vm3881, %v3873, %v3893
        %v3898 = vsel %vm3882, %v3874, %v3894
        %v3899 = vsel %vm3883, %v3875, %v3895
        %v3900 = vsel %vm3884, %v3876, %v3896
        %vm3901 = vcmask 244736
        %v3902 = vsel %vm3901, %v1705, 0
        %v3904 = vsel %vm3901, %v1707, 0
        %vm3906 = vcmask 1045504
        %v3908 = vsel %vm3906, %v3900, 0
        %3910 = vmatprep.subr.mxu0 0.0
        %3911 = vmatpush1.msra.mxu0 %v3897
        %3912 = vmatprep.subr.mxu0 0.0
        %3913 = vmatpush1.msra.mxu0 %v3898
        %3914 = vmatprep.subr.mxu0 0.0
        %3915 = vmatpush1.msra.mxu0 %v3899
        %3916 = vmatprep.subr.mxu0 0.0
        %3917 = vmatpush1.msra.mxu0 %v3908
        %3918 = vmatprep.subr.mxu0 0.0
        %3919 = vmatpush1.msra.mxu0 0.0
        %3920 = vmatprep.subr.mxu0 0.0
        %3921 = vmatpush1.msra.mxu0 0.0
        %3922 = vmatprep.subr.mxu0 0.0
        %3923 = vmatpush1.msra.mxu0 0.0
        %3924 = vmatprep.subr.mxu0 0.0
        %3925 = vmatpush1.msra.mxu0 0.0
        %3926 = vmatprep.subr.mxu0 0.0
        %3927 = vmatpush1.msra.mxu0 0.0
        %3928 = vmatprep.subr.mxu0 0.0
        %3929 = vmatpush1.msra.mxu0 0.0
        %3930 = vmatprep.subr.mxu0 0.0
        %3931 = vmatpush1.msra.mxu0 0.0
        %3932 = vmatprep.subr.mxu0 0.0
        %3933 = vmatpush1.msra.mxu0 0.0
        %3934 = vmatprep.subr.mxu0 0.0
        %3935 = vmatpush1.msra.mxu0 0.0
        %3936 = vmatprep.subr.mxu0 0.0
        %3937 = vmatpush1.msra.mxu0 0.0
        %3938 = vmatprep.subr.mxu0 0.0
        %3939 = vmatpush1.msra.mxu0 0.0
        %3940 = vmatprep.subr.mxu0 0.0
        %3941 = vmatpush1.msra.mxu0 0.0
        %3942 = vmatprep.subr.mxu0 0.0
        %3943 = vmatpush1.msra.mxu0 0.0
        %3944 = vmatprep.subr.mxu0 0.0
        %3945 = vmatpush1.msra.mxu0 0.0
        %3946 = vmatprep.subr.mxu0 0.0
        %3947 = vmatpush1.msra.mxu0 0.0
        %3948 = vmatprep.subr.mxu0 0.0
        %3949 = vmatpush1.msra.mxu0 0.0
        %3950 = vmatprep.subr.mxu0 0.0
        %3951 = vmatpush1.msra.mxu0 0.0
        %3952 = vmatprep.subr.mxu0 0.0
        %3953 = vmatpush1.msra.mxu0 0.0
        %3954 = vmatprep.subr.mxu0 0.0
        %3955 = vmatpush1.msra.mxu0 0.0
        %3956 = vmatprep.subr.mxu0 0.0
        %3957 = vmatpush1.msra.mxu0 0.0
        %3958 = vmatprep.subr.mxu0 0.0
        %3959 = vmatpush1.msra.mxu0 0.0
        %3960 = vmatprep.subr.mxu0 0.0
        %3961 = vmatpush1.msra.mxu0 0.0
        %3962 = vmatprep.subr.mxu0 0.0
        %3963 = vmatpush1.msra.mxu0 0.0
        %3964 = vmatprep.subr.mxu0 0.0
        %3965 = vmatpush1.msra.mxu0 0.0
        %3966 = vmatprep.subr.mxu0 0.0
        %3967 = vmatpush1.msra.mxu0 0.0
        %3968 = vmatprep.subr.mxu0 0.0
        %3969 = vmatpush1.msra.mxu0 0.0
        %3970 = vmatprep.subr.mxu0 0.0
        %3971 = vmatpush1.msra.mxu0 0.0
        %3972 = vmatprep.subr.mxu0 0.0
        %3973 = vmatpush1.msra.mxu0 0.0
        %3974 = vmatprep.mubr.f32.mxu0 0.0
        %3975 = vmatmul.mubr.f32.gmra.mrb[0].mxu0 %v3902
        %v3976 = vpop.f32.mrb[0].mxu0
        %v3977 = vadd.f32 0.0, %v3976
        %v3978 = vpop.f32.mrb[0].mxu0
        %3979 = vmatprep.mubr.f32.mxu0 0.0
        %3980 = vmatmul.mubr.f32.gmra.mrb[0].mxu0 %v3904
        %v3981 = vpop.f32.mrb[0].mxu0
        %v3982 = vadd.f32 0.0, %v3981
        %v3983 = vpop.f32.mrb[0].mxu0
        %3984 = vdwg.mxu0
        %v3985 = vsel %vm3901, %v1775, 0
        %v3987 = vsel %vm3901, %v1777, 0
        %3989 = vmatprep.subr.mxu0 0.0
        %3990 = vmatpush1.msra.mxu0 %v3897
        %3991 = vmatprep.subr.mxu0 0.0
        %3992 = vmatpush1.msra.mxu0 %v3898
        %3993 = vmatprep.subr.mxu0 0.0
        %3994 = vmatpush1.msra.mxu0 %v3899
        %3995 = vmatprep.subr.mxu0 0.0
        %3996 = vmatpush1.msra.mxu0 %v3908
        %3997 = vmatprep.subr.mxu0 0.0
        %3998 = vmatpush1.msra.mxu0 0.0
        %3999 = vmatprep.subr.mxu0 0.0
        %4000 = vmatpush1.msra.mxu0 0.0
        %4001 = vmatprep.subr.mxu0 0.0
        %4002 = vmatpush1.msra.mxu0 0.0
        %4003 = vmatprep.subr.mxu0 0.0
        %4004 = vmatpush1.msra.mxu0 0.0
        %4005 = vmatprep.subr.mxu0 0.0
        %4006 = vmatpush1.msra.mxu0 0.0
        %4007 = vmatprep.subr.mxu0 0.0
        %4008 = vmatpush1.msra.mxu0 0.0
        %4009 = vmatprep.subr.mxu0 0.0
        %4010 = vmatpush1.msra.mxu0 0.0
        %4011 = vmatprep.subr.mxu0 0.0
        %4012 = vmatpush1.msra.mxu0 0.0
        %4013 = vmatprep.subr.mxu0 0.0
        %4014 = vmatpush1.msra.mxu0 0.0
        %4015 = vmatprep.subr.mxu0 0.0
        %4016 = vmatpush1.msra.mxu0 0.0
        %4017 = vmatprep.subr.mxu0 0.0
        %4018 = vmatpush1.msra.mxu0 0.0
        %4019 = vmatprep.subr.mxu0 0.0
        %4020 = vmatpush1.msra.mxu0 0.0
        %4021 = vmatprep.subr.mxu0 0.0
        %4022 = vmatpush1.msra.mxu0 0.0
        %4023 = vmatprep.subr.mxu0 0.0
        %4024 = vmatpush1.msra.mxu0 0.0
        %4025 = vmatprep.subr.mxu0 0.0
        %4026 = vmatpush1.msra.mxu0 0.0
        %4027 = vmatprep.subr.mxu0 0.0
        %4028 = vmatpush1.msra.mxu0 0.0
        %4029 = vmatprep.subr.mxu0 0.0
        %4030 = vmatpush1.msra.mxu0 0.0
        %4031 = vmatprep.subr.mxu0 0.0
        %4032 = vmatpush1.msra.mxu0 0.0
        %4033 = vmatprep.subr.mxu0 0.0
        %4034 = vmatpush1.msra.mxu0 0.0
        %4035 = vmatprep.subr.mxu0 0.0
        %4036 = vmatpush1.msra.mxu0 0.0
        %4037 = vmatprep.subr.mxu0 0.0
        %4038 = vmatpush1.msra.mxu0 0.0
        %4039 = vmatprep.subr.mxu0 0.0
        %4040 = vmatpush1.msra.mxu0 0.0
        %4041 = vmatprep.subr.mxu0 0.0
        %4042 = vmatpush1.msra.mxu0 0.0
        %4043 = vmatprep.subr.mxu0 0.0
        %4044 = vmatpush1.msra.mxu0 0.0
        %4045 = vmatprep.subr.mxu0 0.0
        %4046 = vmatpush1.msra.mxu0 0.0
        %4047 = vmatprep.subr.mxu0 0.0
        %4048 = vmatpush1.msra.mxu0 0.0
        %4049 = vmatprep.subr.mxu0 0.0
        %4050 = vmatpush1.msra.mxu0 0.0
        %4051 = vmatprep.subr.mxu0 0.0
        %4052 = vmatpush1.msra.mxu0 0.0
        %4053 = vmatprep.mubr.f32.mxu0 0.0
        %4054 = vmatmul.mubr.f32.gmra.mrb[0].mxu0 %v3985
        %v4055 = vpop.f32.mrb[0].mxu0
        %v4056 = vadd.f32 0.0, %v4055
        %v4057 = vpop.f32.mrb[0].mxu0
        %4058 = vmatprep.mubr.f32.mxu0 0.0
        %4059 = vmatmul.mubr.f32.gmra.mrb[0].mxu0 %v3987
        %v4060 = vpop.f32.mrb[0].mxu0
        %v4061 = vadd.f32 0.0, %v4060
        %v4062 = vpop.f32.mrb[0].mxu0
        %4063 = vdwg.mxu0
        %v4064 = vmax.f32 %v3977, %v4056
        %v4065 = vmax.f32 %v3982, %v4061
        %v4066 = vpack.c.bf16 %v4065, %v4064
        %v4067 = vld [vmem:[%s10] sm:$0xff]
        %v4068 = vld [vmem:[%s10 + $0x8] sm:$0xff]
        %v4069 = vld [vmem:[%s10 + $0x10] sm:$0xff]
        %v4070 = vld [vmem:[%s10 + $0x18] sm:$0xff]
        %v4071 = vld [vmem:[%s10 + $0x20] sm:$0xff]
        %v4072 = vld [vmem:[%s10 + $0x28] sm:$0xff]
        %v4073 = vld [vmem:[%s10 + $0x30] sm:$0xff]
        %v4074 = vld [vmem:[%s10 + $0x38] sm:$0xff]
        %v4075 = vld [vmem:[%s10 + $0x40] sm:$0xff]
        %v4076 = vld [vmem:[%s10 + $0x48] sm:$0xff]
        %v4077 = vld [vmem:[%s10 + $0x50] sm:$0xff]
        %v4078 = vld [vmem:[%s10 + $0x58] sm:$0xff]
        %v4079 = vld [vmem:[%s10 + $0x60] sm:$0xff]
        %v4080 = vld [vmem:[%s10 + $0x68] sm:$0xff]
        %v4081 = vld [vmem:[%s10 + $0x70] sm:$0xff]
        %v4082 = vld [vmem:[%s10 + $0x78] sm:$0xff]
        %s4083 = scalar_lea.vmem %s10, 128
        %v4084 = vld [vmem:[%s4083] sm:$0xff]
        %v4085 = vld [vmem:[%s4083 + $0x8] sm:$0xff]
        %v4086 = vld [vmem:[%s4083 + $0x10] sm:$0xff]
        %v4087 = vld [vmem:[%s4083 + $0x18] sm:$0xff]
        %v4088 = vld [vmem:[%s4083 + $0x20] sm:$0xff]
        %v4089 = vld [vmem:[%s4083 + $0x28] sm:$0xff]
        %v4090 = vld [vmem:[%s4083 + $0x30] sm:$0xff]
        %v4091 = vld [vmem:[%s4083 + $0x38] sm:$0xff]
        %v4092 = vld [vmem:[%s4083 + $0x40] sm:$0xff]
        %v4093 = vld [vmem:[%s4083 + $0x48] sm:$0xff]
        %v4094 = vld [vmem:[%s4083 + $0x50] sm:$0xff]
        %v4095 = vld [vmem:[%s4083 + $0x58] sm:$0xff]
        %v4096 = vld [vmem:[%s4083 + $0x60] sm:$0xff]
        %v4097 = vld [vmem:[%s4083 + $0x68] sm:$0xff]
        %v4098 = vld [vmem:[%s4083 + $0x70] sm:$0xff]
        %v4099 = vld [vmem:[%s4083 + $0x78] sm:$0xff]
        %v4101 = vshrl.u32 %v4066, 16
        %v4103 = vshll.u32 %v4066, 16
        %v4105 = vrot.slane %v4103, 1
        %v4106 = vor.u32 %v4101, %v4105
        %v4124 = vunpack.c.l.b16 %v4084
        %v4125 = vunpack.c.h.b16 %v4084
        %v4126 = vunpack.c.l.b16 %v4085
        %v4127 = vunpack.c.h.b16 %v4085
        %v4128 = vunpack.c.l.b16 %v4086
        %v4129 = vunpack.c.h.b16 %v4086
        %v4130 = vunpack.c.l.b16 %v4087
        %v4131 = vunpack.c.h.b16 %v4087
        %v4132 = vunpack.c.l.b16 %v4088
        %v4133 = vunpack.c.h.b16 %v4088
        %v4134 = vunpack.c.l.b16 %v4089
        %v4135 = vunpack.c.h.b16 %v4089
        %v4136 = vunpack.c.l.b16 %v4090
        %v4137 = vunpack.c.h.b16 %v4090
        %v4138 = vunpack.c.l.b16 %v4091
        %v4139 = vunpack.c.h.b16 %v4091
        %v4140 = vunpack.c.l.b16 %v4092
        %v4141 = vunpack.c.h.b16 %v4092
        %v4142 = vunpack.c.l.b16 %v4093
        %v4143 = vunpack.c.h.b16 %v4093
        %v4144 = vunpack.c.l.b16 %v4094
        %v4145 = vunpack.c.h.b16 %v4094
        %v4146 = vunpack.c.l.b16 %v4095
        %v4147 = vunpack.c.h.b16 %v4095
        %v4148 = vunpack.c.l.b16 %v4096
        %v4149 = vunpack.c.h.b16 %v4096
        %v4150 = vunpack.c.l.b16 %v4097
        %v4151 = vunpack.c.h.b16 %v4097
        %v4152 = vunpack.c.l.b16 %v4098
        %v4153 = vunpack.c.h.b16 %v4098
        %v4154 = vunpack.c.l.b16 %v4099
        %v4155 = vunpack.c.h.b16 %v4099
        %v4156 = vpack.c.b16 %v4126, %v4124
        %v4157 = vpack.c.b16 %v4127, %v4125
        %v4158 = vpack.c.b16 %v4130, %v4128
        %v4159 = vpack.c.b16 %v4131, %v4129
        %v4160 = vpack.c.b16 %v4134, %v4132
        %v4161 = vpack.c.b16 %v4135, %v4133
        %v4162 = vpack.c.b16 %v4138, %v4136
        %v4163 = vpack.c.b16 %v4139, %v4137
        %v4164 = vpack.c.b16 %v4142, %v4140
        %v4165 = vpack.c.b16 %v4143, %v4141
        %v4166 = vpack.c.b16 %v4146, %v4144
        %v4167 = vpack.c.b16 %v4147, %v4145
        %v4168 = vpack.c.b16 %v4150, %v4148
        %v4169 = vpack.c.b16 %v4151, %v4149
        %v4170 = vpack.c.b16 %v4154, %v4152
        %v4171 = vpack.c.b16 %v4155, %v4153
        %4188 = vmatprep.subr.bf16.mxu0 %v4157
        %4189 = vmatpush1.bf16.msra.mxu0 %v4156
        %4190 = vmatprep.subr.bf16.mxu0 %v4159
        %4191 = vmatpush1.bf16.msra.mxu0 %v4158
        %4192 = vmatprep.subr.bf16.mxu0 %v4161
        %4193 = vmatpush1.bf16.msra.mxu0 %v4160
        %4194 = vmatprep.subr.bf16.mxu0 %v4163
        %4195 = vmatpush1.bf16.msra.mxu0 %v4162
        %4196 = vmatprep.subr.bf16.mxu0 %v4165
        %4197 = vmatpush1.bf16.msra.mxu0 %v4164
        %4198 = vmatprep.subr.bf16.mxu0 %v4167
        %4199 = vmatpush1.bf16.msra.mxu0 %v4166
        %4200 = vmatprep.subr.bf16.mxu0 %v4169
        %4201 = vmatpush1.bf16.msra.mxu0 %v4168
        %4202 = vmatprep.subr.bf16.mxu0 %v4171
        %4203 = vmatpush1.bf16.msra.mxu0 %v4170
        %4204 = vmatprep.subr.bf16.mxu0 0
        %4205 = vmatpush1.bf16.msra.mxu0 0
        %4206 = vmatprep.subr.bf16.mxu0 0
        %4207 = vmatpush1.bf16.msra.mxu0 0
        %4208 = vmatprep.subr.bf16.mxu0 0
        %4209 = vmatpush1.bf16.msra.mxu0 0
        %4210 = vmatprep.subr.bf16.mxu0 0
        %4211 = vmatpush1.bf16.msra.mxu0 0
        %4212 = vmatprep.subr.bf16.mxu0 0
        %4213 = vmatpush1.bf16.msra.mxu0 0
        %4214 = vmatprep.subr.bf16.mxu0 0
        %4215 = vmatpush1.bf16.msra.mxu0 0
        %4216 = vmatprep.subr.bf16.mxu0 0
        %4217 = vmatpush1.bf16.msra.mxu0 0
        %4218 = vmatprep.subr.bf16.mxu0 0
        %4219 = vmatpush1.bf16.msra.mxu0 0
        %4220 = vmatprep.mubr.bf16.mxu0 0
        %4221 = vmatmul.mubr.bf16.gmra.mrb[0].mxu0 %v4106
        %v4222 = vpop.f32.mrb[0].mxu0
        %v4223 = vadd.f32 0.0, %v4222
        %v4224 = vpop.f32.mrb[0].mxu0
        %v4225 = vadd.f32 0.0, %v4224
        %v4226 = vpop.f32.mrb[0].mxu0
        %v4227 = vadd.f32 0.0, %v4226
        %v4228 = vpop.f32.mrb[0].mxu0
        %v4229 = vadd.f32 0.0, %v4228
        %4230 = vdwg.mxu0
        %v4247 = vunpack.c.l.b16 %v4067
        %v4248 = vunpack.c.h.b16 %v4067
        %v4249 = vunpack.c.l.b16 %v4068
        %v4250 = vunpack.c.h.b16 %v4068
        %v4251 = vunpack.c.l.b16 %v4069
        %v4252 = vunpack.c.h.b16 %v4069
        %v4253 = vunpack.c.l.b16 %v4070
        %v4254 = vunpack.c.h.b16 %v4070
        %v4255 = vunpack.c.l.b16 %v4071
        %v4256 = vunpack.c.h.b16 %v4071
        %v4257 = vunpack.c.l.b16 %v4072
        %v4258 = vunpack.c.h.b16 %v4072
        %v4259 = vunpack.c.l.b16 %v4073
        %v4260 = vunpack.c.h.b16 %v4073
        %v4261 = vunpack.c.l.b16 %v4074
        %v4262 = vunpack.c.h.b16 %v4074
        %v4263 = vunpack.c.l.b16 %v4075
        %v4264 = vunpack.c.h.b16 %v4075
        %v4265 = vunpack.c.l.b16 %v4076
        %v4266 = vunpack.c.h.b16 %v4076
        %v4267 = vunpack.c.l.b16 %v4077
        %v4268 = vunpack.c.h.b16 %v4077
        %v4269 = vunpack.c.l.b16 %v4078
        %v4270 = vunpack.c.h.b16 %v4078
        %v4271 = vunpack.c.l.b16 %v4079
        %v4272 = vunpack.c.h.b16 %v4079
        %v4273 = vunpack.c.l.b16 %v4080
        %v4274 = vunpack.c.h.b16 %v4080
        %v4275 = vunpack.c.l.b16 %v4081
        %v4276 = vunpack.c.h.b16 %v4081
        %v4277 = vunpack.c.l.b16 %v4082
        %v4278 = vunpack.c.h.b16 %v4082
        %v4279 = vpack.c.b16 %v4249, %v4247
        %v4280 = vpack.c.b16 %v4250, %v4248
        %v4281 = vpack.c.b16 %v4253, %v4251
        %v4282 = vpack.c.b16 %v4254, %v4252
        %v4283 = vpack.c.b16 %v4257, %v4255
        %v4284 = vpack.c.b16 %v4258, %v4256
        %v4285 = vpack.c.b16 %v4261, %v4259
        %v4286 = vpack.c.b16 %v4262, %v4260
        %v4287 = vpack.c.b16 %v4265, %v4263
        %v4288 = vpack.c.b16 %v4266, %v4264
        %v4289 = vpack.c.b16 %v4269, %v4267
        %v4290 = vpack.c.b16 %v4270, %v4268
        %v4291 = vpack.c.b16 %v4273, %v4271
        %v4292 = vpack.c.b16 %v4274, %v4272
        %v4293 = vpack.c.b16 %v4277, %v4275
        %v4294 = vpack.c.b16 %v4278, %v4276
        %4311 = vmatprep.subr.bf16.mxu0 %v4280
        %4312 = vmatpush1.bf16.msra.mxu0 %v4279
        %4313 = vmatprep.subr.bf16.mxu0 %v4282
        %4314 = vmatpush1.bf16.msra.mxu0 %v4281
        %4315 = vmatprep.subr.bf16.mxu0 %v4284
        %4316 = vmatpush1.bf16.msra.mxu0 %v4283
        %4317 = vmatprep.subr.bf16.mxu0 %v4286
        %4318 = vmatpush1.bf16.msra.mxu0 %v4285
        %4319 = vmatprep.subr.bf16.mxu0 %v4288
        %4320 = vmatpush1.bf16.msra.mxu0 %v4287
        %4321 = vmatprep.subr.bf16.mxu0 %v4290
        %4322 = vmatpush1.bf16.msra.mxu0 %v4289
        %4323 = vmatprep.subr.bf16.mxu0 %v4292
        %4324 = vmatpush1.bf16.msra.mxu0 %v4291
        %4325 = vmatprep.subr.bf16.mxu0 %v4294
        %4326 = vmatpush1.bf16.msra.mxu0 %v4293
        %4327 = vmatprep.subr.bf16.mxu0 0
        %4328 = vmatpush1.bf16.msra.mxu0 0
        %4329 = vmatprep.subr.bf16.mxu0 0
        %4330 = vmatpush1.bf16.msra.mxu0 0
        %4331 = vmatprep.subr.bf16.mxu0 0
        %4332 = vmatpush1.bf16.msra.mxu0 0
        %4333 = vmatprep.subr.bf16.mxu0 0
        %4334 = vmatpush1.bf16.msra.mxu0 0
        %4335 = vmatprep.subr.bf16.mxu0 0
        %4336 = vmatpush1.bf16.msra.mxu0 0
        %4337 = vmatprep.subr.bf16.mxu0 0
        %4338 = vmatpush1.bf16.msra.mxu0 0
        %4339 = vmatprep.subr.bf16.mxu0 0
        %4340 = vmatpush1.bf16.msra.mxu0 0
        %4341 = vmatprep.subr.bf16.mxu0 0
        %4342 = vmatpush1.bf16.msra.mxu0 0
        %4343 = vmatprep.mubr.bf16.mxu0 0
        %4344 = vmatmul.mubr.bf16.gmra.mrb[0].mxu0 %v4066
        %v4345 = vpop.f32.mrb[0].mxu0
        %v4346 = vadd.f32 %v4223, %v4345
        %v4347 = vpop.f32.mrb[0].mxu0
        %v4348 = vadd.f32 %v4225, %v4347
        %v4349 = vpop.f32.mrb[0].mxu0
        %v4350 = vadd.f32 %v4227, %v4349
        %v4351 = vpop.f32.mrb[0].mxu0
        %v4352 = vadd.f32 %v4229, %v4351
        %4353 = vdwg.mxu0
        %s4354 = scalar_lea.vmem %s10, 256
        %v4355 = vld [vmem:[%s4354] sm:$0xff]
        %v4356 = vld [vmem:[%s4354 + $0x8] sm:$0xff]
        %v4357 = vld [vmem:[%s4354 + $0x10] sm:$0xff]
        %v4358 = vld [vmem:[%s4354 + $0x18] sm:$0xff]
        %v4359 = vld [vmem:[%s4354 + $0x20] sm:$0xff]
        %v4360 = vld [vmem:[%s4354 + $0x28] sm:$0xff]
        %v4361 = vld [vmem:[%s4354 + $0x30] sm:$0xff]
        %v4362 = vld [vmem:[%s4354 + $0x38] sm:$0xff]
        %v4363 = vld [vmem:[%s4354 + $0x40] sm:$0xff]
        %v4364 = vld [vmem:[%s4354 + $0x48] sm:$0xff]
        %v4365 = vld [vmem:[%s4354 + $0x50] sm:$0xff]
        %v4366 = vld [vmem:[%s4354 + $0x58] sm:$0xff]
        %v4367 = vld [vmem:[%s4354 + $0x60] sm:$0xff]
        %v4368 = vld [vmem:[%s4354 + $0x68] sm:$0xff]
        %v4369 = vld [vmem:[%s4354 + $0x70] sm:$0xff]
        %v4370 = vld [vmem:[%s4354 + $0x78] sm:$0xff]
        %v4372 = vrot.slane %v4066, 1
        %v4390 = vunpack.c.l.b16 %v4355
        %v4391 = vunpack.c.h.b16 %v4355
        %v4392 = vunpack.c.l.b16 %v4356
        %v4393 = vunpack.c.h.b16 %v4356
        %v4394 = vunpack.c.l.b16 %v4357
        %v4395 = vunpack.c.h.b16 %v4357
        %v4396 = vunpack.c.l.b16 %v4358
        %v4397 = vunpack.c.h.b16 %v4358
        %v4398 = vunpack.c.l.b16 %v4359
        %v4399 = vunpack.c.h.b16 %v4359
        %v4400 = vunpack.c.l.b16 %v4360
        %v4401 = vunpack.c.h.b16 %v4360
        %v4402 = vunpack.c.l.b16 %v4361
        %v4403 = vunpack.c.h.b16 %v4361
        %v4404 = vunpack.c.l.b16 %v4362
        %v4405 = vunpack.c.h.b16 %v4362
        %v4406 = vunpack.c.l.b16 %v4363
        %v4407 = vunpack.c.h.b16 %v4363
        %v4408 = vunpack.c.l.b16 %v4364
        %v4409 = vunpack.c.h.b16 %v4364
        %v4410 = vunpack.c.l.b16 %v4365
        %v4411 = vunpack.c.h.b16 %v4365
        %v4412 = vunpack.c.l.b16 %v4366
        %v4413 = vunpack.c.h.b16 %v4366
        %v4414 = vunpack.c.l.b16 %v4367
        %v4415 = vunpack.c.h.b16 %v4367
        %v4416 = vunpack.c.l.b16 %v4368
        %v4417 = vunpack.c.h.b16 %v4368
        %v4418 = vunpack.c.l.b16 %v4369
        %v4419 = vunpack.c.h.b16 %v4369
        %v4420 = vunpack.c.l.b16 %v4370
        %v4421 = vunpack.c.h.b16 %v4370
        %v4422 = vpack.c.b16 %v4392, %v4390
        %v4423 = vpack.c.b16 %v4393, %v4391
        %v4424 = vpack.c.b16 %v4396, %v4394
        %v4425 = vpack.c.b16 %v4397, %v4395
        %v4426 = vpack.c.b16 %v4400, %v4398
        %v4427 = vpack.c.b16 %v4401, %v4399
        %v4428 = vpack.c.b16 %v4404, %v4402
        %v4429 = vpack.c.b16 %v4405, %v4403
        %v4430 = vpack.c.b16 %v4408, %v4406
        %v4431 = vpack.c.b16 %v4409, %v4407
        %v4432 = vpack.c.b16 %v4412, %v4410
        %v4433 = vpack.c.b16 %v4413, %v4411
        %v4434 = vpack.c.b16 %v4416, %v4414
        %v4435 = vpack.c.b16 %v4417, %v4415
        %v4436 = vpack.c.b16 %v4420, %v4418
        %v4437 = vpack.c.b16 %v4421, %v4419
        %4454 = vmatprep.subr.bf16.mxu0 %v4423
        %4455 = vmatpush1.bf16.msra.mxu0 %v4422
        %4456 = vmatprep.subr.bf16.mxu0 %v4425
        %4457 = vmatpush1.bf16.msra.mxu0 %v4424
        %4458 = vmatprep.subr.bf16.mxu0 %v4427
        %4459 = vmatpush1.bf16.msra.mxu0 %v4426
        %4460 = vmatprep.subr.bf16.mxu0 %v4429
        %4461 = vmatpush1.bf16.msra.mxu0 %v4428
        %4462 = vmatprep.subr.bf16.mxu0 %v4431
        %4463 = vmatpush1.bf16.msra.mxu0 %v4430
        %4464 = vmatprep.subr.bf16.mxu0 %v4433
        %4465 = vmatpush1.bf16.msra.mxu0 %v4432
        %4466 = vmatprep.subr.bf16.mxu0 %v4435
        %4467 = vmatpush1.bf16.msra.mxu0 %v4434
        %4468 = vmatprep.subr.bf16.mxu0 %v4437
        %4469 = vmatpush1.bf16.msra.mxu0 %v4436
        %4470 = vmatprep.subr.bf16.mxu0 0
        %4471 = vmatpush1.bf16.msra.mxu0 0
        %4472 = vmatprep.subr.bf16.mxu0 0
        %4473 = vmatpush1.bf16.msra.mxu0 0
        %4474 = vmatprep.subr.bf16.mxu0 0
        %4475 = vmatpush1.bf16.msra.mxu0 0
        %4476 = vmatprep.subr.bf16.mxu0 0
        %4477 = vmatpush1.bf16.msra.mxu0 0
        %4478 = vmatprep.subr.bf16.mxu0 0
        %4479 = vmatpush1.bf16.msra.mxu0 0
        %4480 = vmatprep.subr.bf16.mxu0 0
        %4481 = vmatpush1.bf16.msra.mxu0 0
        %4482 = vmatprep.subr.bf16.mxu0 0
        %4483 = vmatpush1.bf16.msra.mxu0 0
        %4484 = vmatprep.subr.bf16.mxu0 0
        %4485 = vmatpush1.bf16.msra.mxu0 0
        %4486 = vmatprep.mubr.bf16.mxu0 0
        %4487 = vmatmul.mubr.bf16.gmra.mrb[0].mxu0 %v4372
        %v4488 = vpop.f32.mrb[0].mxu0
        %v4489 = vadd.f32 0.0, %v4488
        %v4490 = vpop.f32.mrb[0].mxu0
        %v4491 = vadd.f32 0.0, %v4490
        %v4492 = vpop.f32.mrb[0].mxu0
        %v4493 = vadd.f32 0.0, %v4492
        %v4494 = vpop.f32.mrb[0].mxu0
        %v4495 = vadd.f32 0.0, %v4494
        %4496 = vdwg.mxu0
        %v4497 = vadd.f32 %v4346, %v4489
        %v4498 = vadd.f32 %v4348, %v4491
        %v4499 = vadd.f32 %v4350, %v4493
        %v4500 = vadd.f32 %v4352, %v4495
        %s4501 = scalar_lea.vmem %s10, 384
        %v4502 = vld [vmem:[%s4501] sm:$0xff]
        %v4503 = vld [vmem:[%s4501 + $0x8] sm:$0xff]
        %v4504 = vld [vmem:[%s4501 + $0x10] sm:$0xff]
        %v4505 = vld [vmem:[%s4501 + $0x18] sm:$0xff]
        %v4506 = vld [vmem:[%s4501 + $0x20] sm:$0xff]
        %v4507 = vld [vmem:[%s4501 + $0x28] sm:$0xff]
        %v4508 = vld [vmem:[%s4501 + $0x30] sm:$0xff]
        %v4509 = vld [vmem:[%s4501 + $0x38] sm:$0xff]
        %v4510 = vld [vmem:[%s4501 + $0x40] sm:$0xff]
        %v4511 = vld [vmem:[%s4501 + $0x48] sm:$0xff]
        %v4512 = vld [vmem:[%s4501 + $0x50] sm:$0xff]
        %v4513 = vld [vmem:[%s4501 + $0x58] sm:$0xff]
        %v4514 = vld [vmem:[%s4501 + $0x60] sm:$0xff]
        %v4515 = vld [vmem:[%s4501 + $0x68] sm:$0xff]
        %v4516 = vld [vmem:[%s4501 + $0x70] sm:$0xff]
        %v4517 = vld [vmem:[%s4501 + $0x78] sm:$0xff]
        %v4518 = vrot.slane %v4101, 1
        %v4519 = vrot.slane %v4103, 2
        %v4520 = vor.u32 %v4518, %v4519
        %v4538 = vunpack.c.l.b16 %v4502
        %v4539 = vunpack.c.h.b16 %v4502
        %v4540 = vunpack.c.l.b16 %v4503
        %v4541 = vunpack.c.h.b16 %v4503
        %v4542 = vunpack.c.l.b16 %v4504
        %v4543 = vunpack.c.h.b16 %v4504
        %v4544 = vunpack.c.l.b16 %v4505
        %v4545 = vunpack.c.h.b16 %v4505
        %v4546 = vunpack.c.l.b16 %v4506
        %v4547 = vunpack.c.h.b16 %v4506
        %v4548 = vunpack.c.l.b16 %v4507
        %v4549 = vunpack.c.h.b16 %v4507
        %v4550 = vunpack.c.l.b16 %v4508
        %v4551 = vunpack.c.h.b16 %v4508
        %v4552 = vunpack.c.l.b16 %v4509
        %v4553 = vunpack.c.h.b16 %v4509
        %v4554 = vunpack.c.l.b16 %v4510
        %v4555 = vunpack.c.h.b16 %v4510
        %v4556 = vunpack.c.l.b16 %v4511
        %v4557 = vunpack.c.h.b16 %v4511
        %v4558 = vunpack.c.l.b16 %v4512
        %v4559 = vunpack.c.h.b16 %v4512
        %v4560 = vunpack.c.l.b16 %v4513
        %v4561 = vunpack.c.h.b16 %v4513
        %v4562 = vunpack.c.l.b16 %v4514
        %v4563 = vunpack.c.h.b16 %v4514
        %v4564 = vunpack.c.l.b16 %v4515
        %v4565 = vunpack.c.h.b16 %v4515
        %v4566 = vunpack.c.l.b16 %v4516
        %v4567 = vunpack.c.h.b16 %v4516
        %v4568 = vunpack.c.l.b16 %v4517
        %v4569 = vunpack.c.h.b16 %v4517
        %v4570 = vpack.c.b16 %v4540, %v4538
        %v4571 = vpack.c.b16 %v4541, %v4539
        %v4572 = vpack.c.b16 %v4544, %v4542
        %v4573 = vpack.c.b16 %v4545, %v4543
        %v4574 = vpack.c.b16 %v4548, %v4546
        %v4575 = vpack.c.b16 %v4549, %v4547
        %v4576 = vpack.c.b16 %v4552, %v4550
        %v4577 = vpack.c.b16 %v4553, %v4551
        %v4578 = vpack.c.b16 %v4556, %v4554
        %v4579 = vpack.c.b16 %v4557, %v4555
        %v4580 = vpack.c.b16 %v4560, %v4558
        %v4581 = vpack.c.b16 %v4561, %v4559
        %v4582 = vpack.c.b16 %v4564, %v4562
        %v4583 = vpack.c.b16 %v4565, %v4563
        %v4584 = vpack.c.b16 %v4568, %v4566
        %v4585 = vpack.c.b16 %v4569, %v4567
        %4602 = vmatprep.subr.bf16.mxu0 %v4571
        %4603 = vmatpush1.bf16.msra.mxu0 %v4570
        %4604 = vmatprep.subr.bf16.mxu0 %v4573
        %4605 = vmatpush1.bf16.msra.mxu0 %v4572
        %4606 = vmatprep.subr.bf16.mxu0 %v4575
        %4607 = vmatpush1.bf16.msra.mxu0 %v4574
        %4608 = vmatprep.subr.bf16.mxu0 %v4577
        %4609 = vmatpush1.bf16.msra.mxu0 %v4576
        %4610 = vmatprep.subr.bf16.mxu0 %v4579
        %4611 = vmatpush1.bf16.msra.mxu0 %v4578
        %4612 = vmatprep.subr.bf16.mxu0 %v4581
        %4613 = vmatpush1.bf16.msra.mxu0 %v4580
        %4614 = vmatprep.subr.bf16.mxu0 %v4583
        %4615 = vmatpush1.bf16.msra.mxu0 %v4582
        %4616 = vmatprep.subr.bf16.mxu0 %v4585
        %4617 = vmatpush1.bf16.msra.mxu0 %v4584
        %4618 = vmatprep.subr.bf16.mxu0 0
        %4619 = vmatpush1.bf16.msra.mxu0 0
        %4620 = vmatprep.subr.bf16.mxu0 0
        %4621 = vmatpush1.bf16.msra.mxu0 0
        %4622 = vmatprep.subr.bf16.mxu0 0
        %4623 = vmatpush1.bf16.msra.mxu0 0
        %4624 = vmatprep.subr.bf16.mxu0 0
        %4625 = vmatpush1.bf16.msra.mxu0 0
        %4626 = vmatprep.subr.bf16.mxu0 0
        %4627 = vmatpush1.bf16.msra.mxu0 0
        %4628 = vmatprep.subr.bf16.mxu0 0
        %4629 = vmatpush1.bf16.msra.mxu0 0
        %4630 = vmatprep.subr.bf16.mxu0 0
        %4631 = vmatpush1.bf16.msra.mxu0 0
        %4632 = vmatprep.subr.bf16.mxu0 0
        %4633 = vmatpush1.bf16.msra.mxu0 0
        %4634 = vmatprep.mubr.bf16.mxu0 0
        %4635 = vmatmul.mubr.bf16.gmra.mrb[0].mxu0 %v4520
        %v4636 = vpop.f32.mrb[0].mxu0
        %v4637 = vadd.f32 0.0, %v4636
        %v4638 = vpop.f32.mrb[0].mxu0
        %v4639 = vadd.f32 0.0, %v4638
        %v4640 = vpop.f32.mrb[0].mxu0
        %v4641 = vadd.f32 0.0, %v4640
        %v4642 = vpop.f32.mrb[0].mxu0
        %v4643 = vadd.f32 0.0, %v4642
        %4644 = vdwg.mxu0
        %v4645 = vadd.f32 %v4497, %v4637
        %v4646 = vadd.f32 %v4498, %v4639
        %v4647 = vadd.f32 %v4499, %v4641
        %v4648 = vadd.f32 %v4500, %v4643
        %s4649 = scalar_lea.vmem %s10, 512
        %v4650 = vld [vmem:[%s4649] sm:$0xff]
        %v4651 = vld [vmem:[%s4649 + $0x8] sm:$0xff]
        %v4652 = vld [vmem:[%s4649 + $0x10] sm:$0xff]
        %v4653 = vld [vmem:[%s4649 + $0x18] sm:$0xff]
        %v4654 = vld [vmem:[%s4649 + $0x20] sm:$0xff]
        %v4655 = vld [vmem:[%s4649 + $0x28] sm:$0xff]
        %v4656 = vld [vmem:[%s4649 + $0x30] sm:$0xff]
        %v4657 = vld [vmem:[%s4649 + $0x38] sm:$0xff]
        %v4658 = vld [vmem:[%s4649 + $0x40] sm:$0xff]
        %v4659 = vld [vmem:[%s4649 + $0x48] sm:$0xff]
        %v4660 = vld [vmem:[%s4649 + $0x50] sm:$0xff]
        %v4661 = vld [vmem:[%s4649 + $0x58] sm:$0xff]
        %v4662 = vld [vmem:[%s4649 + $0x60] sm:$0xff]
        %v4663 = vld [vmem:[%s4649 + $0x68] sm:$0xff]
        %v4664 = vld [vmem:[%s4649 + $0x70] sm:$0xff]
        %v4665 = vld [vmem:[%s4649 + $0x78] sm:$0xff]
        %v4666 = vrot.slane %v4066, 2
        %v4684 = vunpack.c.l.b16 %v4650
        %v4685 = vunpack.c.h.b16 %v4650
        %v4686 = vunpack.c.l.b16 %v4651
        %v4687 = vunpack.c.h.b16 %v4651
        %v4688 = vunpack.c.l.b16 %v4652
        %v4689 = vunpack.c.h.b16 %v4652
        %v4690 = vunpack.c.l.b16 %v4653
        %v4691 = vunpack.c.h.b16 %v4653
        %v4692 = vunpack.c.l.b16 %v4654
        %v4693 = vunpack.c.h.b16 %v4654
        %v4694 = vunpack.c.l.b16 %v4655
        %v4695 = vunpack.c.h.b16 %v4655
        %v4696 = vunpack.c.l.b16 %v4656
        %v4697 = vunpack.c.h.b16 %v4656
        %v4698 = vunpack.c.l.b16 %v4657
        %v4699 = vunpack.c.h.b16 %v4657
        %v4700 = vunpack.c.l.b16 %v4658
        %v4701 = vunpack.c.h.b16 %v4658
        %v4702 = vunpack.c.l.b16 %v4659
        %v4703 = vunpack.c.h.b16 %v4659
        %v4704 = vunpack.c.l.b16 %v4660
        %v4705 = vunpack.c.h.b16 %v4660
        %v4706 = vunpack.c.l.b16 %v4661
        %v4707 = vunpack.c.h.b16 %v4661
        %v4708 = vunpack.c.l.b16 %v4662
        %v4709 = vunpack.c.h.b16 %v4662
        %v4710 = vunpack.c.l.b16 %v4663
        %v4711 = vunpack.c.h.b16 %v4663
        %v4712 = vunpack.c.l.b16 %v4664
        %v4713 = vunpack.c.h.b16 %v4664
        %v4714 = vunpack.c.l.b16 %v4665
        %v4715 = vunpack.c.h.b16 %v4665
        %v4716 = vpack.c.b16 %v4686, %v4684
        %v4717 = vpack.c.b16 %v4687, %v4685
        %v4718 = vpack.c.b16 %v4690, %v4688
        %v4719 = vpack.c.b16 %v4691, %v4689
        %v4720 = vpack.c.b16 %v4694, %v4692
        %v4721 = vpack.c.b16 %v4695, %v4693
        %v4722 = vpack.c.b16 %v4698, %v4696
        %v4723 = vpack.c.b16 %v4699, %v4697
        %v4724 = vpack.c.b16 %v4702, %v4700
        %v4725 = vpack.c.b16 %v4703, %v4701
        %v4726 = vpack.c.b16 %v4706, %v4704
        %v4727 = vpack.c.b16 %v4707, %v4705
        %v4728 = vpack.c.b16 %v4710, %v4708
        %v4729 = vpack.c.b16 %v4711, %v4709
        %v4730 = vpack.c.b16 %v4714, %v4712
        %v4731 = vpack.c.b16 %v4715, %v4713
        %4748 = vmatprep.subr.bf16.mxu0 %v4717
        %4749 = vmatpush1.bf16.msra.mxu0 %v4716
        %4750 = vmatprep.subr.bf16.mxu0 %v4719
        %4751 = vmatpush1.bf16.msra.mxu0 %v4718
        %4752 = vmatprep.subr.bf16.mxu0 %v4721
        %4753 = vmatpush1.bf16.msra.mxu0 %v4720
        %4754 = vmatprep.subr.bf16.mxu0 %v4723
        %4755 = vmatpush1.bf16.msra.mxu0 %v4722
        %4756 = vmatprep.subr.bf16.mxu0 %v4725
        %4757 = vmatpush1.bf16.msra.mxu0 %v4724
        %4758 = vmatprep.subr.bf16.mxu0 %v4727
        %4759 = vmatpush1.bf16.msra.mxu0 %v4726
        %4760 = vmatprep.subr.bf16.mxu0 %v4729
        %4761 = vmatpush1.bf16.msra.mxu0 %v4728
        %4762 = vmatprep.subr.bf16.mxu0 %v4731
        %4763 = vmatpush1.bf16.msra.mxu0 %v4730
        %4764 = vmatprep.subr.bf16.mxu0 0
        %4765 = vmatpush1.bf16.msra.mxu0 0
        %4766 = vmatprep.subr.bf16.mxu0 0
        %4767 = vmatpush1.bf16.msra.mxu0 0
        %4768 = vmatprep.subr.bf16.mxu0 0
        %4769 = vmatpush1.bf16.msra.mxu0 0
        %4770 = vmatprep.subr.bf16.mxu0 0
        %4771 = vmatpush1.bf16.msra.mxu0 0
        %4772 = vmatprep.subr.bf16.mxu0 0
        %4773 = vmatpush1.bf16.msra.mxu0 0
        %4774 = vmatprep.subr.bf16.mxu0 0
        %4775 = vmatpush1.bf16.msra.mxu0 0
        %4776 = vmatprep.subr.bf16.mxu0 0
        %4777 = vmatpush1.bf16.msra.mxu0 0
        %4778 = vmatprep.subr.bf16.mxu0 0
        %4779 = vmatpush1.bf16.msra.mxu0 0
        %4780 = vmatprep.mubr.bf16.mxu0 0
        %4781 = vmatmul.mubr.bf16.gmra.mrb[0].mxu0 %v4666
        %v4782 = vpop.f32.mrb[0].mxu0
        %v4783 = vadd.f32 0.0, %v4782
        %v4784 = vpop.f32.mrb[0].mxu0
        %v4785 = vadd.f32 0.0, %v4784
        %v4786 = vpop.f32.mrb[0].mxu0
        %v4787 = vadd.f32 0.0, %v4786
        %v4788 = vpop.f32.mrb[0].mxu0
        %v4789 = vadd.f32 0.0, %v4788
        %4790 = vdwg.mxu0
        %v4791 = vadd.f32 %v4645, %v4783
        %v4792 = vadd.f32 %v4646, %v4785
        %v4793 = vadd.f32 %v4647, %v4787
        %v4794 = vadd.f32 %v4648, %v4789
        %v4795 = vld [vmem:[%s11] sm:$0x3]
        %v4797 = vlaneseq
        %v4798 = vshrl.u32 %v4797, 7
        %v4799 = vsub.s32 0, %v4798
        %v4800 = vrot.slane %v4795, %v4799
        %v4801 = vlaneseq
        %v4802 = vshrl.u32 %v4801, 7
        %v4803 = vsub.s32 1, %v4802
        %v4804 = vrot.slane %v4795, %v4803
        %v4807 = vmul.f32 %v4791, %v4800
        %v4808 = vmul.f32 %v4792, %v4804
        %v4809 = vmul.f32 %v4793, %v4800
        %v4810 = vmul.f32 %v4794, %v4804
        %v4811 = vld [vmem:[%s12] sm:$0x3]
        %v4813 = vlaneseq
        %v4814 = vshrl.u32 %v4813, 7
        %v4815 = vsub.s32 0, %v4814
        %v4816 = vrot.slane %v4811, %v4815
        %v4817 = vlaneseq
        %v4818 = vshrl.u32 %v4817, 7
        %v4819 = vsub.s32 1, %v4818
        %v4820 = vrot.slane %v4811, %v4819
        %v4823 = vadd.f32 %v4807, %v4816
        %v4824 = vadd.f32 %v4808, %v4820
        %v4825 = vadd.f32 %v4809, %v4816
        %v4826 = vadd.f32 %v4810, %v4820
        %v4827 = vmin.f32 %v4823, 0.0
        %v4828 = vmin.f32 %v4824, 0.0
        %v4829 = vmin.f32 %v4825, 0.0
        %v4830 = vmin.f32 %v4826, 0.0
        %vm4831 = vcmp.gt.f32.partialorder %v4823, 0.0
        %vm4832 = vcmp.gt.f32.partialorder %v4824, 0.0
        %vm4833 = vcmp.gt.f32.partialorder %v4825, 0.0
        %vm4834 = vcmp.gt.f32.partialorder %v4826, 0.0
        %v4835 = vmul.f32 %v4827, 1.442695
        %v4836 = vpow.pop %v4835
        %v4837 = vmul.f32 %v4828, 1.442695
        %v4838 = vpow.pop %v4837
        %v4839 = vmul.f32 %v4829, 1.442695
        %v4840 = vpow.pop %v4839
        %v4841 = vmul.f32 %v4830, 1.442695
        %v4842 = vpow.pop %v4841
        %v4843 = vsub.f32 %v4836, 1.0
        %v4844 = vsub.f32 %v4838, 1.0
        %v4845 = vsub.f32 %v4840, 1.0
        %v4846 = vsub.f32 %v4842, 1.0
        %v4847 = vsel %vm4831, %v4823, %v4843
        %v4848 = vsel %vm4832, %v4824, %v4844
        %v4849 = vsel %vm4833, %v4825, %v4845
        %v4850 = vsel %vm4834, %v4826, %v4846
        %vm4851 = vcmask 89088
        %v4852 = vsel %vm4851, %v1705, 0
        %vm4854 = vcmask 1042432
        %v4856 = vsel %vm4854, %v4849, 0
        %v4859 = vsel %vm4854, %v4850, 0
        %4861 = vmatprep.subr.mxu0 %v4848
        %4862 = vmatpush1.msra.mxu0 %v4847
        %4863 = vmatprep.subr.mxu0 %v4859
        %4864 = vmatpush1.msra.mxu0 %v4856
        %4865 = vmatprep.subr.mxu0 0.0
        %4866 = vmatpush1.msra.mxu0 0.0
        %4867 = vmatprep.subr.mxu0 0.0
        %4868 = vmatpush1.msra.mxu0 0.0
        %4869 = vmatprep.subr.mxu0 0.0
        %4870 = vmatpush1.msra.mxu0 0.0
        %4871 = vmatprep.subr.mxu0 0.0
        %4872 = vmatpush1.msra.mxu0 0.0
        %4873 = vmatprep.subr.mxu0 0.0
        %4874 = vmatpush1.msra.mxu0 0.0
        %4875 = vmatprep.subr.mxu0 0.0
        %4876 = vmatpush1.msra.mxu0 0.0
        %4877 = vmatprep.subr.mxu0 0.0
        %4878 = vmatpush1.msra.mxu0 0.0
        %4879 = vmatprep.subr.mxu0 0.0
        %4880 = vmatpush1.msra.mxu0 0.0
        %4881 = vmatprep.subr.mxu0 0.0
        %4882 = vmatpush1.msra.mxu0 0.0
        %4883 = vmatprep.subr.mxu0 0.0
        %4884 = vmatpush1.msra.mxu0 0.0
        %4885 = vmatprep.subr.mxu0 0.0
        %4886 = vmatpush1.msra.mxu0 0.0
        %4887 = vmatprep.subr.mxu0 0.0
        %4888 = vmatpush1.msra.mxu0 0.0
        %4889 = vmatprep.subr.mxu0 0.0
        %4890 = vmatpush1.msra.mxu0 0.0
        %4891 = vmatprep.subr.mxu0 0.0
        %4892 = vmatpush1.msra.mxu0 0.0
        %4893 = vmatprep.subr.mxu0 0.0
        %4894 = vmatpush1.msra.mxu0 0.0
        %4895 = vmatprep.subr.mxu0 0.0
        %4896 = vmatpush1.msra.mxu0 0.0
        %4897 = vmatprep.subr.mxu0 0.0
        %4898 = vmatpush1.msra.mxu0 0.0
        %4899 = vmatprep.subr.mxu0 0.0
        %4900 = vmatpush1.msra.mxu0 0.0
        %4901 = vmatprep.subr.mxu0 0.0
        %4902 = vmatpush1.msra.mxu0 0.0
        %4903 = vmatprep.subr.mxu0 0.0
        %4904 = vmatpush1.msra.mxu0 0.0
        %4905 = vmatprep.subr.mxu0 0.0
        %4906 = vmatpush1.msra.mxu0 0.0
        %4907 = vmatprep.subr.mxu0 0.0
        %4908 = vmatpush1.msra.mxu0 0.0
        %4909 = vmatprep.subr.mxu0 0.0
        %4910 = vmatpush1.msra.mxu0 0.0
        %4911 = vmatprep.subr.mxu0 0.0
        %4912 = vmatpush1.msra.mxu0 0.0
        %4913 = vmatprep.subr.mxu0 0.0
        %4914 = vmatpush1.msra.mxu0 0.0
        %4915 = vmatprep.subr.mxu0 0.0
        %4916 = vmatpush1.msra.mxu0 0.0
        %4917 = vmatprep.subr.mxu0 0.0
        %4918 = vmatpush1.msra.mxu0 0.0
        %4919 = vmatprep.subr.mxu0 0.0
        %4920 = vmatpush1.msra.mxu0 0.0
        %4921 = vmatprep.subr.mxu0 0.0
        %4922 = vmatpush1.msra.mxu0 0.0
        %4923 = vmatprep.subr.mxu0 0.0
        %4924 = vmatpush1.msra.mxu0 0.0
        %4925 = vmatprep.mubr.f32.mxu0 0.0
        %4926 = vmatmul.mubr.f32.gmra.mrb[0].mxu0 %v4852
        %v4927 = vpop.f32.mrb[0].mxu0
        %v4928 = vadd.f32 0.0, %v4927
        %v4929 = vpop.f32.mrb[0].mxu0
        %v4930 = vadd.f32 0.0, %v4929
        %4931 = vdwg.mxu0
        %v4932 = vsel %vm4851, %v1775, 0
        %4934 = vmatprep.subr.mxu0 %v4848
        %4935 = vmatpush1.msra.mxu0 %v4847
        %4936 = vmatprep.subr.mxu0 %v4859
        %4937 = vmatpush1.msra.mxu0 %v4856
        %4938 = vmatprep.subr.mxu0 0.0
        %4939 = vmatpush1.msra.mxu0 0.0
        %4940 = vmatprep.subr.mxu0 0.0
        %4941 = vmatpush1.msra.mxu0 0.0
        %4942 = vmatprep.subr.mxu0 0.0
        %4943 = vmatpush1.msra.mxu0 0.0
        %4944 = vmatprep.subr.mxu0 0.0
        %4945 = vmatpush1.msra.mxu0 0.0
        %4946 = vmatprep.subr.mxu0 0.0
        %4947 = vmatpush1.msra.mxu0 0.0
        %4948 = vmatprep.subr.mxu0 0.0
        %4949 = vmatpush1.msra.mxu0 0.0
        %4950 = vmatprep.subr.mxu0 0.0
        %4951 = vmatpush1.msra.mxu0 0.0
        %4952 = vmatprep.subr.mxu0 0.0
        %4953 = vmatpush1.msra.mxu0 0.0
        %4954 = vmatprep.subr.mxu0 0.0
        %4955 = vmatpush1.msra.mxu0 0.0
        %4956 = vmatprep.subr.mxu0 0.0
        %4957 = vmatpush1.msra.mxu0 0.0
        %4958 = vmatprep.subr.mxu0 0.0
        %4959 = vmatpush1.msra.mxu0 0.0
        %4960 = vmatprep.subr.mxu0 0.0
        %4961 = vmatpush1.msra.mxu0 0.0
        %4962 = vmatprep.subr.mxu0 0.0
        %4963 = vmatpush1.msra.mxu0 0.0
        %4964 = vmatprep.subr.mxu0 0.0
        %4965 = vmatpush1.msra.mxu0 0.0
        %4966 = vmatprep.subr.mxu0 0.0
        %4967 = vmatpush1.msra.mxu0 0.0
        %4968 = vmatprep.subr.mxu0 0.0
        %4969 = vmatpush1.msra.mxu0 0.0
        %4970 = vmatprep.subr.mxu0 0.0
        %4971 = vmatpush1.msra.mxu0 0.0
        %4972 = vmatprep.subr.mxu0 0.0
        %4973 = vmatpush1.msra.mxu0 0.0
        %4974 = vmatprep.subr.mxu0 0.0
        %4975 = vmatpush1.msra.mxu0 0.0
        %4976 = vmatprep.subr.mxu0 0.0
        %4977 = vmatpush1.msra.mxu0 0.0
        %4978 = vmatprep.subr.mxu0 0.0
        %4979 = vmatpush1.msra.mxu0 0.0
        %4980 = vmatprep.subr.mxu0 0.0
        %4981 = vmatpush1.msra.mxu0 0.0
        %4982 = vmatprep.subr.mxu0 0.0
        %4983 = vmatpush1.msra.mxu0 0.0
        %4984 = vmatprep.subr.mxu0 0.0
        %4985 = vmatpush1.msra.mxu0 0.0
        %4986 = vmatprep.subr.mxu0 0.0
        %4987 = vmatpush1.msra.mxu0 0.0
        %4988 = vmatprep.subr.mxu0 0.0
        %4989 = vmatpush1.msra.mxu0 0.0
        %4990 = vmatprep.subr.mxu0 0.0
        %4991 = vmatpush1.msra.mxu0 0.0
        %4992 = vmatprep.subr.mxu0 0.0
        %4993 = vmatpush1.msra.mxu0 0.0
        %4994 = vmatprep.subr.mxu0 0.0
        %4995 = vmatpush1.msra.mxu0 0.0
        %4996 = vmatprep.subr.mxu0 0.0
        %4997 = vmatpush1.msra.mxu0 0.0
        %4998 = vmatprep.mubr.f32.mxu0 0.0
        %4999 = vmatmul.mubr.f32.gmra.mrb[0].mxu0 %v4932
        %v5000 = vpop.f32.mrb[0].mxu0
        %v5001 = vadd.f32 0.0, %v5000
        %v5002 = vpop.f32.mrb[0].mxu0
        %v5003 = vadd.f32 0.0, %v5002
        %5004 = vdwg.mxu0
        %v5005 = vmax.f32 %v4928, %v5001
        %v5006 = vmax.f32 %v4930, %v5003
        %v5007 = vld [vmem:[%s14] sm:$0x1]
        %v5008 = vpack.c.bf16 %v5005, %v5005
        %v5009 = vpack.c.bf16 %v5006, %v5006
        %v5010 = vld [vmem:[%s13] sm:$0xf]
        %v5011 = vld [vmem:[%s13 + $0x4] sm:$0xf]
        %v5012 = vld [vmem:[%s13 + $0x8] sm:$0xf]
        %v5013 = vld [vmem:[%s13 + $0xc] sm:$0xf]
        %v5014 = vld [vmem:[%s13 + $0x10] sm:$0xf]
        %v5015 = vld [vmem:[%s13 + $0x14] sm:$0xf]
        %v5016 = vld [vmem:[%s13 + $0x18] sm:$0xf]
        %v5017 = vld [vmem:[%s13 + $0x1c] sm:$0xf]
        %v5018 = vld [vmem:[%s13 + $0x20] sm:$0xf]
        %v5019 = vld [vmem:[%s13 + $0x24] sm:$0xf]
        %v5020 = vld [vmem:[%s13 + $0x28] sm:$0xf]
        %v5021 = vld [vmem:[%s13 + $0x2c] sm:$0xf]
        %v5022 = vld [vmem:[%s13 + $0x30] sm:$0xf]
        %v5023 = vld [vmem:[%s13 + $0x34] sm:$0xf]
        %v5024 = vld [vmem:[%s13 + $0x38] sm:$0xf]
        %v5025 = vld [vmem:[%s13 + $0x3c] sm:$0xf]
        %v5026 = vld [vmem:[%s13 + $0x40] sm:$0xf]
        %v5027 = vld [vmem:[%s13 + $0x44] sm:$0xf]
        %v5028 = vld [vmem:[%s13 + $0x48] sm:$0xf]
        %v5029 = vld [vmem:[%s13 + $0x4c] sm:$0xf]
        %v5030 = vld [vmem:[%s13 + $0x50] sm:$0xf]
        %v5031 = vld [vmem:[%s13 + $0x54] sm:$0xf]
        %v5032 = vld [vmem:[%s13 + $0x58] sm:$0xf]
        %v5033 = vld [vmem:[%s13 + $0x5c] sm:$0xf]
        %v5034 = vld [vmem:[%s13 + $0x60] sm:$0xf]
        %v5035 = vld [vmem:[%s13 + $0x64] sm:$0xf]
        %v5036 = vld [vmem:[%s13 + $0x68] sm:$0xf]
        %v5037 = vld [vmem:[%s13 + $0x6c] sm:$0xf]
        %v5038 = vld [vmem:[%s13 + $0x70] sm:$0xf]
        %v5039 = vld [vmem:[%s13 + $0x74] sm:$0xf]
        %v5040 = vld [vmem:[%s13 + $0x78] sm:$0xf]
        %v5041 = vld [vmem:[%s13 + $0x7c] sm:$0xf]
        %v5074 = vunpack.c.l.b16 %v5010
        %v5075 = vunpack.c.l.b16 %v5011
        %v5076 = vunpack.c.l.b16 %v5012
        %v5077 = vunpack.c.l.b16 %v5013
        %v5078 = vunpack.c.l.b16 %v5014
        %v5079 = vunpack.c.l.b16 %v5015
        %v5080 = vunpack.c.l.b16 %v5016
        %v5081 = vunpack.c.l.b16 %v5017
        %v5082 = vunpack.c.l.b16 %v5018
        %v5083 = vunpack.c.l.b16 %v5019
        %v5084 = vunpack.c.l.b16 %v5020
        %v5085 = vunpack.c.l.b16 %v5021
        %v5086 = vunpack.c.l.b16 %v5022
        %v5087 = vunpack.c.l.b16 %v5023
        %v5088 = vunpack.c.l.b16 %v5024
        %v5089 = vunpack.c.l.b16 %v5025
        %v5090 = vunpack.c.l.b16 %v5026
        %v5091 = vunpack.c.l.b16 %v5027
        %v5092 = vunpack.c.l.b16 %v5028
        %v5093 = vunpack.c.l.b16 %v5029
        %v5094 = vunpack.c.l.b16 %v5030
        %v5095 = vunpack.c.l.b16 %v5031
        %v5096 = vunpack.c.l.b16 %v5032
        %v5097 = vunpack.c.l.b16 %v5033
        %v5098 = vunpack.c.l.b16 %v5034
        %v5099 = vunpack.c.l.b16 %v5035
        %v5100 = vunpack.c.l.b16 %v5036
        %v5101 = vunpack.c.l.b16 %v5037
        %v5102 = vunpack.c.l.b16 %v5038
        %v5103 = vunpack.c.l.b16 %v5039
        %v5104 = vunpack.c.l.b16 %v5040
        %v5105 = vunpack.c.l.b16 %v5041
        %v5106 = vpack.c.b16 %v5075, %v5074
        %v5107 = vpack.c.b16 %v5077, %v5076
        %v5108 = vpack.c.b16 %v5079, %v5078
        %v5109 = vpack.c.b16 %v5081, %v5080
        %v5110 = vpack.c.b16 %v5083, %v5082
        %v5111 = vpack.c.b16 %v5085, %v5084
        %v5112 = vpack.c.b16 %v5087, %v5086
        %v5113 = vpack.c.b16 %v5089, %v5088
        %v5114 = vpack.c.b16 %v5091, %v5090
        %v5115 = vpack.c.b16 %v5093, %v5092
        %v5116 = vpack.c.b16 %v5095, %v5094
        %v5117 = vpack.c.b16 %v5097, %v5096
        %v5118 = vpack.c.b16 %v5099, %v5098
        %v5119 = vpack.c.b16 %v5101, %v5100
        %v5120 = vpack.c.b16 %v5103, %v5102
        %v5121 = vpack.c.b16 %v5105, %v5104
        %5138 = vmatprep.subr.bf16.mxu0 0
        %5139 = vmatpush1.bf16.msra.mxu0 %v5106
        %5140 = vmatprep.subr.bf16.mxu0 0
        %5141 = vmatpush1.bf16.msra.mxu0 %v5107
        %5142 = vmatprep.subr.bf16.mxu0 0
        %5143 = vmatpush1.bf16.msra.mxu0 %v5108
        %5144 = vmatprep.subr.bf16.mxu0 0
        %5145 = vmatpush1.bf16.msra.mxu0 %v5109
        %5146 = vmatprep.subr.bf16.mxu0 0
        %5147 = vmatpush1.bf16.msra.mxu0 %v5110
        %5148 = vmatprep.subr.bf16.mxu0 0
        %5149 = vmatpush1.bf16.msra.mxu0 %v5111
        %5150 = vmatprep.subr.bf16.mxu0 0
        %5151 = vmatpush1.bf16.msra.mxu0 %v5112
        %5152 = vmatprep.subr.bf16.mxu0 0
        %5153 = vmatpush1.bf16.msra.mxu0 %v5113
        %5154 = vmatprep.subr.bf16.mxu0 0
        %5155 = vmatpush1.bf16.msra.mxu0 %v5114
        %5156 = vmatprep.subr.bf16.mxu0 0
        %5157 = vmatpush1.bf16.msra.mxu0 %v5115
        %5158 = vmatprep.subr.bf16.mxu0 0
        %5159 = vmatpush1.bf16.msra.mxu0 %v5116
        %5160 = vmatprep.subr.bf16.mxu0 0
        %5161 = vmatpush1.bf16.msra.mxu0 %v5117
        %5162 = vmatprep.subr.bf16.mxu0 0
        %5163 = vmatpush1.bf16.msra.mxu0 %v5118
        %5164 = vmatprep.subr.bf16.mxu0 0
        %5165 = vmatpush1.bf16.msra.mxu0 %v5119
        %5166 = vmatprep.subr.bf16.mxu0 0
        %5167 = vmatpush1.bf16.msra.mxu0 %v5120
        %5168 = vmatprep.subr.bf16.mxu0 0
        %5169 = vmatpush1.bf16.msra.mxu0 %v5121
        %5170 = vmatprep.mubr.bf16.mxu0 %v5009
        %5171 = vmatmul.mubr.bf16.gmra.mrb[0].mxu0 %v5008
        %v5172 = vpop.f32.mrb[0].mxu0
        %v5173 = vadd.f32 0.0, %v5172
        %v5174 = vpop.f32.mrb[0].mxu0
        %v5175 = vpop.f32.mrb[0].mxu0
        %v5176 = vpop.f32.mrb[0].mxu0
        %5177 = vdwg.mxu0
        %v5178 = vadd.f32 %v5007, %v5173
        %s5179 = scalar_lea.vmem %s13, 128
        %v5180 = vld [vmem:[%s5179] sm:$0xf]
        %v5181 = vld [vmem:[%s5179 + $0x4] sm:$0xf]
        %v5182 = vld [vmem:[%s5179 + $0x8] sm:$0xf]
        %v5183 = vld [vmem:[%s5179 + $0xc] sm:$0xf]
        %v5184 = vld [vmem:[%s5179 + $0x10] sm:$0xf]
        %v5185 = vld [vmem:[%s5179 + $0x14] sm:$0xf]
        %v5186 = vld [vmem:[%s5179 + $0x18] sm:$0xf]
        %v5187 = vld [vmem:[%s5179 + $0x1c] sm:$0xf]
        %v5188 = vld [vmem:[%s5179 + $0x20] sm:$0xf]
        %v5189 = vld [vmem:[%s5179 + $0x24] sm:$0xf]
        %v5190 = vld [vmem:[%s5179 + $0x28] sm:$0xf]
        %v5191 = vld [vmem:[%s5179 + $0x2c] sm:$0xf]
        %v5192 = vld [vmem:[%s5179 + $0x30] sm:$0xf]
        %v5193 = vld [vmem:[%s5179 + $0x34] sm:$0xf]
        %v5194 = vld [vmem:[%s5179 + $0x38] sm:$0xf]
        %v5195 = vld [vmem:[%s5179 + $0x3c] sm:$0xf]
        %v5196 = vld [vmem:[%s5179 + $0x40] sm:$0xf]
        %v5197 = vld [vmem:[%s5179 + $0x44] sm:$0xf]
        %v5198 = vld [vmem:[%s5179 + $0x48] sm:$0xf]
        %v5199 = vld [vmem:[%s5179 + $0x4c] sm:$0xf]
        %v5200 = vld [vmem:[%s5179 + $0x50] sm:$0xf]
        %v5201 = vld [vmem:[%s5179 + $0x54] sm:$0xf]
        %v5202 = vld [vmem:[%s5179 + $0x58] sm:$0xf]
        %v5203 = vld [vmem:[%s5179 + $0x5c] sm:$0xf]
        %v5204 = vld [vmem:[%s5179 + $0x60] sm:$0xf]
        %v5205 = vld [vmem:[%s5179 + $0x64] sm:$0xf]
        %v5206 = vld [vmem:[%s5179 + $0x68] sm:$0xf]
        %v5207 = vld [vmem:[%s5179 + $0x6c] sm:$0xf]
        %v5208 = vld [vmem:[%s5179 + $0x70] sm:$0xf]
        %v5209 = vld [vmem:[%s5179 + $0x74] sm:$0xf]
        %v5210 = vld [vmem:[%s5179 + $0x78] sm:$0xf]
        %v5211 = vld [vmem:[%s5179 + $0x7c] sm:$0xf]
        %v5213 = vshrl.u32 %v5008, 16
        %v5216 = vshrl.u32 %v5009, 16
        %v5252 = vunpack.c.l.b16 %v5180
        %v5253 = vunpack.c.l.b16 %v5181
        %v5254 = vunpack.c.l.b16 %v5182
        %v5255 = vunpack.c.l.b16 %v5183
        %v5256 = vunpack.c.l.b16 %v5184
        %v5257 = vunpack.c.l.b16 %v5185
        %v5258 = vunpack.c.l.b16 %v5186
        %v5259 = vunpack.c.l.b16 %v5187
        %v5260 = vunpack.c.l.b16 %v5188
        %v5261 = vunpack.c.l.b16 %v5189
        %v5262 = vunpack.c.l.b16 %v5190
        %v5263 = vunpack.c.l.b16 %v5191
        %v5264 = vunpack.c.l.b16 %v5192
        %v5265 = vunpack.c.l.b16 %v5193
        %v5266 = vunpack.c.l.b16 %v5194
        %v5267 = vunpack.c.l.b16 %v5195
        %v5268 = vunpack.c.l.b16 %v5196
        %v5269 = vunpack.c.l.b16 %v5197
        %v5270 = vunpack.c.l.b16 %v5198
        %v5271 = vunpack.c.l.b16 %v5199
        %v5272 = vunpack.c.l.b16 %v5200
        %v5273 = vunpack.c.l.b16 %v5201
        %v5274 = vunpack.c.l.b16 %v5202
        %v5275 = vunpack.c.l.b16 %v5203
        %v5276 = vunpack.c.l.b16 %v5204
        %v5277 = vunpack.c.l.b16 %v5205
        %v5278 = vunpack.c.l.b16 %v5206
        %v5279 = vunpack.c.l.b16 %v5207
        %v5280 = vunpack.c.l.b16 %v5208
        %v5281 = vunpack.c.l.b16 %v5209
        %v5282 = vunpack.c.l.b16 %v5210
        %v5283 = vunpack.c.l.b16 %v5211
        %v5284 = vpack.c.b16 %v5253, %v5252
        %v5285 = vpack.c.b16 %v5255, %v5254
        %v5286 = vpack.c.b16 %v5257, %v5256
        %v5287 = vpack.c.b16 %v5259, %v5258
        %v5288 = vpack.c.b16 %v5261, %v5260
        %v5289 = vpack.c.b16 %v5263, %v5262
        %v5290 = vpack.c.b16 %v5265, %v5264
        %v5291 = vpack.c.b16 %v5267, %v5266
        %v5292 = vpack.c.b16 %v5269, %v5268
        %v5293 = vpack.c.b16 %v5271, %v5270
        %v5294 = vpack.c.b16 %v5273, %v5272
        %v5295 = vpack.c.b16 %v5275, %v5274
        %v5296 = vpack.c.b16 %v5277, %v5276
        %v5297 = vpack.c.b16 %v5279, %v5278
        %v5298 = vpack.c.b16 %v5281, %v5280
        %v5299 = vpack.c.b16 %v5283, %v5282
        %5316 = vmatprep.subr.bf16.mxu0 0
        %5317 = vmatpush1.bf16.msra.mxu0 %v5284
        %5318 = vmatprep.subr.bf16.mxu0 0
        %5319 = vmatpush1.bf16.msra.mxu0 %v5285
        %5320 = vmatprep.subr.bf16.mxu0 0
        %5321 = vmatpush1.bf16.msra.mxu0 %v5286
        %5322 = vmatprep.subr.bf16.mxu0 0
        %5323 = vmatpush1.bf16.msra.mxu0 %v5287
        %5324 = vmatprep.subr.bf16.mxu0 0
        %5325 = vmatpush1.bf16.msra.mxu0 %v5288
        %5326 = vmatprep.subr.bf16.mxu0 0
        %5327 = vmatpush1.bf16.msra.mxu0 %v5289
        %5328 = vmatprep.subr.bf16.mxu0 0
        %5329 = vmatpush1.bf16.msra.mxu0 %v5290
        %5330 = vmatprep.subr.bf16.mxu0 0
        %5331 = vmatpush1.bf16.msra.mxu0 %v5291
        %5332 = vmatprep.subr.bf16.mxu0 0
        %5333 = vmatpush1.bf16.msra.mxu0 %v5292
        %5334 = vmatprep.subr.bf16.mxu0 0
        %5335 = vmatpush1.bf16.msra.mxu0 %v5293
        %5336 = vmatprep.subr.bf16.mxu0 0
        %5337 = vmatpush1.bf16.msra.mxu0 %v5294
        %5338 = vmatprep.subr.bf16.mxu0 0
        %5339 = vmatpush1.bf16.msra.mxu0 %v5295
        %5340 = vmatprep.subr.bf16.mxu0 0
        %5341 = vmatpush1.bf16.msra.mxu0 %v5296
        %5342 = vmatprep.subr.bf16.mxu0 0
        %5343 = vmatpush1.bf16.msra.mxu0 %v5297
        %5344 = vmatprep.subr.bf16.mxu0 0
        %5345 = vmatpush1.bf16.msra.mxu0 %v5298
        %5346 = vmatprep.subr.bf16.mxu0 0
        %5347 = vmatpush1.bf16.msra.mxu0 %v5299
        %5348 = vmatprep.mubr.bf16.mxu0 %v5216
        %5349 = vmatmul.mubr.bf16.gmra.mrb[0].mxu0 %v5213
        %v5350 = vpop.f32.mrb[0].mxu0
        %v5351 = vadd.f32 0.0, %v5350
        %v5352 = vpop.f32.mrb[0].mxu0
        %v5353 = vpop.f32.mrb[0].mxu0
        %v5354 = vpop.f32.mrb[0].mxu0
        %5355 = vdwg.mxu0
        %v5356 = vadd.f32 %v5178, %v5351
        %s5357 = scalar_lea.vmem %s13, 256
        %v5358 = vld [vmem:[%s5357] sm:$0xf]
        %v5359 = vld [vmem:[%s5357 + $0x4] sm:$0xf]
        %v5360 = vld [vmem:[%s5357 + $0x8] sm:$0xf]
        %v5361 = vld [vmem:[%s5357 + $0xc] sm:$0xf]
        %v5362 = vld [vmem:[%s5357 + $0x10] sm:$0xf]
        %v5363 = vld [vmem:[%s5357 + $0x14] sm:$0xf]
        %v5364 = vld [vmem:[%s5357 + $0x18] sm:$0xf]
        %v5365 = vld [vmem:[%s5357 + $0x1c] sm:$0xf]
        %v5366 = vld [vmem:[%s5357 + $0x20] sm:$0xf]
        %v5367 = vld [vmem:[%s5357 + $0x24] sm:$0xf]
        %v5368 = vld [vmem:[%s5357 + $0x28] sm:$0xf]
        %v5369 = vld [vmem:[%s5357 + $0x2c] sm:$0xf]
        %v5370 = vld [vmem:[%s5357 + $0x30] sm:$0xf]
        %v5371 = vld [vmem:[%s5357 + $0x34] sm:$0xf]
        %v5372 = vld [vmem:[%s5357 + $0x38] sm:$0xf]
        %v5373 = vld [vmem:[%s5357 + $0x3c] sm:$0xf]
        %v5374 = vld [vmem:[%s5357 + $0x40] sm:$0xf]
        %v5375 = vld [vmem:[%s5357 + $0x44] sm:$0xf]
        %v5376 = vld [vmem:[%s5357 + $0x48] sm:$0xf]
        %v5377 = vld [vmem:[%s5357 + $0x4c] sm:$0xf]
        %v5378 = vld [vmem:[%s5357 + $0x50] sm:$0xf]
        %v5379 = vld [vmem:[%s5357 + $0x54] sm:$0xf]
        %v5380 = vld [vmem:[%s5357 + $0x58] sm:$0xf]
        %v5381 = vld [vmem:[%s5357 + $0x5c] sm:$0xf]
        %v5382 = vld [vmem:[%s5357 + $0x60] sm:$0xf]
        %v5383 = vld [vmem:[%s5357 + $0x64] sm:$0xf]
        %v5384 = vld [vmem:[%s5357 + $0x68] sm:$0xf]
        %v5385 = vld [vmem:[%s5357 + $0x6c] sm:$0xf]
        %v5386 = vld [vmem:[%s5357 + $0x70] sm:$0xf]
        %v5387 = vld [vmem:[%s5357 + $0x74] sm:$0xf]
        %v5388 = vld [vmem:[%s5357 + $0x78] sm:$0xf]
        %v5389 = vld [vmem:[%s5357 + $0x7c] sm:$0xf]
        %v5392 = vrot.slane %v5008, 1
        %v5393 = vrot.slane %v5009, 1
        %v5428 = vunpack.c.l.b16 %v5358
        %v5429 = vunpack.c.l.b16 %v5359
        %v5430 = vunpack.c.l.b16 %v5360
        %v5431 = vunpack.c.l.b16 %v5361
        %v5432 = vunpack.c.l.b16 %v5362
        %v5433 = vunpack.c.l.b16 %v5363
        %v5434 = vunpack.c.l.b16 %v5364
        %v5435 = vunpack.c.l.b16 %v5365
        %v5436 = vunpack.c.l.b16 %v5366
        %v5437 = vunpack.c.l.b16 %v5367
        %v5438 = vunpack.c.l.b16 %v5368
        %v5439 = vunpack.c.l.b16 %v5369
        %v5440 = vunpack.c.l.b16 %v5370
        %v5441 = vunpack.c.l.b16 %v5371
        %v5442 = vunpack.c.l.b16 %v5372
        %v5443 = vunpack.c.l.b16 %v5373
        %v5444 = vunpack.c.l.b16 %v5374
        %v5445 = vunpack.c.l.b16 %v5375
        %v5446 = vunpack.c.l.b16 %v5376
        %v5447 = vunpack.c.l.b16 %v5377
        %v5448 = vunpack.c.l.b16 %v5378
        %v5449 = vunpack.c.l.b16 %v5379
        %v5450 = vunpack.c.l.b16 %v5380
        %v5451 = vunpack.c.l.b16 %v5381
        %v5452 = vunpack.c.l.b16 %v5382
        %v5453 = vunpack.c.l.b16 %v5383
        %v5454 = vunpack.c.l.b16 %v5384
        %v5455 = vunpack.c.l.b16 %v5385
        %v5456 = vunpack.c.l.b16 %v5386
        %v5457 = vunpack.c.l.b16 %v5387
        %v5458 = vunpack.c.l.b16 %v5388
        %v5459 = vunpack.c.l.b16 %v5389
        %v5460 = vpack.c.b16 %v5429, %v5428
        %v5461 = vpack.c.b16 %v5431, %v5430
        %v5462 = vpack.c.b16 %v5433, %v5432
        %v5463 = vpack.c.b16 %v5435, %v5434
        %v5464 = vpack.c.b16 %v5437, %v5436
        %v5465 = vpack.c.b16 %v5439, %v5438
        %v5466 = vpack.c.b16 %v5441, %v5440
        %v5467 = vpack.c.b16 %v5443, %v5442
        %v5468 = vpack.c.b16 %v5445, %v5444
        %v5469 = vpack.c.b16 %v5447, %v5446
        %v5470 = vpack.c.b16 %v5449, %v5448
        %v5471 = vpack.c.b16 %v5451, %v5450
        %v5472 = vpack.c.b16 %v5453, %v5452
        %v5473 = vpack.c.b16 %v5455, %v5454
        %v5474 = vpack.c.b16 %v5457, %v5456
        %v5475 = vpack.c.b16 %v5459, %v5458
        %5492 = vmatprep.subr.bf16.mxu0 0
        %5493 = vmatpush1.bf16.msra.mxu0 %v5460
        %5494 = vmatprep.subr.bf16.mxu0 0
        %5495 = vmatpush1.bf16.msra.mxu0 %v5461
        %5496 = vmatprep.subr.bf16.mxu0 0
        %5497 = vmatpush1.bf16.msra.mxu0 %v5462
        %5498 = vmatprep.subr.bf16.mxu0 0
        %5499 = vmatpush1.bf16.msra.mxu0 %v5463
        %5500 = vmatprep.subr.bf16.mxu0 0
        %5501 = vmatpush1.bf16.msra.mxu0 %v5464
        %5502 = vmatprep.subr.bf16.mxu0 0
        %5503 = vmatpush1.bf16.msra.mxu0 %v5465
        %5504 = vmatprep.subr.bf16.mxu0 0
        %5505 = vmatpush1.bf16.msra.mxu0 %v5466
        %5506 = vmatprep.subr.bf16.mxu0 0
        %5507 = vmatpush1.bf16.msra.mxu0 %v5467
        %5508 = vmatprep.subr.bf16.mxu0 0
        %5509 = vmatpush1.bf16.msra.mxu0 %v5468
        %5510 = vmatprep.subr.bf16.mxu0 0
        %5511 = vmatpush1.bf16.msra.mxu0 %v5469
        %5512 = vmatprep.subr.bf16.mxu0 0
        %5513 = vmatpush1.bf16.msra.mxu0 %v5470
        %5514 = vmatprep.subr.bf16.mxu0 0
        %5515 = vmatpush1.bf16.msra.mxu0 %v5471
        %5516 = vmatprep.subr.bf16.mxu0 0
        %5517 = vmatpush1.bf16.msra.mxu0 %v5472
        %5518 = vmatprep.subr.bf16.mxu0 0
        %5519 = vmatpush1.bf16.msra.mxu0 %v5473
        %5520 = vmatprep.subr.bf16.mxu0 0
        %5521 = vmatpush1.bf16.msra.mxu0 %v5474
        %5522 = vmatprep.subr.bf16.mxu0 0
        %5523 = vmatpush1.bf16.msra.mxu0 %v5475
        %5524 = vmatprep.mubr.bf16.mxu0 %v5393
        %5525 = vmatmul.mubr.bf16.gmra.mrb[0].mxu0 %v5392
        %v5526 = vpop.f32.mrb[0].mxu0
        %v5527 = vadd.f32 0.0, %v5526
        %v5528 = vpop.f32.mrb[0].mxu0
        %v5529 = vpop.f32.mrb[0].mxu0
        %v5530 = vpop.f32.mrb[0].mxu0
        %5531 = vdwg.mxu0
        %v5532 = vadd.f32 %v5356, %v5527
        %s5533 = scalar_lea.vmem %s13, 384
        %v5534 = vld [vmem:[%s5533] sm:$0xf]
        %v5535 = vld [vmem:[%s5533 + $0x4] sm:$0xf]
        %v5536 = vld [vmem:[%s5533 + $0x8] sm:$0xf]
        %v5537 = vld [vmem:[%s5533 + $0xc] sm:$0xf]
        %v5538 = vld [vmem:[%s5533 + $0x10] sm:$0xf]
        %v5539 = vld [vmem:[%s5533 + $0x14] sm:$0xf]
        %v5540 = vld [vmem:[%s5533 + $0x18] sm:$0xf]
        %v5541 = vld [vmem:[%s5533 + $0x1c] sm:$0xf]
        %v5542 = vld [vmem:[%s5533 + $0x20] sm:$0xf]
        %v5543 = vld [vmem:[%s5533 + $0x24] sm:$0xf]
        %v5544 = vld [vmem:[%s5533 + $0x28] sm:$0xf]
        %v5545 = vld [vmem:[%s5533 + $0x2c] sm:$0xf]
        %v5546 = vld [vmem:[%s5533 + $0x30] sm:$0xf]
        %v5547 = vld [vmem:[%s5533 + $0x34] sm:$0xf]
        %v5548 = vld [vmem:[%s5533 + $0x38] sm:$0xf]
        %v5549 = vld [vmem:[%s5533 + $0x3c] sm:$0xf]
        %v5550 = vld [vmem:[%s5533 + $0x40] sm:$0xf]
        %v5551 = vld [vmem:[%s5533 + $0x44] sm:$0xf]
        %v5552 = vld [vmem:[%s5533 + $0x48] sm:$0xf]
        %v5553 = vld [vmem:[%s5533 + $0x4c] sm:$0xf]
        %v5554 = vld [vmem:[%s5533 + $0x50] sm:$0xf]
        %v5555 = vld [vmem:[%s5533 + $0x54] sm:$0xf]
        %v5556 = vld [vmem:[%s5533 + $0x58] sm:$0xf]
        %v5557 = vld [vmem:[%s5533 + $0x5c] sm:$0xf]
        %v5558 = vld [vmem:[%s5533 + $0x60] sm:$0xf]
        %v5559 = vld [vmem:[%s5533 + $0x64] sm:$0xf]
        %v5560 = vld [vmem:[%s5533 + $0x68] sm:$0xf]
        %v5561 = vld [vmem:[%s5533 + $0x6c] sm:$0xf]
        %v5562 = vld [vmem:[%s5533 + $0x70] sm:$0xf]
        %v5563 = vld [vmem:[%s5533 + $0x74] sm:$0xf]
        %v5564 = vld [vmem:[%s5533 + $0x78] sm:$0xf]
        %v5565 = vld [vmem:[%s5533 + $0x7c] sm:$0xf]
        %v5566 = vrot.slane %v5213, 1
        %v5567 = vrot.slane %v5216, 1
        %v5602 = vunpack.c.l.b16 %v5534
        %v5603 = vunpack.c.l.b16 %v5535
        %v5604 = vunpack.c.l.b16 %v5536
        %v5605 = vunpack.c.l.b16 %v5537
        %v5606 = vunpack.c.l.b16 %v5538
        %v5607 = vunpack.c.l.b16 %v5539
        %v5608 = vunpack.c.l.b16 %v5540
        %v5609 = vunpack.c.l.b16 %v5541
        %v5610 = vunpack.c.l.b16 %v5542
        %v5611 = vunpack.c.l.b16 %v5543
        %v5612 = vunpack.c.l.b16 %v5544
        %v5613 = vunpack.c.l.b16 %v5545
        %v5614 = vunpack.c.l.b16 %v5546
        %v5615 = vunpack.c.l.b16 %v5547
        %v5616 = vunpack.c.l.b16 %v5548
        %v5617 = vunpack.c.l.b16 %v5549
        %v5618 = vunpack.c.l.b16 %v5550
        %v5619 = vunpack.c.l.b16 %v5551
        %v5620 = vunpack.c.l.b16 %v5552
        %v5621 = vunpack.c.l.b16 %v5553
        %v5622 = vunpack.c.l.b16 %v5554
        %v5623 = vunpack.c.l.b16 %v5555
        %v5624 = vunpack.c.l.b16 %v5556
        %v5625 = vunpack.c.l.b16 %v5557
        %v5626 = vunpack.c.l.b16 %v5558
        %v5627 = vunpack.c.l.b16 %v5559
        %v5628 = vunpack.c.l.b16 %v5560
        %v5629 = vunpack.c.l.b16 %v5561
        %v5630 = vunpack.c.l.b16 %v5562
        %v5631 = vunpack.c.l.b16 %v5563
        %v5632 = vunpack.c.l.b16 %v5564
        %v5633 = vunpack.c.l.b16 %v5565
        %v5634 = vpack.c.b16 %v5603, %v5602
        %v5635 = vpack.c.b16 %v5605, %v5604
        %v5636 = vpack.c.b16 %v5607, %v5606
        %v5637 = vpack.c.b16 %v5609, %v5608
        %v5638 = vpack.c.b16 %v5611, %v5610
        %v5639 = vpack.c.b16 %v5613, %v5612
        %v5640 = vpack.c.b16 %v5615, %v5614
        %v5641 = vpack.c.b16 %v5617, %v5616
        %v5642 = vpack.c.b16 %v5619, %v5618
        %v5643 = vpack.c.b16 %v5621, %v5620
        %v5644 = vpack.c.b16 %v5623, %v5622
        %v5645 = vpack.c.b16 %v5625, %v5624
        %v5646 = vpack.c.b16 %v5627, %v5626
        %v5647 = vpack.c.b16 %v5629, %v5628
        %v5648 = vpack.c.b16 %v5631, %v5630
        %v5649 = vpack.c.b16 %v5633, %v5632
        %5666 = vmatprep.subr.bf16.mxu0 0
        %5667 = vmatpush1.bf16.msra.mxu0 %v5634
        %5668 = vmatprep.subr.bf16.mxu0 0
        %5669 = vmatpush1.bf16.msra.mxu0 %v5635
        %5670 = vmatprep.subr.bf16.mxu0 0
        %5671 = vmatpush1.bf16.msra.mxu0 %v5636
        %5672 = vmatprep.subr.bf16.mxu0 0
        %5673 = vmatpush1.bf16.msra.mxu0 %v5637
        %5674 = vmatprep.subr.bf16.mxu0 0
        %5675 = vmatpush1.bf16.msra.mxu0 %v5638
        %5676 = vmatprep.subr.bf16.mxu0 0
        %5677 = vmatpush1.bf16.msra.mxu0 %v5639
        %5678 = vmatprep.subr.bf16.mxu0 0
        %5679 = vmatpush1.bf16.msra.mxu0 %v5640
        %5680 = vmatprep.subr.bf16.mxu0 0
        %5681 = vmatpush1.bf16.msra.mxu0 %v5641
        %5682 = vmatprep.subr.bf16.mxu0 0
        %5683 = vmatpush1.bf16.msra.mxu0 %v5642
        %5684 = vmatprep.subr.bf16.mxu0 0
        %5685 = vmatpush1.bf16.msra.mxu0 %v5643
        %5686 = vmatprep.subr.bf16.mxu0 0
        %5687 = vmatpush1.bf16.msra.mxu0 %v5644
        %5688 = vmatprep.subr.bf16.mxu0 0
        %5689 = vmatpush1.bf16.msra.mxu0 %v5645
        %5690 = vmatprep.subr.bf16.mxu0 0
        %5691 = vmatpush1.bf16.msra.mxu0 %v5646
        %5692 = vmatprep.subr.bf16.mxu0 0
        %5693 = vmatpush1.bf16.msra.mxu0 %v5647
        %5694 = vmatprep.subr.bf16.mxu0 0
        %5695 = vmatpush1.bf16.msra.mxu0 %v5648
        %5696 = vmatprep.subr.bf16.mxu0 0
        %5697 = vmatpush1.bf16.msra.mxu0 %v5649
        %5698 = vmatprep.mubr.bf16.mxu0 %v5567
        %5699 = vmatmul.mubr.bf16.gmra.mrb[0].mxu0 %v5566
        %v5700 = vpop.f32.mrb[0].mxu0
        %v5701 = vadd.f32 0.0, %v5700
        %v5702 = vpop.f32.mrb[0].mxu0
        %v5703 = vpop.f32.mrb[0].mxu0
        %v5704 = vpop.f32.mrb[0].mxu0
        %5705 = vdwg.mxu0
        %v5706 = vadd.f32 %v5532, %v5701
        %s5707 = scalar_lea.vmem %s13, 512
        %v5708 = vld [vmem:[%s5707] sm:$0xf]
        %v5709 = vld [vmem:[%s5707 + $0x4] sm:$0xf]
        %v5710 = vld [vmem:[%s5707 + $0x8] sm:$0xf]
        %v5711 = vld [vmem:[%s5707 + $0xc] sm:$0xf]
        %v5712 = vld [vmem:[%s5707 + $0x10] sm:$0xf]
        %v5713 = vld [vmem:[%s5707 + $0x14] sm:$0xf]
        %v5714 = vld [vmem:[%s5707 + $0x18] sm:$0xf]
        %v5715 = vld [vmem:[%s5707 + $0x1c] sm:$0xf]
        %v5716 = vld [vmem:[%s5707 + $0x20] sm:$0xf]
        %v5717 = vld [vmem:[%s5707 + $0x24] sm:$0xf]
        %v5718 = vld [vmem:[%s5707 + $0x28] sm:$0xf]
        %v5719 = vld [vmem:[%s5707 + $0x2c] sm:$0xf]
        %v5720 = vld [vmem:[%s5707 + $0x30] sm:$0xf]
        %v5721 = vld [vmem:[%s5707 + $0x34] sm:$0xf]
        %v5722 = vld [vmem:[%s5707 + $0x38] sm:$0xf]
        %v5723 = vld [vmem:[%s5707 + $0x3c] sm:$0xf]
        %v5724 = vld [vmem:[%s5707 + $0x40] sm:$0xf]
        %v5725 = vld [vmem:[%s5707 + $0x44] sm:$0xf]
        %v5726 = vld [vmem:[%s5707 + $0x48] sm:$0xf]
        %v5727 = vld [vmem:[%s5707 + $0x4c] sm:$0xf]
        %v5728 = vld [vmem:[%s5707 + $0x50] sm:$0xf]
        %v5729 = vld [vmem:[%s5707 + $0x54] sm:$0xf]
        %v5730 = vld [vmem:[%s5707 + $0x58] sm:$0xf]
        %v5731 = vld [vmem:[%s5707 + $0x5c] sm:$0xf]
        %v5732 = vld [vmem:[%s5707 + $0x60] sm:$0xf]
        %v5733 = vld [vmem:[%s5707 + $0x64] sm:$0xf]
        %v5734 = vld [vmem:[%s5707 + $0x68] sm:$0xf]
        %v5735 = vld [vmem:[%s5707 + $0x6c] sm:$0xf]
        %v5736 = vld [vmem:[%s5707 + $0x70] sm:$0xf]
        %v5737 = vld [vmem:[%s5707 + $0x74] sm:$0xf]
        %v5738 = vld [vmem:[%s5707 + $0x78] sm:$0xf]
        %v5739 = vld [vmem:[%s5707 + $0x7c] sm:$0xf]
        %v5740 = vrot.slane %v5008, 2
        %v5741 = vrot.slane %v5009, 2
        %v5776 = vunpack.c.l.b16 %v5708
        %v5777 = vunpack.c.l.b16 %v5709
        %v5778 = vunpack.c.l.b16 %v5710
        %v5779 = vunpack.c.l.b16 %v5711
        %v5780 = vunpack.c.l.b16 %v5712
        %v5781 = vunpack.c.l.b16 %v5713
        %v5782 = vunpack.c.l.b16 %v5714
        %v5783 = vunpack.c.l.b16 %v5715
        %v5784 = vunpack.c.l.b16 %v5716
        %v5785 = vunpack.c.l.b16 %v5717
        %v5786 = vunpack.c.l.b16 %v5718
        %v5787 = vunpack.c.l.b16 %v5719
        %v5788 = vunpack.c.l.b16 %v5720
        %v5789 = vunpack.c.l.b16 %v5721
        %v5790 = vunpack.c.l.b16 %v5722
        %v5791 = vunpack.c.l.b16 %v5723
        %v5792 = vunpack.c.l.b16 %v5724
        %v5793 = vunpack.c.l.b16 %v5725
        %v5794 = vunpack.c.l.b16 %v5726
        %v5795 = vunpack.c.l.b16 %v5727
        %v5796 = vunpack.c.l.b16 %v5728
        %v5797 = vunpack.c.l.b16 %v5729
        %v5798 = vunpack.c.l.b16 %v5730
        %v5799 = vunpack.c.l.b16 %v5731
        %v5800 = vunpack.c.l.b16 %v5732
        %v5801 = vunpack.c.l.b16 %v5733
        %v5802 = vunpack.c.l.b16 %v5734
        %v5803 = vunpack.c.l.b16 %v5735
        %v5804 = vunpack.c.l.b16 %v5736
        %v5805 = vunpack.c.l.b16 %v5737
        %v5806 = vunpack.c.l.b16 %v5738
        %v5807 = vunpack.c.l.b16 %v5739
        %v5808 = vpack.c.b16 %v5777, %v5776
        %v5809 = vpack.c.b16 %v5779, %v5778
        %v5810 = vpack.c.b16 %v5781, %v5780
        %v5811 = vpack.c.b16 %v5783, %v5782
        %v5812 = vpack.c.b16 %v5785, %v5784
        %v5813 = vpack.c.b16 %v5787, %v5786
        %v5814 = vpack.c.b16 %v5789, %v5788
        %v5815 = vpack.c.b16 %v5791, %v5790
        %v5816 = vpack.c.b16 %v5793, %v5792
        %v5817 = vpack.c.b16 %v5795, %v5794
        %v5818 = vpack.c.b16 %v5797, %v5796
        %v5819 = vpack.c.b16 %v5799, %v5798
        %v5820 = vpack.c.b16 %v5801, %v5800
        %v5821 = vpack.c.b16 %v5803, %v5802
        %v5822 = vpack.c.b16 %v5805, %v5804
        %v5823 = vpack.c.b16 %v5807, %v5806
        %5840 = vmatprep.subr.bf16.mxu0 0
        %5841 = vmatpush1.bf16.msra.mxu0 %v5808
        %5842 = vmatprep.subr.bf16.mxu0 0
        %5843 = vmatpush1.bf16.msra.mxu0 %v5809
        %5844 = vmatprep.subr.bf16.mxu0 0
        %5845 = vmatpush1.bf16.msra.mxu0 %v5810
        %5846 = vmatprep.subr.bf16.mxu0 0
        %5847 = vmatpush1.bf16.msra.mxu0 %v5811
        %5848 = vmatprep.subr.bf16.mxu0 0
        %5849 = vmatpush1.bf16.msra.mxu0 %v5812
        %5850 = vmatprep.subr.bf16.mxu0 0
        %5851 = vmatpush1.bf16.msra.mxu0 %v5813
        %5852 = vmatprep.subr.bf16.mxu0 0
        %5853 = vmatpush1.bf16.msra.mxu0 %v5814
        %5854 = vmatprep.subr.bf16.mxu0 0
        %5855 = vmatpush1.bf16.msra.mxu0 %v5815
        %5856 = vmatprep.subr.bf16.mxu0 0
        %5857 = vmatpush1.bf16.msra.mxu0 %v5816
        %5858 = vmatprep.subr.bf16.mxu0 0
        %5859 = vmatpush1.bf16.msra.mxu0 %v5817
        %5860 = vmatprep.subr.bf16.mxu0 0
        %5861 = vmatpush1.bf16.msra.mxu0 %v5818
        %5862 = vmatprep.subr.bf16.mxu0 0
        %5863 = vmatpush1.bf16.msra.mxu0 %v5819
        %5864 = vmatprep.subr.bf16.mxu0 0
        %5865 = vmatpush1.bf16.msra.mxu0 %v5820
        %5866 = vmatprep.subr.bf16.mxu0 0
        %5867 = vmatpush1.bf16.msra.mxu0 %v5821
        %5868 = vmatprep.subr.bf16.mxu0 0
        %5869 = vmatpush1.bf16.msra.mxu0 %v5822
        %5870 = vmatprep.subr.bf16.mxu0 0
        %5871 = vmatpush1.bf16.msra.mxu0 %v5823
        %5872 = vmatprep.mubr.bf16.mxu0 %v5741
        %5873 = vmatmul.mubr.bf16.gmra.mrb[0].mxu0 %v5740
        %v5874 = vpop.f32.mrb[0].mxu0
        %v5875 = vadd.f32 0.0, %v5874
        %v5876 = vpop.f32.mrb[0].mxu0
        %v5877 = vpop.f32.mrb[0].mxu0
        %v5878 = vpop.f32.mrb[0].mxu0
        %5879 = vdwg.mxu0
        %v5880 = vadd.f32 %v5706, %v5875
        %vm5881 = vcmp.lt.s32.totalorder %v1653, 2
        %v5882 = vsel %vm5881, %v5880, -1e+30
        %vm5883 = vcmask 1040384
        %v5884 = vsel %vm5883, %v5882, -inf
        %5885 = vmax.xlane.f32.xlu0 %v5884
        %v5886 = vpop.xlane.xlu0 %5885
        %v5887 = vsub.f32 %v5882, %v5886
        %v5888 = vmul.f32 %v5887, 1.442695
        %v5889 = vpow.pop %v5888
        %v5890 = vsel %vm5883, %v5889, 0.0
        %5891 = vadd.xlane.f32.xlu0 %v5890
        %v5892 = vpop.xlane.xlu0 %5891
        %v5893 = vlog2.pop %v5892
        %v5894 = vmul.f32 %v5893, 0.6931472
        %v5895 = vsub.f32 %v5887, %v5894
        %5896 = vst [vmem:[%s486] sm:$0x1] %v5895
        %s5897 = sand.u32 %s357, 1
        %s5898 = scalar_lea.sflag [#allocation3], %s5897
        %s5899 = sand.u32 %s357, 1
        %s5900 = scalar_lea.vmem [#allocation2], %s5899
        // Predicated region
        $region81: #{deep_conv_net_forward.1} parent=79 // pred_check
          %p5901 = pneg %p367
        $region82: #{deep_conv_net_forward.1} parent=79 // pred_check_branch
          %5903 = sbr.rel (%p5901) target = $region84
        $region83: #{deep_conv_net_forward.1} parent=79 // pred_region
          %s5905 = ssub.s32 16, 16
          %5906 = vsyncadd %s5898, %s5905
          %s5907 = smul.addr %s29, 16
          %s5908 = scalar_lea.hbm %s15, %s5907
          %s5910 = sshll.u32 %s5900, 4
          %s5911 = int_to_ptr.vmem [resolvable:$true] %s5910
          %5913 = dma.vmem_to_hbm [thread:$0]  %s5911, 16, %s5908, %s5898
        $region84: #{deep_conv_net_forward.1} parent=79 // pred_fallthru
          _
      $region80: #{deep_conv_net_forward.1} parent=5 // pred_fallthru
        _
      %p5914 = scmp.le.s32.totalorder 2, %s24
      // Predicated region
      $region85: #{deep_conv_net_forward.1} parent=5 // pred_check
        %p5915 = pneg %p5914
      $region86: #{deep_conv_net_forward.1} parent=5 // pred_check_branch
        %5917 = sbr.rel (%p5915) target = $region88
      $region87: #{deep_conv_net_forward.1} parent=5 // pred_region
        %s5918 = ssub.s32 %s24, 2
        // Predicated region
        $region89: #{deep_conv_net_forward.1} parent=87 // pred_check
          %p5919 = pneg %p373
        $region90: #{deep_conv_net_forward.1} parent=87 // pred_check_branch
          %5921 = sbr.rel (%p5919) target = $region92
        $region91: #{deep_conv_net_forward.1} parent=87 // pred_region
          %s5922 = sand.u32 %s358, 1
          %s5923 = scalar_lea.sflag [#allocation3], %s5922
          %s5924 = sand.u32 %s358, 1
          %s5925 = scalar_lea.vmem [#allocation2], %s5924
          %5926 = dma.done %s5923, 16
        $region92: #{deep_conv_net_forward.1} parent=87 // pred_fallthru
          _
      $region88: #{deep_conv_net_forward.1} parent=5 // pred_fallthru
        _
    $region6: #{deep_conv_net_forward.1} parent=1 // loop_footer
      %s28 = sadd.s32 1, %s24
    $region7: #{deep_conv_net_forward.1} parent=1 // loop_footer_branch
      %23 = sbr.rel target = $region3
    $region8: #{deep_conv_net_forward.1} parent=1 // loop_exit
      _
    %5927 = vsyncpa [#allocation3], 1
    %s5928 = scalar_lea.sflag [#allocation3], 1
    %5929 = vsyncpa %s5928, 1

</llo_original>
